<compile_context>
chip_gen: v5e
topology: v5e:2x2
jax: 0.10.0
libtpu: 0.0.40
codegen_flags: <defaults>
</compile_context>

<pallas_src>
import numpy as np
import jax
import jax.numpy as jnp
from jax.experimental import pallas as pl
from jax.experimental.pallas import tpu as pltpu

FX, FY = 572.4114, 573.57043
CX, CY = 325.2611, 242.04899
INTRINSIC = np.array([[FX, 0.0, CX], [0.0, FY, CY], [0.0, 0.0, 1.0]], dtype=np.float32)

F_IMG, F_PNT, F_GLB = 2048, 64, 1024
F_DENSE = F_IMG + F_PNT + F_GLB          # 3136, matches nn.Linear(3136, 512)

MIN_TN = 128                             # tile granularity (sublane/lane friendly)
MAX_TN = 1024                            # upper cap on the point tile
MAX_FC1_ROWS = 2048                      # caps the f32 (B*tn, 512) intermediate at ~4 MiB


def pick_point_tile(n_points, batch):
    """Largest 128-multiple point tile such that (a) the grid keeps >= 2 steps when N
    allows it (v7x two-TC sharding of the "parallel" point axis), (b) B*tn <= MAX_FC1_ROWS
    (VMEM budget for the f32 fc1 intermediate), (c) tn <= MAX_TN."""
    cap = max(MIN_TN, min(MAX_TN, (MAX_FC1_ROWS // max(batch, 1)) // MIN_TN * MIN_TN))
    half = pl.cdiv(max(n_points, 1), 2)            # aim for at least two grid steps
    tn = pl.cdiv(half, MIN_TN) * MIN_TN            # round up to a multiple of 128
    return int(max(MIN_TN, min(cap, tn)))


# ----------------------------------------------------------------------------------
# Geometry glue (host-side numpy; faithful to the reference, including the row-vector
# @ K^-1 convention and the non-unit-axis Rodrigues formula it uses).
# ----------------------------------------------------------------------------------
def compute_rc(center3d):
    B = center3d.shape[0]
    ray = center3d / np.linalg.norm(center3d, axis=1, keepdims=True)
    z_axis = np.tile(np.array([0.0, 0.0, 1.0], np.float32), (B, 1))
    cross = np.cross(ray, z_axis).astype(np.float32)
    sin_t = np.linalg.norm(cross, axis=1, keepdims=True)
    cos_t = np.sum(ray * z_axis, axis=1, keepdims=True)
    K = np.zeros((B, 3, 3), np.float32)
    K[:, 0, 1] = -cross[:, 2]; K[:, 0, 2] = cross[:, 1]
    K[:, 1, 0] = cross[:, 2];  K[:, 1, 2] = -cross[:, 0]
    K[:, 2, 0] = -cross[:, 1]; K[:, 2, 1] = cross[:, 0]
    I = np.eye(3, dtype=np.float32)[None]
    rod = I + sin_t[..., None] * K + (1.0 - cos_t)[..., None] * (K @ K)
    near_parallel = sin_t[:, 0] < 1e-6
    return np.where(near_parallel[:, None, None], np.tile(I, (B, 1, 1)), rod).astype(np.float32)


def project_image_to_3d(img, cloud):
    B, _, H, W = img.shape
    center2d = np.tile(np.array([W / 2.0, H / 2.0, 1.0], np.float32), (B, 1))
    Kinv = np.linalg.inv(INTRINSIC).astype(np.float32)
    ray = center2d @ Kinv                                    # row-vector convention (torch.bmm)
    mean_z = cloud[:, :, 2].mean(axis=1, keepdims=True)
    center3d = (ray * mean_z).astype(np.float32)             # (B, 3)
    assert np.all(np.linalg.norm(center3d, axis=1) > 1e-6), "bbox center too close to origin"
    dist = np.linalg.norm(cloud - center3d[:, None, :], axis=2)
    mask = dist < 0.2
    counts = mask.sum(axis=1)
    # TODO(synk): boolean-mask point cropping produces data-dependent shapes; done host-side
    # (numpy), and like the reference torch.stack it requires equal per-batch counts.
    assert counts.min() > 0 and (counts == counts[0]).all(), "cropped region empty / ragged"
    cropped = np.stack([cloud[b, mask[b]] for b in range(B)], axis=0)
    Rc = compute_rc(center3d)
    aligned = np.einsum("bnd,bed->bne", cropped - center3d[:, None, :], Rc)
    return aligned.astype(np.float32), center3d


# ----------------------------------------------------------------------------------
# Pallas kernel: fused fc1(point part)+const, fc2, fc3, fused fc4/fc5, ReLU and the
# softmax(dim=0 over batch), tiled over the point axis with the full batch per block.
# ----------------------------------------------------------------------------------
def fusion_head_kernel(pnt_ref, c_ref, w1p_ref, w2_ref, b2_ref,
                       w3_ref, b3_ref, w45_ref, b45_ref, out_ref):
    Bb, TNb, _ = pnt_ref.shape

    x = pnt_ref[...].reshape(Bb * TNb, F_PNT)                               # (B*TN, 64) bf16
    # fc1: only the 64 point-feature rows of W1; img/global/bias folded into c (per batch).
    h = jnp.dot(x, w1p_ref[...], preferred_element_type=jnp.float32)        # (B*TN, 512)
    h = h.reshape(Bb, TNb, 512) + c_ref[...]                                 # + (B, 1, 512)
    h = jnp.maximum(h, 0.0).reshape(Bb * TNb, 512).astype(jnp.bfloat16)
    # fc2, fc3
    h = jnp.maximum(jnp.dot(h, w2_ref[...], preferred_element_type=jnp.float32)
                    + b2_ref[...], 0.0).astype(jnp.bfloat16)                 # (B*TN, 128)
    h = jnp.maximum(jnp.dot(h, w3_ref[...], preferred_element_type=jnp.float32)
                    + b3_ref[...], 0.0).astype(jnp.bfloat16)                 # (B*TN, 128)
    # fc4 + fc5 fused into one (128, 32) matmul: cols 0..23 = corners, col 24 = fc5 logit,
    # cols 25..31 = zero padding.
    y = (jnp.dot(h, w45_ref[...], preferred_element_type=jnp.float32)
         + b45_ref[...]).reshape(Bb, TNb, 32)

    # nn.Softmax(dim=0): normalize over the batch axis, per point (full batch in-block).
    # Computed lane-parallel over all 32 packed lanes — same vreg count as slicing out
    # lane 24 first, but no cross-lane extraction / reduction / broadcast; only lane 24
    # is committed below.  Reductions are over axis 0 (batch), i.e. across vregs, not lanes.
    m = jnp.max(y, axis=0, keepdims=True)
    e = jnp.exp(y - m)
    d = jnp.sum(e, axis=0, keepdims=True)
    r = pl.reciprocal(d, approx=True)          # EUP slot (co-issues for free)
    r = r * (2.0 - d * r)                      # one Newton step -> ~f32-exact 1/d
    probs = e * r

    # Packed 32-wide output: [:24] corner offsets, [24] softmax score, [25:] zeros.
    lane = jax.lax.broadcasted_iota(jnp.int32, (Bb, TNb, 32), 2)
    out_ref[...] = jnp.where(lane == 24, probs, y)


def pointfusion_head(point_feats, const_feats, w1p, w2, b2, w3, b3, w45, b45, *, tn):
    B, Np, _ = point_feats.shape
    assert Np % tn == 0
    grid = (Np // tn,)
    # Correctness guard (per review): softmax(dim=0) is computed in-kernel over axis 0,
    # so every block must carry the FULL batch — the batch axis is never a grid axis.
    assert len(grid) == 1 and const_feats.shape[0] == B

    def const_spec(arr):
        nd = arr.ndim
        # Block index is constant across the grid -> single buffer (double-buffering these
        # would only double their VMEM footprint for zero benefit).
        return pl.BlockSpec(arr.shape, lambda i, _nd=nd: (0,) * _nd,
                            pipeline_mode=pl.Buffered(1))

    return pl.pallas_call(
        fusion_head_kernel,
        out_shape=jax.ShapeDtypeStruct((B, Np, 32), jnp.float32),
        grid=grid,
        in_specs=[
            # Streamed point features: default double-buffering (raise to Buffered(3) only
            # if a profile ever shows the DMA exposed at large tn).
            pl.BlockSpec((B, tn, F_PNT), lambda i: (0, i, 0)),
            const_spec(const_feats),
            const_spec(w1p), const_spec(w2), const_spec(b2),
            const_spec(w3), const_spec(b3), const_spec(w45), const_spec(b45),
        ],
        out_specs=pl.BlockSpec((B, tn, 32), lambda i: (0, i, 0)),
        compiler_params=pltpu.CompilerParams(
            dimension_semantics=("parallel",),        # point axis shards across TCs (v7x)
            vmem_limit_bytes=32 * 1024 * 1024,        # v5e scoped default is 16 MiB; headroom
        ),
    )(point_feats, const_feats, w1p, w2, b2, w3, b3, w45, b45)


# ----------------------------------------------------------------------------------
# Parameters (deterministic init; Linear weights stored as (in, out)).
# ----------------------------------------------------------------------------------
def init_params(key):
    ks = jax.random.split(key, 13)

    def lin_w(k, fin, fout):
        s = 1.0 / np.sqrt(fin)
        return jax.random.uniform(k, (fin, fout), jnp.float32, -s, s)

    def lin_b(k, fin, fout):
        s = 1.0 / np.sqrt(fin)
        return jax.random.uniform(k, (1, fout), jnp.float32, -s, s)

    p = {}
    # TODO(synk): ResNetFeatures / PointNetEncoder backbones are external modules not
    # provided; replaced by deterministic linear-projection stand-ins with the feature
    # widths implied by fc1 (2048 img + 64 point + 1024 global = 3136).
    p["w_img"] = lin_w(ks[0], 3, F_IMG)
    p["w_pnt"] = lin_w(ks[1], 3, F_PNT)
    p["w_glb"] = lin_w(ks[2], 3, F_GLB)
    # Fusion MLP head (fc1..fc5).  conv1/conv2/Dropout2d are unused in forward -> omitted.
    p["w1"], p["b1"] = lin_w(ks[3], F_DENSE, 512), lin_b(ks[4], F_DENSE, 512)
    p["w2"], p["b2"] = lin_w(ks[5], 512, 128), lin_b(ks[6], 512, 128)
    p["w3"], p["b3"] = lin_w(ks[7], 128, 128), lin_b(ks[8], 128, 128)
    p["w4"], p["b4"] = lin_w(ks[9], 128, 24), lin_b(ks[10], 128, 24)
    p["w5"], p["b5"] = lin_w(ks[11], 128, 1), lin_b(ks[12], 128, 1)
    return p


# ----------------------------------------------------------------------------------
# Device-side forward (single jitted program: backbone stand-ins + Pallas head).
# ----------------------------------------------------------------------------------
@jax.jit
def _device_forward(img, aligned, params):
    B, N, _ = aligned.shape

    # Backbone stand-ins (see TODO in init_params).
    img_pool = jnp.mean(img, axis=(2, 3))                                   # (B, 3)
    img_feats = img_pool @ params["w_img"]                                  # (B, 2048)
    point_feats = jnp.einsum("bnd,df->bnf", aligned, params["w_pnt"])       # (B, N, 64)
    global_feats = jnp.max(jnp.einsum("bnd,df->bnf", aligned, params["w_glb"]),
                           axis=1)                                          # (B, 1024)

    # fc1 split: img/global columns contribute a per-batch constant (they are repeated
    # over N in the reference); only the 64 point columns stream through the kernel.
    w1, b1 = params["w1"], params["b1"]
    const_feats = (img_feats @ w1[:F_IMG]
                   + global_feats @ w1[F_IMG + F_PNT:]
                   + b1)[:, None, :].astype(jnp.float32)                    # (B, 1, 512)
    w1p = w1[F_IMG:F_IMG + F_PNT].astype(jnp.bfloat16)                      # (64, 512)
    w2 = params["w2"].astype(jnp.bfloat16)
    w3 = params["w3"].astype(jnp.bfloat16)
    w45 = jnp.concatenate([params["w4"], params["w5"],
                           jnp.zeros((128, 7), jnp.float32)], axis=1).astype(jnp.bfloat16)
    b45 = jnp.concatenate([params["b4"], params["b5"],
                           jnp.zeros((1, 7), jnp.float32)], axis=1)         # (1, 32) f32

    # Adaptive point tile (see pick_point_tile); pad N up to a multiple of it.  Padded
    # rows are independent softmax columns and are sliced off below.
    tn = pick_point_tile(N, B)
    n_pad = (-N) % tn
    pf = jnp.pad(point_feats.astype(jnp.bfloat16), ((0, 0), (0, n_pad), (0, 0)))

    packed = pointfusion_head(pf, const_feats, w1p, w2, params["b2"],
                              w3, params["b3"], w45, b45, tn=tn)            # (B, Np, 32)
    corner_offsets = packed[:, :N, :24].reshape(B, N, 8, 3)
    scores = packed[:, :N, 24]
    return corner_offsets, scores


def pointfusion_forward(img_np, cloud_np, params):
    aligned_np, _ = project_image_to_3d(img_np, cloud_np)      # host-side crop (ragged shapes)
    return _device_forward(jnp.asarray(img_np), jnp.asarray(aligned_np), params)


if __name__ == "__main__":
    key = jax.random.PRNGKey(0)
    k_param, k_img, k_cloud = jax.random.split(key, 3)

    B, H, W, N = 2, 16, 16, 200
    params = init_params(k_param)

    img = np.asarray(jax.random.normal(k_img, (B, 3, H, W), jnp.float32))

    # Build a cloud whose points all land inside the 0.2-radius crop around the projected
    # image center.  With the row-vector @ K^-1 convention, ray_z != 1, so the cloud's
    # mean z must be chosen so the actual crop center comes out at ray * z0.
    center2d = np.array([W / 2.0, H / 2.0, 1.0], np.float32)
    ray = (center2d @ np.linalg.inv(INTRINSIC)).astype(np.float32)          # (3,)
    z0 = 0.01
    noise = 0.03 * np.tanh(np.asarray(jax.random.normal(k_cloud, (B, N, 3), jnp.float32)))
    noise[:, :, 2] -= noise[:, :, 2].mean(axis=1, keepdims=True)            # zero-mean z noise
    cloud = (ray[None, None, :] * z0 + noise).astype(np.float32)
    cloud[:, :, 2] += np.float32(z0 * (1.0 - ray[2]))                       # => mean_z == z0
    # => center3d = ray * z0 and every point is within ~0.15 (< 0.2) of it: crop keeps all N.

    corner_offsets, scores = pointfusion_forward(img, cloud, params)
    jax.block_until_ready((corner_offsets, scores))

    assert corner_offsets.shape == (B, N, 8, 3)
    assert scores.shape == (B, N)
    # softmax over dim=0 => per-point column sums to 1 across the batch (Newton-refined
    # approx reciprocal keeps this at f32 accuracy).
    assert np.allclose(np.asarray(scores, dtype=np.float64).sum(axis=0), 1.0, atol=1e-4)
    print("KERNEL_OK")
</pallas_src>

<mosaic_0001>
module attributes {stable_mosaic.version = 11 : i64} {
  func.func @fusion_head_kernel(%arg0: i32, %arg1: memref<2x128x64xbf16, #tpu.memory_space<vmem>>, %arg2: memref<2x1x512xf32, #tpu.memory_space<vmem>>, %arg3: memref<64x512xbf16, #tpu.memory_space<vmem>>, %arg4: memref<512x128xbf16, #tpu.memory_space<vmem>>, %arg5: memref<1x128xf32, #tpu.memory_space<vmem>>, %arg6: memref<128x128xbf16, #tpu.memory_space<vmem>>, %arg7: memref<1x128xf32, #tpu.memory_space<vmem>>, %arg8: memref<128x32xbf16, #tpu.memory_space<vmem>>, %arg9: memref<1x32xf32, #tpu.memory_space<vmem>>, %arg10: memref<2x128x32xf32, #tpu.memory_space<vmem>>) attributes {dimension_semantics = [#tpu.dimension_semantics<parallel>], iteration_bounds = array<i64: 2>, scalar_prefetch = 0 : i64, scratch_operands = 0 : i64, tpu.core_type = #tpu.core_type<tc>, window_params = [{transform_indices = @transform_0, window_bounds = array<i64: 2, 128, 64>}, {pipeline_mode = #tpu.pipeline_mode<synchronous>, transform_indices = @transform_1, window_bounds = array<i64: 2, 1, 512>}, {pipeline_mode = #tpu.pipeline_mode<synchronous>, transform_indices = @transform_2, window_bounds = array<i64: 64, 512>}, {pipeline_mode = #tpu.pipeline_mode<synchronous>, transform_indices = @transform_3, window_bounds = array<i64: 512, 128>}, {pipeline_mode = #tpu.pipeline_mode<synchronous>, transform_indices = @transform_4, window_bounds = array<i64: 1, 128>}, {pipeline_mode = #tpu.pipeline_mode<synchronous>, transform_indices = @transform_5, window_bounds = array<i64: 128, 128>}, {pipeline_mode = #tpu.pipeline_mode<synchronous>, transform_indices = @transform_6, window_bounds = array<i64: 1, 128>}, {pipeline_mode = #tpu.pipeline_mode<synchronous>, transform_indices = @transform_7, window_bounds = array<i64: 128, 32>}, {pipeline_mode = #tpu.pipeline_mode<synchronous>, transform_indices = @transform_8, window_bounds = array<i64: 1, 32>}, {transform_indices = @transform_9, window_bounds = array<i64: 2, 128, 32>}]} {
    %c0 = arith.constant 0 : index
    %c0_0 = arith.constant 0 : index
    %c0_1 = arith.constant 0 : index
    %0 = vector.load %arg1[%c0, %c0_0, %c0_1] : memref<2x128x64xbf16, #tpu.memory_space<vmem>>, vector<2x128x64xbf16>
    %1 = vector.shape_cast %0 : vector<2x128x64xbf16> to vector<256x64xbf16>
    %c0_2 = arith.constant 0 : index
    %c0_3 = arith.constant 0 : index
    %2 = vector.load %arg3[%c0_2, %c0_3] : memref<64x512xbf16, #tpu.memory_space<vmem>>, vector<64x512xbf16>
    %cst = arith.constant dense<0.000000e+00> : vector<256x512xf32>
    %3 = tpu.matmul %1, %2, %cst {dimension_numbers = #tpu.dot_dimension_numbers<[1], [0], [0], [1], [0, 0, 1, 1], [], []>} : vector<256x64xbf16>, vector<64x512xbf16>, vector<256x512xf32> -> vector<256x512xf32>
    %4 = vector.shape_cast %3 : vector<256x512xf32> to vector<2x128x512xf32>
    %c0_4 = arith.constant 0 : index
    %c0_5 = arith.constant 0 : index
    %c0_6 = arith.constant 0 : index
    %5 = vector.load %arg2[%c0_4, %c0_5, %c0_6] : memref<2x1x512xf32, #tpu.memory_space<vmem>>, vector<2x1x512xf32>
    %6 = vector.broadcast %5 : vector<2x1x512xf32> to vector<2x128x512xf32>
    %7 = arith.addf %4, %6 : vector<2x128x512xf32>
    %cst_7 = arith.constant 0.000000e+00 : f32
    %8 = vector.broadcast %cst_7 : f32 to vector<2x128x512xf32>
    %9 = arith.maximumf %7, %8 : vector<2x128x512xf32>
    %10 = vector.shape_cast %9 : vector<2x128x512xf32> to vector<256x512xf32>
    %11 = arith.truncf %10 : vector<256x512xf32> to vector<256x512xbf16>
    %c0_8 = arith.constant 0 : index
    %c0_9 = arith.constant 0 : index
    %12 = vector.load %arg4[%c0_8, %c0_9] : memref<512x128xbf16, #tpu.memory_space<vmem>>, vector<512x128xbf16>
    %cst_10 = arith.constant dense<0.000000e+00> : vector<256x128xf32>
    %13 = tpu.matmul %11, %12, %cst_10 {dimension_numbers = #tpu.dot_dimension_numbers<[1], [0], [0], [1], [0, 0, 1, 1], [], []>} : vector<256x512xbf16>, vector<512x128xbf16>, vector<256x128xf32> -> vector<256x128xf32>
    %c0_11 = arith.constant 0 : index
    %c0_12 = arith.constant 0 : index
    %14 = vector.load %arg5[%c0_11, %c0_12] : memref<1x128xf32, #tpu.memory_space<vmem>>, vector<1x128xf32>
    %15 = vector.broadcast %14 : vector<1x128xf32> to vector<256x128xf32>
    %16 = arith.addf %13, %15 : vector<256x128xf32>
    %cst_13 = arith.constant 0.000000e+00 : f32
    %17 = vector.broadcast %cst_13 : f32 to vector<256x128xf32>
    %18 = arith.maximumf %16, %17 : vector<256x128xf32>
    %19 = arith.truncf %18 : vector<256x128xf32> to vector<256x128xbf16>
    %c0_14 = arith.constant 0 : index
    %c0_15 = arith.constant 0 : index
    %20 = vector.load %arg6[%c0_14, %c0_15] : memref<128x128xbf16, #tpu.memory_space<vmem>>, vector<128x128xbf16>
    %cst_16 = arith.constant dense<0.000000e+00> : vector<256x128xf32>
    %21 = tpu.matmul %19, %20, %cst_16 {dimension_numbers = #tpu.dot_dimension_numbers<[1], [0], [0], [1], [0, 0, 1, 1], [], []>} : vector<256x128xbf16>, vector<128x128xbf16>, vector<256x128xf32> -> vector<256x128xf32>
    %c0_17 = arith.constant 0 : index
    %c0_18 = arith.constant 0 : index
    %22 = vector.load %arg7[%c0_17, %c0_18] : memref<1x128xf32, #tpu.memory_space<vmem>>, vector<1x128xf32>
    %23 = vector.broadcast %22 : vector<1x128xf32> to vector<256x128xf32>
    %24 = arith.addf %21, %23 : vector<256x128xf32>
    %cst_19 = arith.constant 0.000000e+00 : f32
    %25 = vector.broadcast %cst_19 : f32 to vector<256x128xf32>
    %26 = arith.maximumf %24, %25 : vector<256x128xf32>
    %27 = arith.truncf %26 : vector<256x128xf32> to vector<256x128xbf16>
    %c0_20 = arith.constant 0 : index
    %c0_21 = arith.constant 0 : index
    %28 = vector.load %arg8[%c0_20, %c0_21] : memref<128x32xbf16, #tpu.memory_space<vmem>>, vector<128x32xbf16>
    %cst_22 = arith.constant dense<0.000000e+00> : vector<256x32xf32>
    %29 = tpu.matmul %27, %28, %cst_22 {dimension_numbers = #tpu.dot_dimension_numbers<[1], [0], [0], [1], [0, 0, 1, 1], [], []>} : vector<256x128xbf16>, vector<128x32xbf16>, vector<256x32xf32> -> vector<256x32xf32>
    %c0_23 = arith.constant 0 : index
    %c0_24 = arith.constant 0 : index
    %30 = vector.load %arg9[%c0_23, %c0_24] : memref<1x32xf32, #tpu.memory_space<vmem>>, vector<1x32xf32>
    %31 = vector.broadcast %30 : vector<1x32xf32> to vector<256x32xf32>
    %32 = arith.addf %29, %31 : vector<256x32xf32>
    %33 = vector.shape_cast %32 : vector<256x32xf32> to vector<2x128x32xf32>
    %cst_25 = arith.constant dense<0xFF800000> : vector<128x32xf32>
    %34 = vector.multi_reduction <maximumf>, %33, %cst_25 [0] : vector<2x128x32xf32> to vector<128x32xf32>
    %35 = vector.shape_cast %34 : vector<128x32xf32> to vector<1x128x32xf32>
    %36 = vector.broadcast %35 : vector<1x128x32xf32> to vector<2x128x32xf32>
    %37 = arith.subf %33, %36 : vector<2x128x32xf32>
    %38 = math.exp %37 : vector<2x128x32xf32>
    %cst_26 = arith.constant dense<0.000000e+00> : vector<128x32xf32>
    %39 = vector.multi_reduction <add>, %38, %cst_26 [0] : vector<2x128x32xf32> to vector<128x32xf32>
    %40 = vector.shape_cast %39 : vector<128x32xf32> to vector<1x128x32xf32>
    %41 = tpu.reciprocal %40 {approx = true} : vector<1x128x32xf32> -> vector<1x128x32xf32>
    %42 = arith.mulf %40, %41 : vector<1x128x32xf32>
    %cst_27 = arith.constant 2.000000e+00 : f32
    %43 = vector.broadcast %cst_27 : f32 to vector<1x128x32xf32>
    %44 = arith.subf %43, %42 : vector<1x128x32xf32>
    %45 = arith.mulf %41, %44 : vector<1x128x32xf32>
    %46 = vector.broadcast %45 : vector<1x128x32xf32> to vector<2x128x32xf32>
    %47 = arith.mulf %38, %46 : vector<2x128x32xf32>
    %48 = tpu.iota {dimensions = array<i32: 2>} : vector<2x128x32xi32>
    %c24_i32 = arith.constant 24 : i32
    %49 = vector.broadcast %c24_i32 : i32 to vector<2x128x32xi32>
    %50 = arith.cmpi eq, %48, %49 : vector<2x128x32xi32>
    %51 = arith.select %50, %47, %33 : vector<2x128x32xi1>, vector<2x128x32xf32>
    %c0_28 = arith.constant 0 : index
    %c0_29 = arith.constant 0 : index
    %c0_30 = arith.constant 0 : index
    %52 = vector.load %arg10[%c0_28, %c0_29, %c0_30] : memref<2x128x32xf32, #tpu.memory_space<vmem>>, vector<2x128x32xf32>
    tpu.vector_store %arg10[%c0_28, %c0_29, %c0_30], %51 {strides = array<i32>} : memref<2x128x32xf32, #tpu.memory_space<vmem>>, vector<2x128x32xf32>,
    return
  }
  func.func @transform_0(%arg0: i32) -> (i32, i32, i32) {
    %c0_i32 = arith.constant 0 : i32
    %c0_i32_0 = arith.constant 0 : i32
    %c0_i32_1 = arith.constant 0 : i32
    return %c0_i32, %arg0, %c0_i32_0 : i32, i32, i32
  }
  func.func @transform_1(%arg0: i32) -> (i32, i32, i32) {
    %c0_i32 = arith.constant 0 : i32
    %c0_i32_0 = arith.constant 0 : i32
    %c0_i32_1 = arith.constant 0 : i32
    %c0_i32_2 = arith.constant 0 : i32
    return %c0_i32, %c0_i32_0, %c0_i32_1 : i32, i32, i32
  }
  func.func @transform_2(%arg0: i32) -> (i32, i32) {
    %c0_i32 = arith.constant 0 : i32
    %c0_i32_0 = arith.constant 0 : i32
    %c0_i32_1 = arith.constant 0 : i32
    return %c0_i32, %c0_i32_0 : i32, i32
  }
  func.func @transform_3(%arg0: i32) -> (i32, i32) {
    %c0_i32 = arith.constant 0 : i32
    %c0_i32_0 = arith.constant 0 : i32
    %c0_i32_1 = arith.constant 0 : i32
    return %c0_i32, %c0_i32_0 : i32, i32
  }
  func.func @transform_4(%arg0: i32) -> (i32, i32) {
    %c0_i32 = arith.constant 0 : i32
    %c0_i32_0 = arith.constant 0 : i32
    %c0_i32_1 = arith.constant 0 : i32
    return %c0_i32, %c0_i32_0 : i32, i32
  }
  func.func @transform_5(%arg0: i32) -> (i32, i32) {
    %c0_i32 = arith.constant 0 : i32
    %c0_i32_0 = arith.constant 0 : i32
    %c0_i32_1 = arith.constant 0 : i32
    return %c0_i32, %c0_i32_0 : i32, i32
  }
  func.func @transform_6(%arg0: i32) -> (i32, i32) {
    %c0_i32 = arith.constant 0 : i32
    %c0_i32_0 = arith.constant 0 : i32
    %c0_i32_1 = arith.constant 0 : i32
    return %c0_i32, %c0_i32_0 : i32, i32
  }
  func.func @transform_7(%arg0: i32) -> (i32, i32) {
    %c0_i32 = arith.constant 0 : i32
    %c0_i32_0 = arith.constant 0 : i32
    %c0_i32_1 = arith.constant 0 : i32
    return %c0_i32, %c0_i32_0 : i32, i32
  }
  func.func @transform_8(%arg0: i32) -> (i32, i32) {
    %c0_i32 = arith.constant 0 : i32
    %c0_i32_0 = arith.constant 0 : i32
    %c0_i32_1 = arith.constant 0 : i32
    return %c0_i32, %c0_i32_0 : i32, i32
  }
  func.func @transform_9(%arg0: i32) -> (i32, i32, i32) {
    %c0_i32 = arith.constant 0 : i32
    %c0_i32_0 = arith.constant 0 : i32
    %c0_i32_1 = arith.constant 0 : i32
    return %c0_i32, %arg0, %c0_i32_0 : i32, i32, i32
  }
}

</mosaic_0001>

<llo_original>
// kernel: _device_forward.1
$region0: #{_device_forward.1}
  #allocation0 [shape = 'u32[]', space=smem, size = 0x4, offset = 0x4, fixed_abs, tag = 'smem constant byte address 0x4 - core index']
  #allocation1 [shape = 'u32[72,128]{1,0:T(1,128)}', space=vmem, size = 0x9000, scoped, tag = 'internal scratch']
  %s0 = inlined_call_operand.vmem [shape: bf16[2,256,64], index: 0, kind: input, shape index: {}]
  %s1 = inlined_call_operand.vmem [shape: f32[2,1,512], index: 1, kind: input, shape index: {}]
  %s2 = inlined_call_operand.vmem [shape: bf16[64,512], index: 2, kind: input, shape index: {}]
  %s3 = inlined_call_operand.vmem [shape: bf16[512,128], index: 3, kind: input, shape index: {}]
  %s4 = inlined_call_operand.hbm [shape: f32[1,128], index: 4, kind: input, shape index: {}]
  %s5 = inlined_call_operand.vmem [shape: bf16[128,128], index: 5, kind: input, shape index: {}]
  %s6 = inlined_call_operand.hbm [shape: f32[1,128], index: 6, kind: input, shape index: {}]
  %s7 = inlined_call_operand.vmem [shape: bf16[128,32], index: 7, kind: input, shape index: {}]
  %s8 = inlined_call_operand.vmem [shape: f32[1,32], index: 8, kind: input, shape index: {}]
  %s9 = inlined_call_operand.vmem [shape: f32[2,256,32], index: 9, kind: output, shape index: {}]
  %s10 = sld [smem:[#allocation0]]
  $region152: #{_device_forward.1} parent=0
    _
  %s12 = ssub.s32 1, %s10
  %s13 = scalar_select 0, %s12, %s10
  $region1: #{_device_forward.1} parent=0
    #allocation2 [shape = 'u8[131072]{0}', space=vmem, size = 0x20000, scoped, tag = 'input window, operand 0']
    #allocation3 [shape = 'u8[512]{0}', space=vmem, size = 0x400, scoped, tag = 'input window, operand 4, single buffered']
    #allocation4 [shape = 's32[2]{0}', space=sflag, size = 0x8, scoped, tag = 'scoped memory for _device_forward.1']
    #allocation5 [shape = 'u8[512]{0}', space=vmem, size = 0x400, scoped, tag = 'input window, operand 6, single buffered']
    #allocation6 [shape = 's32[1]{0}', space=sflag, size = 0x4, scoped, tag = 'scoped memory for _device_forward.1']
    #allocation7 [shape = 'u8[262144]{0}', space=vmem, size = 0x40000, scoped, tag = 'output window, operand 0']
    %14 = vsyncpa [#allocation4], 0
    %15 = vsyncpa [#allocation6], 0
    loop: start=0, step=1, limit=4
    $region2: #{_device_forward.1} parent=1 // loop_pre_header
      _
    $region3: #{_device_forward.1} parent=1 // loop_header
      %s17 = sphi 0, %s21
      %p18 = scmp.ge.s32.totalorder %s17, 4
      %s27 = sphi 0, %s29
      %s30 = sphi 0, %s27
      %s31 = sphi 0, %s30
      %s47 = sphi 0, %s31
      %s51 = sphi 0, %s51
      %s53 = sphi 0, %s51
      %s54 = sphi 0, %s53
      %s68 = sphi 0, %s54
      %s72 = sphi 0, %s72
      %s74 = sphi 0, %s72
      %s75 = sphi 0, %s74
      %s89 = sphi 0, %s75
      %s93 = sphi 0, %s93
      %s95 = sphi 0, %s93
      %s96 = sphi 0, %s95
      %s110 = sphi 0, %s96
      %s114 = sphi 0, %s114
      %s116 = sphi 0, %s114
      %s117 = sphi 0, %s116
      %s131 = sphi 0, %s117
      %s135 = sphi 0, %s135
      %s137 = sphi 0, %s135
      %s138 = sphi 0, %s137
      %s152 = sphi 0, %s138
      %s156 = sphi 0, %s156
      %s158 = sphi 0, %s156
      %s159 = sphi 0, %s158
      %s173 = sphi 0, %s159
      %s177 = sphi 0, %s177
      %s179 = sphi 0, %s177
      %s180 = sphi 0, %s179
      %s194 = sphi 0, %s180
      %s198 = sphi 0, %s198
      %s200 = sphi 0, %s198
      %s201 = sphi 0, %s200
      %s215 = sphi 0, %s201
      %s221 = sphi 0, %s223
      %s224 = sphi 0, %s221
      %s225 = sphi 0, %s224
      %s241 = sphi 0, %s225
    $region4: #{_device_forward.1} parent=1 // loop_header_branch
      %20 = sbr.rel (%p18) target = $region8
    $region5: #{_device_forward.1} parent=1 // loop_body
      %s22 = ssub.s32 %s17, 1
      %s23 = ssub.s32 %s17, 2
      %s24 = sadd.s32 %s17, 1
      %s25 = ssub.s32 %s17, %s24
      %p26 = scmp.eq.s32.totalorder %s25, 0
      %s28 = sadd.s32 %s27, 1
      %s29 = scalar_select %p26, %s27, %s28
      %p32 = pneg %p26
      %p33 = scmp.eq.s32.totalorder %s17, 1
      %p34 = por %p32, %p33
      %p35 = scmp.ne.s32.totalorder %s27, %s30
      %p36 = scmp.eq.s32.totalorder %s17, 0
      %p37 = por %p35, %p36
      %p38 = scmp.ne.s32.totalorder %s27, %s30
      %p39 = scmp.eq.s32.totalorder %s22, 1
      %p40 = por %p38, %p39
      %p41 = scmp.ne.s32.totalorder %s30, %s31
      %p42 = scmp.eq.s32.totalorder %s22, 0
      %p43 = por %p41, %p42
      %p44 = scmp.ne.s32.totalorder %s30, %s31
      %p45 = scmp.eq.s32.totalorder %s23, 1
      %p46 = por %p44, %p45
      %p48 = scmp.ne.s32.totalorder %s31, %s47
      %p49 = scmp.eq.s32.totalorder %s23, 0
      %p50 = por %p48, %p49
      %s52 = sadd.s32 %s51, 1
      %p55 = scmp.eq.s32.totalorder %s17, 1
      %p56 = scmp.ne.s32.totalorder %s51, %s53
      %p57 = scmp.eq.s32.totalorder %s17, 0
      %p58 = por %p56, %p57
      %p59 = scmp.ne.s32.totalorder %s51, %s53
      %p60 = scmp.eq.s32.totalorder %s22, 1
      %p61 = por %p59, %p60
      %p62 = scmp.ne.s32.totalorder %s53, %s54
      %p63 = scmp.eq.s32.totalorder %s22, 0
      %p64 = por %p62, %p63
      %p65 = scmp.ne.s32.totalorder %s53, %s54
      %p66 = scmp.eq.s32.totalorder %s23, 1
      %p67 = por %p65, %p66
      %p69 = scmp.ne.s32.totalorder %s54, %s68
      %p70 = scmp.eq.s32.totalorder %s23, 0
      %p71 = por %p69, %p70
      %s73 = sadd.s32 %s72, 1
      %p76 = scmp.eq.s32.totalorder %s17, 1
      %p77 = scmp.ne.s32.totalorder %s72, %s74
      %p78 = scmp.eq.s32.totalorder %s17, 0
      %p79 = por %p77, %p78
      %p80 = scmp.ne.s32.totalorder %s72, %s74
      %p81 = scmp.eq.s32.totalorder %s22, 1
      %p82 = por %p80, %p81
      %p83 = scmp.ne.s32.totalorder %s74, %s75
      %p84 = scmp.eq.s32.totalorder %s22, 0
      %p85 = por %p83, %p84
      %p86 = scmp.ne.s32.totalorder %s74, %s75
      %p87 = scmp.eq.s32.totalorder %s23, 1
      %p88 = por %p86, %p87
      %p90 = scmp.ne.s32.totalorder %s75, %s89
      %p91 = scmp.eq.s32.totalorder %s23, 0
      %p92 = por %p90, %p91
      %s94 = sadd.s32 %s93, 1
      %p97 = scmp.eq.s32.totalorder %s17, 1
      %p98 = scmp.ne.s32.totalorder %s93, %s95
      %p99 = scmp.eq.s32.totalorder %s17, 0
      %p100 = por %p98, %p99
      %p101 = scmp.ne.s32.totalorder %s93, %s95
      %p102 = scmp.eq.s32.totalorder %s22, 1
      %p103 = por %p101, %p102
      %p104 = scmp.ne.s32.totalorder %s95, %s96
      %p105 = scmp.eq.s32.totalorder %s22, 0
      %p106 = por %p104, %p105
      %p107 = scmp.ne.s32.totalorder %s95, %s96
      %p108 = scmp.eq.s32.totalorder %s23, 1
      %p109 = por %p107, %p108
      %p111 = scmp.ne.s32.totalorder %s96, %s110
      %p112 = scmp.eq.s32.totalorder %s23, 0
      %p113 = por %p111, %p112
      %s115 = sadd.s32 %s114, 1
      %p118 = scmp.eq.s32.totalorder %s17, 1
      %p119 = scmp.ne.s32.totalorder %s114, %s116
      %p120 = scmp.eq.s32.totalorder %s17, 0
      %p121 = por %p119, %p120
      %p122 = scmp.ne.s32.totalorder %s114, %s116
      %p123 = scmp.eq.s32.totalorder %s22, 1
      %p124 = por %p122, %p123
      %p125 = scmp.ne.s32.totalorder %s116, %s117
      %p126 = scmp.eq.s32.totalorder %s22, 0
      %p127 = por %p125, %p126
      %p128 = scmp.ne.s32.totalorder %s116, %s117
      %p129 = scmp.eq.s32.totalorder %s23, 1
      %p130 = por %p128, %p129
      %p132 = scmp.ne.s32.totalorder %s117, %s131
      %p133 = scmp.eq.s32.totalorder %s23, 0
      %p134 = por %p132, %p133
      %s136 = sadd.s32 %s135, 1
      %p139 = scmp.eq.s32.totalorder %s17, 1
      %p140 = scmp.ne.s32.totalorder %s135, %s137
      %p141 = scmp.eq.s32.totalorder %s17, 0
      %p142 = por %p140, %p141
      %p143 = scmp.ne.s32.totalorder %s135, %s137
      %p144 = scmp.eq.s32.totalorder %s22, 1
      %p145 = por %p143, %p144
      %p146 = scmp.ne.s32.totalorder %s137, %s138
      %p147 = scmp.eq.s32.totalorder %s22, 0
      %p148 = por %p146, %p147
      %p149 = scmp.ne.s32.totalorder %s137, %s138
      %p150 = scmp.eq.s32.totalorder %s23, 1
      %p151 = por %p149, %p150
      %p153 = scmp.ne.s32.totalorder %s138, %s152
      %p154 = scmp.eq.s32.totalorder %s23, 0
      %p155 = por %p153, %p154
      %s157 = sadd.s32 %s156, 1
      %p160 = scmp.eq.s32.totalorder %s17, 1
      %p161 = scmp.ne.s32.totalorder %s156, %s158
      %p162 = scmp.eq.s32.totalorder %s17, 0
      %p163 = por %p161, %p162
      %p164 = scmp.ne.s32.totalorder %s156, %s158
      %p165 = scmp.eq.s32.totalorder %s22, 1
      %p166 = por %p164, %p165
      %p167 = scmp.ne.s32.totalorder %s158, %s159
      %p168 = scmp.eq.s32.totalorder %s22, 0
      %p169 = por %p167, %p168
      %p170 = scmp.ne.s32.totalorder %s158, %s159
      %p171 = scmp.eq.s32.totalorder %s23, 1
      %p172 = por %p170, %p171
      %p174 = scmp.ne.s32.totalorder %s159, %s173
      %p175 = scmp.eq.s32.totalorder %s23, 0
      %p176 = por %p174, %p175
      %s178 = sadd.s32 %s177, 1
      %p181 = scmp.eq.s32.totalorder %s17, 1
      %p182 = scmp.ne.s32.totalorder %s177, %s179
      %p183 = scmp.eq.s32.totalorder %s17, 0
      %p184 = por %p182, %p183
      %p185 = scmp.ne.s32.totalorder %s177, %s179
      %p186 = scmp.eq.s32.totalorder %s22, 1
      %p187 = por %p185, %p186
      %p188 = scmp.ne.s32.totalorder %s179, %s180
      %p189 = scmp.eq.s32.totalorder %s22, 0
      %p190 = por %p188, %p189
      %p191 = scmp.ne.s32.totalorder %s179, %s180
      %p192 = scmp.eq.s32.totalorder %s23, 1
      %p193 = por %p191, %p192
      %p195 = scmp.ne.s32.totalorder %s180, %s194
      %p196 = scmp.eq.s32.totalorder %s23, 0
      %p197 = por %p195, %p196
      %s199 = sadd.s32 %s198, 1
      %p202 = scmp.eq.s32.totalorder %s17, 1
      %p203 = scmp.ne.s32.totalorder %s198, %s200
      %p204 = scmp.eq.s32.totalorder %s17, 0
      %p205 = por %p203, %p204
      %p206 = scmp.ne.s32.totalorder %s198, %s200
      %p207 = scmp.eq.s32.totalorder %s22, 1
      %p208 = por %p206, %p207
      %p209 = scmp.ne.s32.totalorder %s200, %s201
      %p210 = scmp.eq.s32.totalorder %s22, 0
      %p211 = por %p209, %p210
      %p212 = scmp.ne.s32.totalorder %s200, %s201
      %p213 = scmp.eq.s32.totalorder %s23, 1
      %p214 = por %p212, %p213
      %p216 = scmp.ne.s32.totalorder %s201, %s215
      %p217 = scmp.eq.s32.totalorder %s23, 0
      %p218 = por %p216, %p217
      %s219 = ssub.s32 %s17, %s24
      %p220 = scmp.eq.s32.totalorder %s219, 0
      %s222 = sadd.s32 %s221, 1
      %s223 = scalar_select %p220, %s221, %s222
      %p226 = pneg %p220
      %p227 = scmp.eq.s32.totalorder %s17, 1
      %p228 = por %p226, %p227
      %p229 = scmp.ne.s32.totalorder %s221, %s224
      %p230 = scmp.eq.s32.totalorder %s17, 0
      %p231 = por %p229, %p230
      %p232 = scmp.ne.s32.totalorder %s221, %s224
      %p233 = scmp.eq.s32.totalorder %s22, 1
      %p234 = por %p232, %p233
      %p235 = scmp.ne.s32.totalorder %s224, %s225
      %p236 = scmp.eq.s32.totalorder %s22, 0
      %p237 = por %p235, %p236
      %p238 = scmp.ne.s32.totalorder %s224, %s225
      %p239 = scmp.eq.s32.totalorder %s23, 1
      %p240 = por %p238, %p239
      %p242 = scmp.ne.s32.totalorder %s225, %s241
      %p243 = scmp.eq.s32.totalorder %s23, 0
      %p244 = por %p242, %p243
      %p245 = scmp.le.s32.totalorder 1, %s17
      %p246 = scmp.lt.s32.totalorder %s17, 3
      %p247 = pnand %p245, %p246
      %p248 = pneg %p247
      // Predicated region
      $region9: #{_device_forward.1} parent=5 // pred_check
        _
      $region10: #{_device_forward.1} parent=5 // pred_check_branch
        %250 = sbr.rel (%p247) target = $region12
      $region11: #{_device_forward.1} parent=5 // pred_region
        %s251 = ssub.s32 %s17, 1
        // Predicated region
        $region13: #{_device_forward.1} parent=11 // pred_check
          %p252 = pneg %p64
        $region14: #{_device_forward.1} parent=11 // pred_check_branch
          %254 = sbr.rel (%p252) target = $region16
        $region15: #{_device_forward.1} parent=11 // pred_region
          _
        $region16: #{_device_forward.1} parent=11 // pred_fallthru
          _
        // Predicated region
        $region17: #{_device_forward.1} parent=11 // pred_check
          %p255 = pneg %p85
        $region18: #{_device_forward.1} parent=11 // pred_check_branch
          %257 = sbr.rel (%p255) target = $region20
        $region19: #{_device_forward.1} parent=11 // pred_region
          _
        $region20: #{_device_forward.1} parent=11 // pred_fallthru
          _
        // Predicated region
        $region21: #{_device_forward.1} parent=11 // pred_check
          %p258 = pneg %p106
        $region22: #{_device_forward.1} parent=11 // pred_check_branch
          %260 = sbr.rel (%p258) target = $region24
        $region23: #{_device_forward.1} parent=11 // pred_region
          _
        $region24: #{_device_forward.1} parent=11 // pred_fallthru
          _
        // Predicated region
        $region25: #{_device_forward.1} parent=11 // pred_check
          %p261 = pneg %p127
        $region26: #{_device_forward.1} parent=11 // pred_check_branch
          %263 = sbr.rel (%p261) target = $region28
        $region27: #{_device_forward.1} parent=11 // pred_region
          %265 = vsyncadd [#allocation4], 0
          %s267 = sshll.u32 %s4, 4
          %s268 = int_to_ptr.hbm [resolvable:$true] %s267
          %s269 = sshll.u32 [#allocation3], 4
          %s270 = int_to_ptr.vmem [resolvable:$true] %s269
          %272 = dma.hbm_to_vmem [thread:$0]  %s268, 16, %s270, [#allocation4]
        $region28: #{_device_forward.1} parent=11 // pred_fallthru
          _
        // Predicated region
        $region29: #{_device_forward.1} parent=11 // pred_check
          %p273 = pneg %p148
        $region30: #{_device_forward.1} parent=11 // pred_check_branch
          %275 = sbr.rel (%p273) target = $region32
        $region31: #{_device_forward.1} parent=11 // pred_region
          _
        $region32: #{_device_forward.1} parent=11 // pred_fallthru
          _
        // Predicated region
        $region33: #{_device_forward.1} parent=11 // pred_check
          %p276 = pneg %p169
        $region34: #{_device_forward.1} parent=11 // pred_check_branch
          %278 = sbr.rel (%p276) target = $region36
        $region35: #{_device_forward.1} parent=11 // pred_region
          %280 = vsyncadd [#allocation6], 0
          %s282 = sshll.u32 %s6, 4
          %s283 = int_to_ptr.hbm [resolvable:$true] %s282
          %s284 = sshll.u32 [#allocation5], 4
          %s285 = int_to_ptr.vmem [resolvable:$true] %s284
          %287 = dma.hbm_to_vmem [thread:$0]  %s283, 16, %s285, [#allocation6]
        $region36: #{_device_forward.1} parent=11 // pred_fallthru
          _
        // Predicated region
        $region37: #{_device_forward.1} parent=11 // pred_check
          %p288 = pneg %p190
        $region38: #{_device_forward.1} parent=11 // pred_check_branch
          %290 = sbr.rel (%p288) target = $region40
        $region39: #{_device_forward.1} parent=11 // pred_region
          _
        $region40: #{_device_forward.1} parent=11 // pred_fallthru
          _
        // Predicated region
        $region41: #{_device_forward.1} parent=11 // pred_check
          %p291 = pneg %p211
        $region42: #{_device_forward.1} parent=11 // pred_check_branch
          %293 = sbr.rel (%p291) target = $region44
        $region43: #{_device_forward.1} parent=11 // pred_region
          _
        $region44: #{_device_forward.1} parent=11 // pred_fallthru
          _
      $region12: #{_device_forward.1} parent=5 // pred_fallthru
        _
      %p294 = scmp.lt.s32.totalorder %s17, 2
      // Predicated region
      $region45: #{_device_forward.1} parent=5 // pred_check
        %p295 = pneg %p294
      $region46: #{_device_forward.1} parent=5 // pred_check_branch
        %297 = sbr.rel (%p295) target = $region48
      $region47: #{_device_forward.1} parent=5 // pred_region
        // Predicated region
        $region49: #{_device_forward.1} parent=47 // pred_check
          %p298 = pneg %p37
        $region50: #{_device_forward.1} parent=47 // pred_check_branch
          %300 = sbr.rel (%p298) target = $region52
        $region51: #{_device_forward.1} parent=47 // pred_region
          %s301 = sand.u32 %s27, 1
          %s302 = sand.u32 %s27, 1
          %s303 = smul.addr %s302, 128
          %s304 = scalar_lea.vmem [#allocation2], %s303
          %s305 = smul.u32 16, %s17
          %s306 = smul.addr %s305, 4
          %s307 = scalar_lea.vmem %s0, %s306
          // Predicated region
          $region53: #{_device_forward.1} parent=51 // pred_check
            _
          $region54: #{_device_forward.1} parent=51 // pred_check_branch
            %309 = sbr.rel (0) target = $region56
          $region55: #{_device_forward.1} parent=51 // pred_region
            // Predicated region
            $region57: #{_device_forward.1} parent=55 // pred_check
              _
            $region58: #{_device_forward.1} parent=55 // pred_check_branch
              %311 = sbr.rel target = $region60
            $region59: #{_device_forward.1} parent=55 // pred_region
              // Predicated region
              $region72: #{_device_forward.1} parent=59 // pred_check
                _
              $region73: #{_device_forward.1} parent=59 // pred_check_branch
                %389 = sbr.rel (0) target = $region75
              $region74: #{_device_forward.1} parent=59 // pred_region
                loop: start=0, step=1, limit=1
                $region76: #{_device_forward.1} parent=74 // loop_pre_header
                  _
                $region77: #{_device_forward.1} parent=74 // loop_header
                  %s391 = sphi 0, %s395
                  %p392 = scmp.ge.s32.totalorder %s391, 1
                  %s396 = sphi %s307, %s307
                  %s397 = sphi %s304, %s304
                $region78: #{_device_forward.1} parent=74 // loop_header_branch
                  %394 = sbr.rel (%p392) target = $region82
                $region79: #{_device_forward.1} parent=74 // loop_body
                  _
                $region80: #{_device_forward.1} parent=74 // loop_footer
                  %s395 = sadd.s32 1, %s391
                $region81: #{_device_forward.1} parent=74 // loop_footer_branch
                  %390 = sbr.rel target = $region77
                $region82: #{_device_forward.1} parent=74 // loop_exit
                  _
                %s399 = ssub.s32 16, 1
                loop: start=0, step=1, limit=1
                $region83: #{_device_forward.1} parent=74 // loop_pre_header
                  _
                $region84: #{_device_forward.1} parent=74 // loop_header
                  %s401 = sphi 0, %s405
                  %p402 = scmp.ge.s32.totalorder %s401, 1
                  %s406 = sphi %s307, %s307
                  %s407 = sphi %s304, %s304
                $region85: #{_device_forward.1} parent=74 // loop_header_branch
                  %404 = sbr.rel (%p402) target = $region89
                $region86: #{_device_forward.1} parent=74 // loop_body
                  %v408 = vld [vmem:[%s406] sm:%s399]
                  %409 = vst [vmem:[%s407] sm:%s399] %v408
                  %v410 = vld [vmem:[%s406 + $0x4] sm:%s399]
                  %411 = vst [vmem:[%s407 + $0x4] sm:%s399] %v410
                  %v412 = vld [vmem:[%s406 + $0x8] sm:%s399]
                  %413 = vst [vmem:[%s407 + $0x8] sm:%s399] %v412
                  %v414 = vld [vmem:[%s406 + $0xc] sm:%s399]
                  %415 = vst [vmem:[%s407 + $0xc] sm:%s399] %v414
                  %v416 = vld [vmem:[%s406 + $0x10] sm:%s399]
                  %417 = vst [vmem:[%s407 + $0x10] sm:%s399] %v416
                  %v418 = vld [vmem:[%s406 + $0x14] sm:%s399]
                  %419 = vst [vmem:[%s407 + $0x14] sm:%s399] %v418
                  %v420 = vld [vmem:[%s406 + $0x18] sm:%s399]
                  %421 = vst [vmem:[%s407 + $0x18] sm:%s399] %v420
                  %v422 = vld [vmem:[%s406 + $0x1c] sm:%s399]
                  %423 = vst [vmem:[%s407 + $0x1c] sm:%s399] %v422
                  %v424 = vld [vmem:[%s406 + $0x20] sm:%s399]
                  %425 = vst [vmem:[%s407 + $0x20] sm:%s399] %v424
                  %v426 = vld [vmem:[%s406 + $0x24] sm:%s399]
                  %427 = vst [vmem:[%s407 + $0x24] sm:%s399] %v426
                  %v428 = vld [vmem:[%s406 + $0x28] sm:%s399]
                  %429 = vst [vmem:[%s407 + $0x28] sm:%s399] %v428
                  %v430 = vld [vmem:[%s406 + $0x2c] sm:%s399]
                  %431 = vst [vmem:[%s407 + $0x2c] sm:%s399] %v430
                  %v432 = vld [vmem:[%s406 + $0x30] sm:%s399]
                  %433 = vst [vmem:[%s407 + $0x30] sm:%s399] %v432
                  %v434 = vld [vmem:[%s406 + $0x34] sm:%s399]
                  %435 = vst [vmem:[%s407 + $0x34] sm:%s399] %v434
                  %v436 = vld [vmem:[%s406 + $0x38] sm:%s399]
                  %437 = vst [vmem:[%s407 + $0x38] sm:%s399] %v436
                  %v438 = vld [vmem:[%s406 + $0x3c] sm:%s399]
                  %439 = vst [vmem:[%s407 + $0x3c] sm:%s399] %v438
                  %v440 = vld [vmem:[%s406 + $0x80] sm:%s399]
                  %441 = vst [vmem:[%s407 + $0x40] sm:%s399] %v440
                  %v442 = vld [vmem:[%s406 + $0x84] sm:%s399]
                  %443 = vst [vmem:[%s407 + $0x44] sm:%s399] %v442
                  %v444 = vld [vmem:[%s406 + $0x88] sm:%s399]
                  %445 = vst [vmem:[%s407 + $0x48] sm:%s399] %v444
                  %v446 = vld [vmem:[%s406 + $0x8c] sm:%s399]
                  %447 = vst [vmem:[%s407 + $0x4c] sm:%s399] %v446
                  %v448 = vld [vmem:[%s406 + $0x90] sm:%s399]
                  %449 = vst [vmem:[%s407 + $0x50] sm:%s399] %v448
                  %v450 = vld [vmem:[%s406 + $0x94] sm:%s399]
                  %451 = vst [vmem:[%s407 + $0x54] sm:%s399] %v450
                  %v452 = vld [vmem:[%s406 + $0x98] sm:%s399]
                  %453 = vst [vmem:[%s407 + $0x58] sm:%s399] %v452
                  %v454 = vld [vmem:[%s406 + $0x9c] sm:%s399]
                  %455 = vst [vmem:[%s407 + $0x5c] sm:%s399] %v454
                  %v456 = vld [vmem:[%s406 + $0xa0] sm:%s399]
                  %457 = vst [vmem:[%s407 + $0x60] sm:%s399] %v456
                  %v458 = vld [vmem:[%s406 + $0xa4] sm:%s399]
                  %459 = vst [vmem:[%s407 + $0x64] sm:%s399] %v458
                  %v460 = vld [vmem:[%s406 + $0xa8] sm:%s399]
                  %461 = vst [vmem:[%s407 + $0x68] sm:%s399] %v460
                  %v462 = vld [vmem:[%s406 + $0xac] sm:%s399]
                  %463 = vst [vmem:[%s407 + $0x6c] sm:%s399] %v462
                  %v464 = vld [vmem:[%s406 + $0xb0] sm:%s399]
                  %465 = vst [vmem:[%s407 + $0x70] sm:%s399] %v464
                  %v466 = vld [vmem:[%s406 + $0xb4] sm:%s399]
                  %467 = vst [vmem:[%s407 + $0x74] sm:%s399] %v466
                  %v468 = vld [vmem:[%s406 + $0xb8] sm:%s399]
                  %469 = vst [vmem:[%s407 + $0x78] sm:%s399] %v468
                  %v470 = vld [vmem:[%s406 + $0xbc] sm:%s399]
                  %471 = vst [vmem:[%s407 + $0x7c] sm:%s399] %v470
                $region87: #{_device_forward.1} parent=74 // loop_footer
                  %s405 = sadd.s32 1, %s401
                $region88: #{_device_forward.1} parent=74 // loop_footer_branch
                  %400 = sbr.rel target = $region84
                $region89: #{_device_forward.1} parent=74 // loop_exit
                  _
              $region75: #{_device_forward.1} parent=59 // pred_fallthru
                _
            $region60: #{_device_forward.1} parent=55 // pred_fallthru
              _
            // Predicated region
            $region61: #{_device_forward.1} parent=55 // pred_check
              _
            $region62: #{_device_forward.1} parent=55 // pred_check_branch
              %313 = sbr.rel (0) target = $region64
            $region63: #{_device_forward.1} parent=55 // pred_region
              %s315 = ssub.s32 16, 1
              loop: start=0, step=1, limit=1
              $region65: #{_device_forward.1} parent=63 // loop_pre_header
                _
              $region66: #{_device_forward.1} parent=63 // loop_header
                %s317 = sphi 0, %s321
                %p318 = scmp.ge.s32.totalorder %s317, 1
                %s322 = sphi %s307, %s307
                %s323 = sphi %s304, %s304
              $region67: #{_device_forward.1} parent=63 // loop_header_branch
                %320 = sbr.rel (%p318) target = $region71
              $region68: #{_device_forward.1} parent=63 // loop_body
                %v324 = vld [vmem:[%s322] sm:%s315]
                %325 = vst [vmem:[%s323] sm:%s315] %v324
                %v326 = vld [vmem:[%s322 + $0x4] sm:%s315]
                %327 = vst [vmem:[%s323 + $0x4] sm:%s315] %v326
                %v328 = vld [vmem:[%s322 + $0x8] sm:%s315]
                %329 = vst [vmem:[%s323 + $0x8] sm:%s315] %v328
                %v330 = vld [vmem:[%s322 + $0xc] sm:%s315]
                %331 = vst [vmem:[%s323 + $0xc] sm:%s315] %v330
                %v332 = vld [vmem:[%s322 + $0x10] sm:%s315]
                %333 = vst [vmem:[%s323 + $0x10] sm:%s315] %v332
                %v334 = vld [vmem:[%s322 + $0x14] sm:%s315]
                %335 = vst [vmem:[%s323 + $0x14] sm:%s315] %v334
                %v336 = vld [vmem:[%s322 + $0x18] sm:%s315]
                %337 = vst [vmem:[%s323 + $0x18] sm:%s315] %v336
                %v338 = vld [vmem:[%s322 + $0x1c] sm:%s315]
                %339 = vst [vmem:[%s323 + $0x1c] sm:%s315] %v338
                %v340 = vld [vmem:[%s322 + $0x20] sm:%s315]
                %341 = vst [vmem:[%s323 + $0x20] sm:%s315] %v340
                %v342 = vld [vmem:[%s322 + $0x24] sm:%s315]
                %343 = vst [vmem:[%s323 + $0x24] sm:%s315] %v342
                %v344 = vld [vmem:[%s322 + $0x28] sm:%s315]
                %345 = vst [vmem:[%s323 + $0x28] sm:%s315] %v344
                %v346 = vld [vmem:[%s322 + $0x2c] sm:%s315]
                %347 = vst [vmem:[%s323 + $0x2c] sm:%s315] %v346
                %v348 = vld [vmem:[%s322 + $0x30] sm:%s315]
                %349 = vst [vmem:[%s323 + $0x30] sm:%s315] %v348
                %v350 = vld [vmem:[%s322 + $0x34] sm:%s315]
                %351 = vst [vmem:[%s323 + $0x34] sm:%s315] %v350
                %v352 = vld [vmem:[%s322 + $0x38] sm:%s315]
                %353 = vst [vmem:[%s323 + $0x38] sm:%s315] %v352
                %v354 = vld [vmem:[%s322 + $0x3c] sm:%s315]
                %355 = vst [vmem:[%s323 + $0x3c] sm:%s315] %v354
                %v356 = vld [vmem:[%s322 + $0x80] sm:%s315]
                %357 = vst [vmem:[%s323 + $0x40] sm:%s315] %v356
                %v358 = vld [vmem:[%s322 + $0x84] sm:%s315]
                %359 = vst [vmem:[%s323 + $0x44] sm:%s315] %v358
                %v360 = vld [vmem:[%s322 + $0x88] sm:%s315]
                %361 = vst [vmem:[%s323 + $0x48] sm:%s315] %v360
                %v362 = vld [vmem:[%s322 + $0x8c] sm:%s315]
                %363 = vst [vmem:[%s323 + $0x4c] sm:%s315] %v362
                %v364 = vld [vmem:[%s322 + $0x90] sm:%s315]
                %365 = vst [vmem:[%s323 + $0x50] sm:%s315] %v364
                %v366 = vld [vmem:[%s322 + $0x94] sm:%s315]
                %367 = vst [vmem:[%s323 + $0x54] sm:%s315] %v366
                %v368 = vld [vmem:[%s322 + $0x98] sm:%s315]
                %369 = vst [vmem:[%s323 + $0x58] sm:%s315] %v368
                %v370 = vld [vmem:[%s322 + $0x9c] sm:%s315]
                %371 = vst [vmem:[%s323 + $0x5c] sm:%s315] %v370
                %v372 = vld [vmem:[%s322 + $0xa0] sm:%s315]
                %373 = vst [vmem:[%s323 + $0x60] sm:%s315] %v372
                %v374 = vld [vmem:[%s322 + $0xa4] sm:%s315]
                %375 = vst [vmem:[%s323 + $0x64] sm:%s315] %v374
                %v376 = vld [vmem:[%s322 + $0xa8] sm:%s315]
                %377 = vst [vmem:[%s323 + $0x68] sm:%s315] %v376
                %v378 = vld [vmem:[%s322 + $0xac] sm:%s315]
                %379 = vst [vmem:[%s323 + $0x6c] sm:%s315] %v378
                %v380 = vld [vmem:[%s322 + $0xb0] sm:%s315]
                %381 = vst [vmem:[%s323 + $0x70] sm:%s315] %v380
                %v382 = vld [vmem:[%s322 + $0xb4] sm:%s315]
                %383 = vst [vmem:[%s323 + $0x74] sm:%s315] %v382
                %v384 = vld [vmem:[%s322 + $0xb8] sm:%s315]
                %385 = vst [vmem:[%s323 + $0x78] sm:%s315] %v384
                %v386 = vld [vmem:[%s322 + $0xbc] sm:%s315]
                %387 = vst [vmem:[%s323 + $0x7c] sm:%s315] %v386
              $region69: #{_device_forward.1} parent=63 // loop_footer
                %s321 = sadd.s32 1, %s317
              $region70: #{_device_forward.1} parent=63 // loop_footer_branch
                %316 = sbr.rel target = $region66
              $region71: #{_device_forward.1} parent=63 // loop_exit
                _
            $region64: #{_device_forward.1} parent=55 // pred_fallthru
              _
          $region56: #{_device_forward.1} parent=51 // pred_fallthru
            _
          %472 = vnop
        $region52: #{_device_forward.1} parent=47 // pred_fallthru
          _
      $region48: #{_device_forward.1} parent=5 // pred_fallthru
        _
      %p473 = scmp.le.s32.totalorder 1, %s17
      %p474 = scmp.lt.s32.totalorder %s17, 3
      %p475 = pnand %p473, %p474
      %p476 = pneg %p475
      // Predicated region
      $region90: #{_device_forward.1} parent=5 // pred_check
        _
      $region91: #{_device_forward.1} parent=5 // pred_check_branch
        %478 = sbr.rel (%p475) target = $region93
      $region92: #{_device_forward.1} parent=5 // pred_region
        %s479 = ssub.s32 %s17, 1
        %s480 = sand.u32 %s30, 1
        %s481 = sand.u32 %s30, 1
        %s482 = smul.addr %s481, 128
        %s483 = scalar_lea.vmem [#allocation2], %s482
        // Predicated region
        $region94: #{_device_forward.1} parent=92 // pred_check
          %p484 = pneg %p43
        $region95: #{_device_forward.1} parent=92 // pred_check_branch
          %486 = sbr.rel (%p484) target = $region97
        $region96: #{_device_forward.1} parent=92 // pred_region
          _
        $region97: #{_device_forward.1} parent=92 // pred_fallthru
          _
        // Predicated region
        $region98: #{_device_forward.1} parent=92 // pred_check
          %p487 = pneg %p127
        $region99: #{_device_forward.1} parent=92 // pred_check_branch
          %489 = sbr.rel (%p487) target = $region101
        $region100: #{_device_forward.1} parent=92 // pred_region
          %491 = dma.done [#allocation4], 16
        $region101: #{_device_forward.1} parent=92 // pred_fallthru
          _
        // Predicated region
        $region102: #{_device_forward.1} parent=92 // pred_check
          %p492 = pneg %p169
        $region103: #{_device_forward.1} parent=92 // pred_check_branch
          %494 = sbr.rel (%p492) target = $region105
        $region104: #{_device_forward.1} parent=92 // pred_region
          %496 = dma.done [#allocation6], 16
        $region105: #{_device_forward.1} parent=92 // pred_fallthru
          _
        %s497 = sand.u32 %s30, 1
        %s498 = sand.u32 %s30, 1
        %s499 = smul.addr %s498, 128
        %s500 = scalar_lea.vmem [#allocation2], %s499
        %p501 = pneg %p43
        %p502 = pneg %p40
        %p503 = pneg %p64
        %p504 = pneg %p61
        %p505 = pneg %p85
        %p506 = pneg %p82
        %p507 = pneg %p106
        %p508 = pneg %p103
        %p509 = pneg %p127
        %p510 = pneg %p124
        %p511 = pneg %p148
        %p512 = pneg %p145
        %p513 = pneg %p169
        %p514 = pneg %p166
        %p515 = pneg %p190
        %p516 = pneg %p187
        %p517 = pneg %p211
        %p518 = pneg %p208
        %p519 = pneg %p237
        %p520 = pneg %p234
        %s521 = sand.u32 %s224, 1
        %s522 = sand.u32 %s224, 1
        %s523 = smul.addr %s522, 256
        %s524 = scalar_lea.vmem [#allocation7], %s523
        %s525 = smul.u32 16, %s22
        %s526 = smul.u32 16, %s22
        %v528 = vld [vmem:[%s483] sm:$0xf]
        %v529 = vld [vmem:[%s483 + $0x4] sm:$0xf]
        %v530 = vld [vmem:[%s483 + $0x8] sm:$0xf]
        %v531 = vld [vmem:[%s483 + $0xc] sm:$0xf]
        %v532 = vld [vmem:[%s483 + $0x10] sm:$0xf]
        %v533 = vld [vmem:[%s483 + $0x14] sm:$0xf]
        %v534 = vld [vmem:[%s483 + $0x18] sm:$0xf]
        %v535 = vld [vmem:[%s483 + $0x1c] sm:$0xf]
        %v536 = vld [vmem:[%s483 + $0x20] sm:$0xf]
        %v537 = vld [vmem:[%s483 + $0x24] sm:$0xf]
        %v538 = vld [vmem:[%s483 + $0x28] sm:$0xf]
        %v539 = vld [vmem:[%s483 + $0x2c] sm:$0xf]
        %v540 = vld [vmem:[%s483 + $0x30] sm:$0xf]
        %v541 = vld [vmem:[%s483 + $0x34] sm:$0xf]
        %v542 = vld [vmem:[%s483 + $0x38] sm:$0xf]
        %v543 = vld [vmem:[%s483 + $0x3c] sm:$0xf]
        %v544 = vld [vmem:[%s483 + $0x40] sm:$0xf]
        %v545 = vld [vmem:[%s483 + $0x44] sm:$0xf]
        %v546 = vld [vmem:[%s483 + $0x48] sm:$0xf]
        %v547 = vld [vmem:[%s483 + $0x4c] sm:$0xf]
        %v548 = vld [vmem:[%s483 + $0x50] sm:$0xf]
        %v549 = vld [vmem:[%s483 + $0x54] sm:$0xf]
        %v550 = vld [vmem:[%s483 + $0x58] sm:$0xf]
        %v551 = vld [vmem:[%s483 + $0x5c] sm:$0xf]
        %v552 = vld [vmem:[%s483 + $0x60] sm:$0xf]
        %v553 = vld [vmem:[%s483 + $0x64] sm:$0xf]
        %v554 = vld [vmem:[%s483 + $0x68] sm:$0xf]
        %v555 = vld [vmem:[%s483 + $0x6c] sm:$0xf]
        %v556 = vld [vmem:[%s483 + $0x70] sm:$0xf]
        %v557 = vld [vmem:[%s483 + $0x74] sm:$0xf]
        %v558 = vld [vmem:[%s483 + $0x78] sm:$0xf]
        %v559 = vld [vmem:[%s483 + $0x7c] sm:$0xf]
        %v560 = vld [vmem:[%s2] sm:$0xff]
        %v561 = vld [vmem:[%s2 + $0x8] sm:$0xff]
        %v562 = vld [vmem:[%s2 + $0x10] sm:$0xff]
        %v563 = vld [vmem:[%s2 + $0x18] sm:$0xff]
        %v564 = vld [vmem:[%s2 + $0x20] sm:$0xff]
        %v565 = vld [vmem:[%s2 + $0x28] sm:$0xff]
        %v566 = vld [vmem:[%s2 + $0x30] sm:$0xff]
        %v567 = vld [vmem:[%s2 + $0x38] sm:$0xff]
        %v568 = vld [vmem:[%s2 + $0x40] sm:$0xff]
        %v569 = vld [vmem:[%s2 + $0x48] sm:$0xff]
        %v570 = vld [vmem:[%s2 + $0x50] sm:$0xff]
        %v571 = vld [vmem:[%s2 + $0x58] sm:$0xff]
        %v572 = vld [vmem:[%s2 + $0x60] sm:$0xff]
        %v573 = vld [vmem:[%s2 + $0x68] sm:$0xff]
        %v574 = vld [vmem:[%s2 + $0x70] sm:$0xff]
        %v575 = vld [vmem:[%s2 + $0x78] sm:$0xff]
        %v608 = vunpack.c.l.b16 %v528
        %v609 = vunpack.c.l.b16 %v529
        %v610 = vunpack.c.l.b16 %v530
        %v611 = vunpack.c.l.b16 %v531
        %v612 = vunpack.c.l.b16 %v532
        %v613 = vunpack.c.l.b16 %v533
        %v614 = vunpack.c.l.b16 %v534
        %v615 = vunpack.c.l.b16 %v535
        %v616 = vunpack.c.l.b16 %v536
        %v617 = vunpack.c.l.b16 %v537
        %v618 = vunpack.c.l.b16 %v538
        %v619 = vunpack.c.l.b16 %v539
        %v620 = vunpack.c.l.b16 %v540
        %v621 = vunpack.c.l.b16 %v541
        %v622 = vunpack.c.l.b16 %v542
        %v623 = vunpack.c.l.b16 %v543
        %v624 = vunpack.c.l.b16 %v544
        %v625 = vunpack.c.l.b16 %v545
        %v626 = vunpack.c.l.b16 %v546
        %v627 = vunpack.c.l.b16 %v547
        %v628 = vunpack.c.l.b16 %v548
        %v629 = vunpack.c.l.b16 %v549
        %v630 = vunpack.c.l.b16 %v550
        %v631 = vunpack.c.l.b16 %v551
        %v632 = vunpack.c.l.b16 %v552
        %v633 = vunpack.c.l.b16 %v553
        %v634 = vunpack.c.l.b16 %v554
        %v635 = vunpack.c.l.b16 %v555
        %v636 = vunpack.c.l.b16 %v556
        %v637 = vunpack.c.l.b16 %v557
        %v638 = vunpack.c.l.b16 %v558
        %v639 = vunpack.c.l.b16 %v559
        %v640 = vpack.c.b16 %v609, %v608
        %v641 = vpack.c.b16 %v611, %v610
        %v642 = vpack.c.b16 %v613, %v612
        %v643 = vpack.c.b16 %v615, %v614
        %v644 = vpack.c.b16 %v617, %v616
        %v645 = vpack.c.b16 %v619, %v618
        %v646 = vpack.c.b16 %v621, %v620
        %v647 = vpack.c.b16 %v623, %v622
        %v648 = vpack.c.b16 %v625, %v624
        %v649 = vpack.c.b16 %v627, %v626
        %v650 = vpack.c.b16 %v629, %v628
        %v651 = vpack.c.b16 %v631, %v630
        %v652 = vpack.c.b16 %v633, %v632
        %v653 = vpack.c.b16 %v635, %v634
        %v654 = vpack.c.b16 %v637, %v636
        %v655 = vpack.c.b16 %v639, %v638
        %v672 = vunpack.c.l.b16 %v560
        %v673 = vunpack.c.h.b16 %v560
        %v674 = vunpack.c.l.b16 %v561
        %v675 = vunpack.c.h.b16 %v561
        %v676 = vunpack.c.l.b16 %v562
        %v677 = vunpack.c.h.b16 %v562
        %v678 = vunpack.c.l.b16 %v563
        %v679 = vunpack.c.h.b16 %v563
        %v680 = vunpack.c.l.b16 %v564
        %v681 = vunpack.c.h.b16 %v564
        %v682 = vunpack.c.l.b16 %v565
        %v683 = vunpack.c.h.b16 %v565
        %v684 = vunpack.c.l.b16 %v566
        %v685 = vunpack.c.h.b16 %v566
        %v686 = vunpack.c.l.b16 %v567
        %v687 = vunpack.c.h.b16 %v567
        %v688 = vunpack.c.l.b16 %v568
        %v689 = vunpack.c.h.b16 %v568
        %v690 = vunpack.c.l.b16 %v569
        %v691 = vunpack.c.h.b16 %v569
        %v692 = vunpack.c.l.b16 %v570
        %v693 = vunpack.c.h.b16 %v570
        %v694 = vunpack.c.l.b16 %v571
        %v695 = vunpack.c.h.b16 %v571
        %v696 = vunpack.c.l.b16 %v572
        %v697 = vunpack.c.h.b16 %v572
        %v698 = vunpack.c.l.b16 %v573
        %v699 = vunpack.c.h.b16 %v573
        %v700 = vunpack.c.l.b16 %v574
        %v701 = vunpack.c.h.b16 %v574
        %v702 = vunpack.c.l.b16 %v575
        %v703 = vunpack.c.h.b16 %v575
        %v704 = vpack.c.b16 %v676, %v672
        %v705 = vpack.c.b16 %v677, %v673
        %v706 = vpack.c.b16 %v678, %v674
        %v707 = vpack.c.b16 %v679, %v675
        %v708 = vpack.c.b16 %v684, %v680
        %v709 = vpack.c.b16 %v685, %v681
        %v710 = vpack.c.b16 %v686, %v682
        %v711 = vpack.c.b16 %v687, %v683
        %v712 = vpack.c.b16 %v692, %v688
        %v713 = vpack.c.b16 %v693, %v689
        %v714 = vpack.c.b16 %v694, %v690
        %v715 = vpack.c.b16 %v695, %v691
        %v716 = vpack.c.b16 %v700, %v696
        %v717 = vpack.c.b16 %v701, %v697
        %v718 = vpack.c.b16 %v702, %v698
        %v719 = vpack.c.b16 %v703, %v699
        %vm736 = vcmask 523264
        %v738 = vsel %vm736, %v640, 0
        %v741 = vsel %vm736, %v641, 0
        %v744 = vsel %vm736, %v642, 0
        %v747 = vsel %vm736, %v643, 0
        %v750 = vsel %vm736, %v644, 0
        %v753 = vsel %vm736, %v645, 0
        %v756 = vsel %vm736, %v646, 0
        %v759 = vsel %vm736, %v647, 0
        %v762 = vsel %vm736, %v648, 0
        %v765 = vsel %vm736, %v649, 0
        %v768 = vsel %vm736, %v650, 0
        %v771 = vsel %vm736, %v651, 0
        %v774 = vsel %vm736, %v652, 0
        %v777 = vsel %vm736, %v653, 0
        %v780 = vsel %vm736, %v654, 0
        %v783 = vsel %vm736, %v655, 0
        %785 = vmatpush.bf16.msra.mxu0 0
        %786 = vmatpush.bf16.msra.mxu0 0
        %787 = vmatpush.bf16.msra.mxu0 0
        %788 = vmatpush.bf16.msra.mxu0 0
        %789 = vmatpush.bf16.msra.mxu0 %v716
        %790 = vmatpush.bf16.msra.mxu0 %v712
        %791 = vmatpush.bf16.msra.mxu0 %v708
        %792 = vmatpush.bf16.msra.mxu0 %v704
        %793 = vmatmul.bf16.gmra.mxu0 %v738
        %v794 = vpop.f32.mrf.mxu0
        %v795 = vadd.f32 0.0, %v794
        %v796 = vpop.f32.mrf.mxu0
        %v797 = vadd.f32 0.0, %v796
        %798 = vmatmul.bf16.gmra.mxu0 %v741
        %v799 = vpop.f32.mrf.mxu0
        %v800 = vadd.f32 0.0, %v799
        %v801 = vpop.f32.mrf.mxu0
        %v802 = vadd.f32 0.0, %v801
        %803 = vmatmul.bf16.gmra.mxu0 %v744
        %v804 = vpop.f32.mrf.mxu0
        %v805 = vadd.f32 0.0, %v804
        %v806 = vpop.f32.mrf.mxu0
        %v807 = vadd.f32 0.0, %v806
        %808 = vmatmul.bf16.gmra.mxu0 %v747
        %v809 = vpop.f32.mrf.mxu0
        %v810 = vadd.f32 0.0, %v809
        %v811 = vpop.f32.mrf.mxu0
        %v812 = vadd.f32 0.0, %v811
        %813 = vmatmul.bf16.gmra.mxu0 %v750
        %v814 = vpop.f32.mrf.mxu0
        %v815 = vadd.f32 0.0, %v814
        %v816 = vpop.f32.mrf.mxu0
        %v817 = vadd.f32 0.0, %v816
        %818 = vmatmul.bf16.gmra.mxu0 %v753
        %v819 = vpop.f32.mrf.mxu0
        %v820 = vadd.f32 0.0, %v819
        %v821 = vpop.f32.mrf.mxu0
        %v822 = vadd.f32 0.0, %v821
        %823 = vmatmul.bf16.gmra.mxu0 %v756
        %v824 = vpop.f32.mrf.mxu0
        %v825 = vadd.f32 0.0, %v824
        %v826 = vpop.f32.mrf.mxu0
        %v827 = vadd.f32 0.0, %v826
        %828 = vmatmul.bf16.gmra.mxu0 %v759
        %v829 = vpop.f32.mrf.mxu0
        %v830 = vadd.f32 0.0, %v829
        %v831 = vpop.f32.mrf.mxu0
        %v832 = vadd.f32 0.0, %v831
        %833 = vmatmul.bf16.gmra.mxu0 %v762
        %v834 = vpop.f32.mrf.mxu0
        %v835 = vadd.f32 0.0, %v834
        %v836 = vpop.f32.mrf.mxu0
        %v837 = vadd.f32 0.0, %v836
        %838 = vmatmul.bf16.gmra.mxu0 %v765
        %v839 = vpop.f32.mrf.mxu0
        %v840 = vadd.f32 0.0, %v839
        %v841 = vpop.f32.mrf.mxu0
        %v842 = vadd.f32 0.0, %v841
        %843 = vmatmul.bf16.gmra.mxu0 %v768
        %v844 = vpop.f32.mrf.mxu0
        %v845 = vadd.f32 0.0, %v844
        %v846 = vpop.f32.mrf.mxu0
        %v847 = vadd.f32 0.0, %v846
        %848 = vmatmul.bf16.gmra.mxu0 %v771
        %v849 = vpop.f32.mrf.mxu0
        %v850 = vadd.f32 0.0, %v849
        %v851 = vpop.f32.mrf.mxu0
        %v852 = vadd.f32 0.0, %v851
        %853 = vmatmul.bf16.gmra.mxu0 %v774
        %v854 = vpop.f32.mrf.mxu0
        %v855 = vadd.f32 0.0, %v854
        %v856 = vpop.f32.mrf.mxu0
        %v857 = vadd.f32 0.0, %v856
        %858 = vmatmul.bf16.gmra.mxu0 %v777
        %v859 = vpop.f32.mrf.mxu0
        %v860 = vadd.f32 0.0, %v859
        %v861 = vpop.f32.mrf.mxu0
        %v862 = vadd.f32 0.0, %v861
        %863 = vmatmul.bf16.gmra.mxu0 %v780
        %v864 = vpop.f32.mrf.mxu0
        %v865 = vadd.f32 0.0, %v864
        %v866 = vpop.f32.mrf.mxu0
        %v867 = vadd.f32 0.0, %v866
        %868 = vmatmul.bf16.gmra.mxu0 %v783
        %v869 = vpop.f32.mrf.mxu0
        %v870 = vadd.f32 0.0, %v869
        %v871 = vpop.f32.mrf.mxu0
        %v872 = vadd.f32 0.0, %v871
        %873 = vdwg.mxu0
        %874 = vmatpush.bf16.msra.mxu0 0
        %875 = vmatpush.bf16.msra.mxu0 0
        %876 = vmatpush.bf16.msra.mxu0 0
        %877 = vmatpush.bf16.msra.mxu0 0
        %878 = vmatpush.bf16.msra.mxu0 %v717
        %879 = vmatpush.bf16.msra.mxu0 %v713
        %880 = vmatpush.bf16.msra.mxu0 %v709
        %881 = vmatpush.bf16.msra.mxu0 %v705
        %882 = vmatmul.bf16.gmra.mxu0 %v738
        %v883 = vpop.f32.mrf.mxu0
        %v884 = vadd.f32 0.0, %v883
        %v885 = vpop.f32.mrf.mxu0
        %v886 = vadd.f32 0.0, %v885
        %887 = vmatmul.bf16.gmra.mxu0 %v741
        %v888 = vpop.f32.mrf.mxu0
        %v889 = vadd.f32 0.0, %v888
        %v890 = vpop.f32.mrf.mxu0
        %v891 = vadd.f32 0.0, %v890
        %892 = vmatmul.bf16.gmra.mxu0 %v744
        %v893 = vpop.f32.mrf.mxu0
        %v894 = vadd.f32 0.0, %v893
        %v895 = vpop.f32.mrf.mxu0
        %v896 = vadd.f32 0.0, %v895
        %897 = vmatmul.bf16.gmra.mxu0 %v747
        %v898 = vpop.f32.mrf.mxu0
        %v899 = vadd.f32 0.0, %v898
        %v900 = vpop.f32.mrf.mxu0
        %v901 = vadd.f32 0.0, %v900
        %902 = vmatmul.bf16.gmra.mxu0 %v750
        %v903 = vpop.f32.mrf.mxu0
        %v904 = vadd.f32 0.0, %v903
        %v905 = vpop.f32.mrf.mxu0
        %v906 = vadd.f32 0.0, %v905
        %907 = vmatmul.bf16.gmra.mxu0 %v753
        %v908 = vpop.f32.mrf.mxu0
        %v909 = vadd.f32 0.0, %v908
        %v910 = vpop.f32.mrf.mxu0
        %v911 = vadd.f32 0.0, %v910
        %912 = vmatmul.bf16.gmra.mxu0 %v756
        %v913 = vpop.f32.mrf.mxu0
        %v914 = vadd.f32 0.0, %v913
        %v915 = vpop.f32.mrf.mxu0
        %v916 = vadd.f32 0.0, %v915
        %917 = vmatmul.bf16.gmra.mxu0 %v759
        %v918 = vpop.f32.mrf.mxu0
        %v919 = vadd.f32 0.0, %v918
        %v920 = vpop.f32.mrf.mxu0
        %v921 = vadd.f32 0.0, %v920
        %922 = vmatmul.bf16.gmra.mxu0 %v762
        %v923 = vpop.f32.mrf.mxu0
        %v924 = vadd.f32 0.0, %v923
        %v925 = vpop.f32.mrf.mxu0
        %v926 = vadd.f32 0.0, %v925
        %927 = vmatmul.bf16.gmra.mxu0 %v765
        %v928 = vpop.f32.mrf.mxu0
        %v929 = vadd.f32 0.0, %v928
        %v930 = vpop.f32.mrf.mxu0
        %v931 = vadd.f32 0.0, %v930
        %932 = vmatmul.bf16.gmra.mxu0 %v768
        %v933 = vpop.f32.mrf.mxu0
        %v934 = vadd.f32 0.0, %v933
        %v935 = vpop.f32.mrf.mxu0
        %v936 = vadd.f32 0.0, %v935
        %937 = vmatmul.bf16.gmra.mxu0 %v771
        %v938 = vpop.f32.mrf.mxu0
        %v939 = vadd.f32 0.0, %v938
        %v940 = vpop.f32.mrf.mxu0
        %v941 = vadd.f32 0.0, %v940
        %942 = vmatmul.bf16.gmra.mxu0 %v774
        %v943 = vpop.f32.mrf.mxu0
        %v944 = vadd.f32 0.0, %v943
        %v945 = vpop.f32.mrf.mxu0
        %v946 = vadd.f32 0.0, %v945
        %947 = vmatmul.bf16.gmra.mxu0 %v777
        %v948 = vpop.f32.mrf.mxu0
        %v949 = vadd.f32 0.0, %v948
        %v950 = vpop.f32.mrf.mxu0
        %v951 = vadd.f32 0.0, %v950
        %952 = vmatmul.bf16.gmra.mxu0 %v780
        %v953 = vpop.f32.mrf.mxu0
        %v954 = vadd.f32 0.0, %v953
        %v955 = vpop.f32.mrf.mxu0
        %v956 = vadd.f32 0.0, %v955
        %957 = vmatmul.bf16.gmra.mxu0 %v783
        %v958 = vpop.f32.mrf.mxu0
        %v959 = vadd.f32 0.0, %v958
        %v960 = vpop.f32.mrf.mxu0
        %v961 = vadd.f32 0.0, %v960
        %962 = vdwg.mxu0
        %963 = vmatpush.bf16.msra.mxu0 0
        %964 = vmatpush.bf16.msra.mxu0 0
        %965 = vmatpush.bf16.msra.mxu0 0
        %966 = vmatpush.bf16.msra.mxu0 0
        %967 = vmatpush.bf16.msra.mxu0 %v718
        %968 = vmatpush.bf16.msra.mxu0 %v714
        %969 = vmatpush.bf16.msra.mxu0 %v710
        %970 = vmatpush.bf16.msra.mxu0 %v706
        %971 = vmatmul.bf16.gmra.mxu0 %v738
        %v972 = vpop.f32.mrf.mxu0
        %v973 = vadd.f32 0.0, %v972
        %v974 = vpop.f32.mrf.mxu0
        %v975 = vadd.f32 0.0, %v974
        %976 = vmatmul.bf16.gmra.mxu0 %v741
        %v977 = vpop.f32.mrf.mxu0
        %v978 = vadd.f32 0.0, %v977
        %v979 = vpop.f32.mrf.mxu0
        %v980 = vadd.f32 0.0, %v979
        %981 = vmatmul.bf16.gmra.mxu0 %v744
        %v982 = vpop.f32.mrf.mxu0
        %v983 = vadd.f32 0.0, %v982
        %v984 = vpop.f32.mrf.mxu0
        %v985 = vadd.f32 0.0, %v984
        %986 = vmatmul.bf16.gmra.mxu0 %v747
        %v987 = vpop.f32.mrf.mxu0
        %v988 = vadd.f32 0.0, %v987
        %v989 = vpop.f32.mrf.mxu0
        %v990 = vadd.f32 0.0, %v989
        %991 = vmatmul.bf16.gmra.mxu0 %v750
        %v992 = vpop.f32.mrf.mxu0
        %v993 = vadd.f32 0.0, %v992
        %v994 = vpop.f32.mrf.mxu0
        %v995 = vadd.f32 0.0, %v994
        %996 = vmatmul.bf16.gmra.mxu0 %v753
        %v997 = vpop.f32.mrf.mxu0
        %v998 = vadd.f32 0.0, %v997
        %v999 = vpop.f32.mrf.mxu0
        %v1000 = vadd.f32 0.0, %v999
        %1001 = vmatmul.bf16.gmra.mxu0 %v756
        %v1002 = vpop.f32.mrf.mxu0
        %v1003 = vadd.f32 0.0, %v1002
        %v1004 = vpop.f32.mrf.mxu0
        %v1005 = vadd.f32 0.0, %v1004
        %1006 = vmatmul.bf16.gmra.mxu0 %v759
        %v1007 = vpop.f32.mrf.mxu0
        %v1008 = vadd.f32 0.0, %v1007
        %v1009 = vpop.f32.mrf.mxu0
        %v1010 = vadd.f32 0.0, %v1009
        %1011 = vmatmul.bf16.gmra.mxu0 %v762
        %v1012 = vpop.f32.mrf.mxu0
        %v1013 = vadd.f32 0.0, %v1012
        %v1014 = vpop.f32.mrf.mxu0
        %v1015 = vadd.f32 0.0, %v1014
        %1016 = vmatmul.bf16.gmra.mxu0 %v765
        %v1017 = vpop.f32.mrf.mxu0
        %v1018 = vadd.f32 0.0, %v1017
        %v1019 = vpop.f32.mrf.mxu0
        %v1020 = vadd.f32 0.0, %v1019
        %1021 = vmatmul.bf16.gmra.mxu0 %v768
        %v1022 = vpop.f32.mrf.mxu0
        %v1023 = vadd.f32 0.0, %v1022
        %v1024 = vpop.f32.mrf.mxu0
        %v1025 = vadd.f32 0.0, %v1024
        %1026 = vmatmul.bf16.gmra.mxu0 %v771
        %v1027 = vpop.f32.mrf.mxu0
        %v1028 = vadd.f32 0.0, %v1027
        %v1029 = vpop.f32.mrf.mxu0
        %v1030 = vadd.f32 0.0, %v1029
        %1031 = vmatmul.bf16.gmra.mxu0 %v774
        %v1032 = vpop.f32.mrf.mxu0
        %v1033 = vadd.f32 0.0, %v1032
        %v1034 = vpop.f32.mrf.mxu0
        %v1035 = vadd.f32 0.0, %v1034
        %1036 = vmatmul.bf16.gmra.mxu0 %v777
        %v1037 = vpop.f32.mrf.mxu0
        %v1038 = vadd.f32 0.0, %v1037
        %v1039 = vpop.f32.mrf.mxu0
        %v1040 = vadd.f32 0.0, %v1039
        %1041 = vmatmul.bf16.gmra.mxu0 %v780
        %v1042 = vpop.f32.mrf.mxu0
        %v1043 = vadd.f32 0.0, %v1042
        %v1044 = vpop.f32.mrf.mxu0
        %v1045 = vadd.f32 0.0, %v1044
        %1046 = vmatmul.bf16.gmra.mxu0 %v783
        %v1047 = vpop.f32.mrf.mxu0
        %v1048 = vadd.f32 0.0, %v1047
        %v1049 = vpop.f32.mrf.mxu0
        %v1050 = vadd.f32 0.0, %v1049
        %1051 = vdwg.mxu0
        %1052 = vmatpush.bf16.msra.mxu0 0
        %1053 = vmatpush.bf16.msra.mxu0 0
        %1054 = vmatpush.bf16.msra.mxu0 0
        %1055 = vmatpush.bf16.msra.mxu0 0
        %1056 = vmatpush.bf16.msra.mxu0 %v719
        %1057 = vmatpush.bf16.msra.mxu0 %v715
        %1058 = vmatpush.bf16.msra.mxu0 %v711
        %1059 = vmatpush.bf16.msra.mxu0 %v707
        %1060 = vmatmul.bf16.gmra.mxu0 %v738
        %v1061 = vpop.f32.mrf.mxu0
        %v1062 = vadd.f32 0.0, %v1061
        %v1063 = vpop.f32.mrf.mxu0
        %v1064 = vadd.f32 0.0, %v1063
        %1065 = vmatmul.bf16.gmra.mxu0 %v741
        %v1066 = vpop.f32.mrf.mxu0
        %v1067 = vadd.f32 0.0, %v1066
        %v1068 = vpop.f32.mrf.mxu0
        %v1069 = vadd.f32 0.0, %v1068
        %1070 = vmatmul.bf16.gmra.mxu0 %v744
        %v1071 = vpop.f32.mrf.mxu0
        %v1072 = vadd.f32 0.0, %v1071
        %v1073 = vpop.f32.mrf.mxu0
        %v1074 = vadd.f32 0.0, %v1073
        %1075 = vmatmul.bf16.gmra.mxu0 %v747
        %v1076 = vpop.f32.mrf.mxu0
        %v1077 = vadd.f32 0.0, %v1076
        %v1078 = vpop.f32.mrf.mxu0
        %v1079 = vadd.f32 0.0, %v1078
        %1080 = vmatmul.bf16.gmra.mxu0 %v750
        %v1081 = vpop.f32.mrf.mxu0
        %v1082 = vadd.f32 0.0, %v1081
        %v1083 = vpop.f32.mrf.mxu0
        %v1084 = vadd.f32 0.0, %v1083
        %1085 = vmatmul.bf16.gmra.mxu0 %v753
        %v1086 = vpop.f32.mrf.mxu0
        %v1087 = vadd.f32 0.0, %v1086
        %v1088 = vpop.f32.mrf.mxu0
        %v1089 = vadd.f32 0.0, %v1088
        %1090 = vmatmul.bf16.gmra.mxu0 %v756
        %v1091 = vpop.f32.mrf.mxu0
        %v1092 = vadd.f32 0.0, %v1091
        %v1093 = vpop.f32.mrf.mxu0
        %v1094 = vadd.f32 0.0, %v1093
        %1095 = vmatmul.bf16.gmra.mxu0 %v759
        %v1096 = vpop.f32.mrf.mxu0
        %v1097 = vadd.f32 0.0, %v1096
        %v1098 = vpop.f32.mrf.mxu0
        %v1099 = vadd.f32 0.0, %v1098
        %1100 = vmatmul.bf16.gmra.mxu0 %v762
        %v1101 = vpop.f32.mrf.mxu0
        %v1102 = vadd.f32 0.0, %v1101
        %v1103 = vpop.f32.mrf.mxu0
        %v1104 = vadd.f32 0.0, %v1103
        %1105 = vmatmul.bf16.gmra.mxu0 %v765
        %v1106 = vpop.f32.mrf.mxu0
        %v1107 = vadd.f32 0.0, %v1106
        %v1108 = vpop.f32.mrf.mxu0
        %v1109 = vadd.f32 0.0, %v1108
        %1110 = vmatmul.bf16.gmra.mxu0 %v768
        %v1111 = vpop.f32.mrf.mxu0
        %v1112 = vadd.f32 0.0, %v1111
        %v1113 = vpop.f32.mrf.mxu0
        %v1114 = vadd.f32 0.0, %v1113
        %1115 = vmatmul.bf16.gmra.mxu0 %v771
        %v1116 = vpop.f32.mrf.mxu0
        %v1117 = vadd.f32 0.0, %v1116
        %v1118 = vpop.f32.mrf.mxu0
        %v1119 = vadd.f32 0.0, %v1118
        %1120 = vmatmul.bf16.gmra.mxu0 %v774
        %v1121 = vpop.f32.mrf.mxu0
        %v1122 = vadd.f32 0.0, %v1121
        %v1123 = vpop.f32.mrf.mxu0
        %v1124 = vadd.f32 0.0, %v1123
        %1125 = vmatmul.bf16.gmra.mxu0 %v777
        %v1126 = vpop.f32.mrf.mxu0
        %v1127 = vadd.f32 0.0, %v1126
        %v1128 = vpop.f32.mrf.mxu0
        %v1129 = vadd.f32 0.0, %v1128
        %1130 = vmatmul.bf16.gmra.mxu0 %v780
        %v1131 = vpop.f32.mrf.mxu0
        %v1132 = vadd.f32 0.0, %v1131
        %v1133 = vpop.f32.mrf.mxu0
        %v1134 = vadd.f32 0.0, %v1133
        %1135 = vmatmul.bf16.gmra.mxu0 %v783
        %v1136 = vpop.f32.mrf.mxu0
        %v1137 = vadd.f32 0.0, %v1136
        %v1138 = vpop.f32.mrf.mxu0
        %v1139 = vadd.f32 0.0, %v1138
        %1140 = vdwg.mxu0
        %v1141 = vld [vmem:[%s1] sm:$0xf]
        %v1142 = vld [vmem:[%s1 + $0x4] sm:$0xf]
        %v1145 = vperm.slane %v1141, 0
        %v1146 = vperm.slane %v1141, 1
        %v1147 = vperm.slane %v1141, 2
        %v1148 = vperm.slane %v1141, 3
        %v1149 = vperm.slane %v1142, 0
        %v1150 = vperm.slane %v1142, 1
        %v1151 = vperm.slane %v1142, 2
        %v1152 = vperm.slane %v1142, 3
        %v1161 = vadd.f32 %v795, %v1145
        %v1162 = vadd.f32 %v884, %v1146
        %v1163 = vadd.f32 %v973, %v1147
        %v1164 = vadd.f32 %v1062, %v1148
        %v1165 = vadd.f32 %v797, %v1145
        %v1166 = vadd.f32 %v886, %v1146
        %v1167 = vadd.f32 %v975, %v1147
        %v1168 = vadd.f32 %v1064, %v1148
        %v1169 = vadd.f32 %v800, %v1145
        %v1170 = vadd.f32 %v889, %v1146
        %v1171 = vadd.f32 %v978, %v1147
        %v1172 = vadd.f32 %v1067, %v1148
        %v1173 = vadd.f32 %v802, %v1145
        %v1174 = vadd.f32 %v891, %v1146
        %v1175 = vadd.f32 %v980, %v1147
        %v1176 = vadd.f32 %v1069, %v1148
        %v1177 = vadd.f32 %v805, %v1145
        %v1178 = vadd.f32 %v894, %v1146
        %v1179 = vadd.f32 %v983, %v1147
        %v1180 = vadd.f32 %v1072, %v1148
        %v1181 = vadd.f32 %v807, %v1145
        %v1182 = vadd.f32 %v896, %v1146
        %v1183 = vadd.f32 %v985, %v1147
        %v1184 = vadd.f32 %v1074, %v1148
        %v1185 = vadd.f32 %v810, %v1145
        %v1186 = vadd.f32 %v899, %v1146
        %v1187 = vadd.f32 %v988, %v1147
        %v1188 = vadd.f32 %v1077, %v1148
        %v1189 = vadd.f32 %v812, %v1145
        %v1190 = vadd.f32 %v901, %v1146
        %v1191 = vadd.f32 %v990, %v1147
        %v1192 = vadd.f32 %v1079, %v1148
        %v1193 = vadd.f32 %v815, %v1145
        %v1194 = vadd.f32 %v904, %v1146
        %v1195 = vadd.f32 %v993, %v1147
        %v1196 = vadd.f32 %v1082, %v1148
        %v1197 = vadd.f32 %v817, %v1145
        %v1198 = vadd.f32 %v906, %v1146
        %v1199 = vadd.f32 %v995, %v1147
        %v1200 = vadd.f32 %v1084, %v1148
        %v1201 = vadd.f32 %v820, %v1145
        %v1202 = vadd.f32 %v909, %v1146
        %v1203 = vadd.f32 %v998, %v1147
        %v1204 = vadd.f32 %v1087, %v1148
        %v1205 = vadd.f32 %v822, %v1145
        %v1206 = vadd.f32 %v911, %v1146
        %v1207 = vadd.f32 %v1000, %v1147
        %v1208 = vadd.f32 %v1089, %v1148
        %v1209 = vadd.f32 %v825, %v1145
        %v1210 = vadd.f32 %v914, %v1146
        %v1211 = vadd.f32 %v1003, %v1147
        %v1212 = vadd.f32 %v1092, %v1148
        %v1213 = vadd.f32 %v827, %v1145
        %v1214 = vadd.f32 %v916, %v1146
        %v1215 = vadd.f32 %v1005, %v1147
        %v1216 = vadd.f32 %v1094, %v1148
        %v1217 = vadd.f32 %v830, %v1145
        %v1218 = vadd.f32 %v919, %v1146
        %v1219 = vadd.f32 %v1008, %v1147
        %v1220 = vadd.f32 %v1097, %v1148
        %v1221 = vadd.f32 %v832, %v1145
        %v1222 = vadd.f32 %v921, %v1146
        %v1223 = vadd.f32 %v1010, %v1147
        %v1224 = vadd.f32 %v1099, %v1148
        %v1225 = vadd.f32 %v835, %v1149
        %v1226 = vadd.f32 %v924, %v1150
        %v1227 = vadd.f32 %v1013, %v1151
        %v1228 = vadd.f32 %v1102, %v1152
        %v1229 = vadd.f32 %v837, %v1149
        %v1230 = vadd.f32 %v926, %v1150
        %v1231 = vadd.f32 %v1015, %v1151
        %v1232 = vadd.f32 %v1104, %v1152
        %v1233 = vadd.f32 %v840, %v1149
        %v1234 = vadd.f32 %v929, %v1150
        %v1235 = vadd.f32 %v1018, %v1151
        %v1236 = vadd.f32 %v1107, %v1152
        %v1237 = vadd.f32 %v842, %v1149
        %v1238 = vadd.f32 %v931, %v1150
        %v1239 = vadd.f32 %v1020, %v1151
        %v1240 = vadd.f32 %v1109, %v1152
        %v1241 = vadd.f32 %v845, %v1149
        %v1242 = vadd.f32 %v934, %v1150
        %v1243 = vadd.f32 %v1023, %v1151
        %v1244 = vadd.f32 %v1112, %v1152
        %v1245 = vadd.f32 %v847, %v1149
        %v1246 = vadd.f32 %v936, %v1150
        %v1247 = vadd.f32 %v1025, %v1151
        %v1248 = vadd.f32 %v1114, %v1152
        %v1249 = vadd.f32 %v850, %v1149
        %v1250 = vadd.f32 %v939, %v1150
        %v1251 = vadd.f32 %v1028, %v1151
        %v1252 = vadd.f32 %v1117, %v1152
        %v1253 = vadd.f32 %v852, %v1149
        %v1254 = vadd.f32 %v941, %v1150
        %v1255 = vadd.f32 %v1030, %v1151
        %v1256 = vadd.f32 %v1119, %v1152
        %v1257 = vadd.f32 %v855, %v1149
        %v1258 = vadd.f32 %v944, %v1150
        %v1259 = vadd.f32 %v1033, %v1151
        %v1260 = vadd.f32 %v1122, %v1152
        %v1261 = vadd.f32 %v857, %v1149
        %v1262 = vadd.f32 %v946, %v1150
        %v1263 = vadd.f32 %v1035, %v1151
        %v1264 = vadd.f32 %v1124, %v1152
        %v1265 = vadd.f32 %v860, %v1149
        %v1266 = vadd.f32 %v949, %v1150
        %v1267 = vadd.f32 %v1038, %v1151
        %v1268 = vadd.f32 %v1127, %v1152
        %v1269 = vadd.f32 %v862, %v1149
        %v1270 = vadd.f32 %v951, %v1150
        %v1271 = vadd.f32 %v1040, %v1151
        %v1272 = vadd.f32 %v1129, %v1152
        %v1273 = vadd.f32 %v865, %v1149
        %v1274 = vadd.f32 %v954, %v1150
        %v1275 = vadd.f32 %v1043, %v1151
        %v1276 = vadd.f32 %v1132, %v1152
        %v1277 = vadd.f32 %v867, %v1149
        %v1278 = vadd.f32 %v956, %v1150
        %v1279 = vadd.f32 %v1045, %v1151
        %v1280 = vadd.f32 %v1134, %v1152
        %v1281 = vadd.f32 %v870, %v1149
        %v1282 = vadd.f32 %v959, %v1150
        %v1283 = vadd.f32 %v1048, %v1151
        %v1284 = vadd.f32 %v1137, %v1152
        %v1285 = vadd.f32 %v872, %v1149
        %v1286 = vadd.f32 %v961, %v1150
        %v1287 = vadd.f32 %v1050, %v1151
        %v1288 = vadd.f32 %v1139, %v1152
        %v1289 = vmax.f32 %v1161, 0.0
        %v1290 = vmax.f32 %v1162, 0.0
        %v1291 = vmax.f32 %v1163, 0.0
        %v1292 = vmax.f32 %v1164, 0.0
        %v1293 = vmax.f32 %v1165, 0.0
        %v1294 = vmax.f32 %v1166, 0.0
        %v1295 = vmax.f32 %v1167, 0.0
        %v1296 = vmax.f32 %v1168, 0.0
        %v1297 = vmax.f32 %v1169, 0.0
        %v1298 = vmax.f32 %v1170, 0.0
        %v1299 = vmax.f32 %v1171, 0.0
        %v1300 = vmax.f32 %v1172, 0.0
        %v1301 = vmax.f32 %v1173, 0.0
        %v1302 = vmax.f32 %v1174, 0.0
        %v1303 = vmax.f32 %v1175, 0.0
        %v1304 = vmax.f32 %v1176, 0.0
        %v1305 = vmax.f32 %v1177, 0.0
        %v1306 = vmax.f32 %v1178, 0.0
        %v1307 = vmax.f32 %v1179, 0.0
        %v1308 = vmax.f32 %v1180, 0.0
        %v1309 = vmax.f32 %v1181, 0.0
        %v1310 = vmax.f32 %v1182, 0.0
        %v1311 = vmax.f32 %v1183, 0.0
        %v1312 = vmax.f32 %v1184, 0.0
        %v1313 = vmax.f32 %v1185, 0.0
        %v1314 = vmax.f32 %v1186, 0.0
        %v1315 = vmax.f32 %v1187, 0.0
        %v1316 = vmax.f32 %v1188, 0.0
        %v1317 = vmax.f32 %v1189, 0.0
        %v1318 = vmax.f32 %v1190, 0.0
        %v1319 = vmax.f32 %v1191, 0.0
        %v1320 = vmax.f32 %v1192, 0.0
        %v1321 = vmax.f32 %v1193, 0.0
        %v1322 = vmax.f32 %v1194, 0.0
        %v1323 = vmax.f32 %v1195, 0.0
        %v1324 = vmax.f32 %v1196, 0.0
        %v1325 = vmax.f32 %v1197, 0.0
        %v1326 = vmax.f32 %v1198, 0.0
        %v1327 = vmax.f32 %v1199, 0.0
        %v1328 = vmax.f32 %v1200, 0.0
        %v1329 = vmax.f32 %v1201, 0.0
        %v1330 = vmax.f32 %v1202, 0.0
        %v1331 = vmax.f32 %v1203, 0.0
        %v1332 = vmax.f32 %v1204, 0.0
        %v1333 = vmax.f32 %v1205, 0.0
        %v1334 = vmax.f32 %v1206, 0.0
        %v1335 = vmax.f32 %v1207, 0.0
        %v1336 = vmax.f32 %v1208, 0.0
        %v1337 = vmax.f32 %v1209, 0.0
        %v1338 = vmax.f32 %v1210, 0.0
        %v1339 = vmax.f32 %v1211, 0.0
        %v1340 = vmax.f32 %v1212, 0.0
        %v1341 = vmax.f32 %v1213, 0.0
        %v1342 = vmax.f32 %v1214, 0.0
        %v1343 = vmax.f32 %v1215, 0.0
        %v1344 = vmax.f32 %v1216, 0.0
        %v1345 = vmax.f32 %v1217, 0.0
        %v1346 = vmax.f32 %v1218, 0.0
        %v1347 = vmax.f32 %v1219, 0.0
        %v1348 = vmax.f32 %v1220, 0.0
        %v1349 = vmax.f32 %v1221, 0.0
        %v1350 = vmax.f32 %v1222, 0.0
        %v1351 = vmax.f32 %v1223, 0.0
        %v1352 = vmax.f32 %v1224, 0.0
        %v1353 = vmax.f32 %v1225, 0.0
        %v1354 = vmax.f32 %v1226, 0.0
        %v1355 = vmax.f32 %v1227, 0.0
        %v1356 = vmax.f32 %v1228, 0.0
        %v1357 = vmax.f32 %v1229, 0.0
        %v1358 = vmax.f32 %v1230, 0.0
        %v1359 = vmax.f32 %v1231, 0.0
        %v1360 = vmax.f32 %v1232, 0.0
        %v1361 = vmax.f32 %v1233, 0.0
        %v1362 = vmax.f32 %v1234, 0.0
        %v1363 = vmax.f32 %v1235, 0.0
        %v1364 = vmax.f32 %v1236, 0.0
        %v1365 = vmax.f32 %v1237, 0.0
        %v1366 = vmax.f32 %v1238, 0.0
        %v1367 = vmax.f32 %v1239, 0.0
        %v1368 = vmax.f32 %v1240, 0.0
        %v1369 = vmax.f32 %v1241, 0.0
        %v1370 = vmax.f32 %v1242, 0.0
        %v1371 = vmax.f32 %v1243, 0.0
        %v1372 = vmax.f32 %v1244, 0.0
        %v1373 = vmax.f32 %v1245, 0.0
        %v1374 = vmax.f32 %v1246, 0.0
        %v1375 = vmax.f32 %v1247, 0.0
        %v1376 = vmax.f32 %v1248, 0.0
        %v1377 = vmax.f32 %v1249, 0.0
        %v1378 = vmax.f32 %v1250, 0.0
        %v1379 = vmax.f32 %v1251, 0.0
        %v1380 = vmax.f32 %v1252, 0.0
        %v1381 = vmax.f32 %v1253, 0.0
        %v1382 = vmax.f32 %v1254, 0.0
        %v1383 = vmax.f32 %v1255, 0.0
        %v1384 = vmax.f32 %v1256, 0.0
        %v1385 = vmax.f32 %v1257, 0.0
        %v1386 = vmax.f32 %v1258, 0.0
        %v1387 = vmax.f32 %v1259, 0.0
        %v1388 = vmax.f32 %v1260, 0.0
        %v1389 = vmax.f32 %v1261, 0.0
        %v1390 = vmax.f32 %v1262, 0.0
        %v1391 = vmax.f32 %v1263, 0.0
        %v1392 = vmax.f32 %v1264, 0.0
        %v1393 = vmax.f32 %v1265, 0.0
        %v1394 = vmax.f32 %v1266, 0.0
        %v1395 = vmax.f32 %v1267, 0.0
        %v1396 = vmax.f32 %v1268, 0.0
        %v1397 = vmax.f32 %v1269, 0.0
        %v1398 = vmax.f32 %v1270, 0.0
        %v1399 = vmax.f32 %v1271, 0.0
        %v1400 = vmax.f32 %v1272, 0.0
        %v1401 = vmax.f32 %v1273, 0.0
        %v1402 = vmax.f32 %v1274, 0.0
        %v1403 = vmax.f32 %v1275, 0.0
        %v1404 = vmax.f32 %v1276, 0.0
        %v1405 = vmax.f32 %v1277, 0.0
        %v1406 = vmax.f32 %v1278, 0.0
        %v1407 = vmax.f32 %v1279, 0.0
        %v1408 = vmax.f32 %v1280, 0.0
        %v1409 = vmax.f32 %v1281, 0.0
        %v1410 = vmax.f32 %v1282, 0.0
        %v1411 = vmax.f32 %v1283, 0.0
        %v1412 = vmax.f32 %v1284, 0.0
        %v1413 = vmax.f32 %v1285, 0.0
        %v1414 = vmax.f32 %v1286, 0.0
        %v1415 = vmax.f32 %v1287, 0.0
        %v1416 = vmax.f32 %v1288, 0.0
        %v1417 = vpack.c.bf16 %v1293, %v1289
        %v1418 = vpack.c.bf16 %v1294, %v1290
        %v1419 = vpack.c.bf16 %v1295, %v1291
        %v1420 = vpack.c.bf16 %v1296, %v1292
        %v1421 = vpack.c.bf16 %v1301, %v1297
        %v1422 = vpack.c.bf16 %v1302, %v1298
        %v1423 = vpack.c.bf16 %v1303, %v1299
        %v1424 = vpack.c.bf16 %v1304, %v1300
        %v1425 = vpack.c.bf16 %v1309, %v1305
        %v1426 = vpack.c.bf16 %v1310, %v1306
        %v1427 = vpack.c.bf16 %v1311, %v1307
        %v1428 = vpack.c.bf16 %v1312, %v1308
        %v1429 = vpack.c.bf16 %v1317, %v1313
        %v1430 = vpack.c.bf16 %v1318, %v1314
        %v1431 = vpack.c.bf16 %v1319, %v1315
        %v1432 = vpack.c.bf16 %v1320, %v1316
        %v1433 = vpack.c.bf16 %v1325, %v1321
        %v1434 = vpack.c.bf16 %v1326, %v1322
        %v1435 = vpack.c.bf16 %v1327, %v1323
        %v1436 = vpack.c.bf16 %v1328, %v1324
        %v1437 = vpack.c.bf16 %v1333, %v1329
        %v1438 = vpack.c.bf16 %v1334, %v1330
        %v1439 = vpack.c.bf16 %v1335, %v1331
        %v1440 = vpack.c.bf16 %v1336, %v1332
        %v1441 = vpack.c.bf16 %v1341, %v1337
        %v1442 = vpack.c.bf16 %v1342, %v1338
        %v1443 = vpack.c.bf16 %v1343, %v1339
        %v1444 = vpack.c.bf16 %v1344, %v1340
        %v1445 = vpack.c.bf16 %v1349, %v1345
        %v1446 = vpack.c.bf16 %v1350, %v1346
        %v1447 = vpack.c.bf16 %v1351, %v1347
        %v1448 = vpack.c.bf16 %v1352, %v1348
        %v1449 = vpack.c.bf16 %v1357, %v1353
        %v1450 = vpack.c.bf16 %v1358, %v1354
        %v1451 = vpack.c.bf16 %v1359, %v1355
        %v1452 = vpack.c.bf16 %v1360, %v1356
        %v1453 = vpack.c.bf16 %v1365, %v1361
        %v1454 = vpack.c.bf16 %v1366, %v1362
        %v1455 = vpack.c.bf16 %v1367, %v1363
        %v1456 = vpack.c.bf16 %v1368, %v1364
        %v1457 = vpack.c.bf16 %v1373, %v1369
        %v1458 = vpack.c.bf16 %v1374, %v1370
        %v1459 = vpack.c.bf16 %v1375, %v1371
        %v1460 = vpack.c.bf16 %v1376, %v1372
        %v1461 = vpack.c.bf16 %v1381, %v1377
        %v1462 = vpack.c.bf16 %v1382, %v1378
        %v1463 = vpack.c.bf16 %v1383, %v1379
        %v1464 = vpack.c.bf16 %v1384, %v1380
        %v1465 = vpack.c.bf16 %v1389, %v1385
        %v1466 = vpack.c.bf16 %v1390, %v1386
        %v1467 = vpack.c.bf16 %v1391, %v1387
        %v1468 = vpack.c.bf16 %v1392, %v1388
        %v1469 = vpack.c.bf16 %v1397, %v1393
        %v1470 = vpack.c.bf16 %v1398, %v1394
        %v1471 = vpack.c.bf16 %v1399, %v1395
        %v1472 = vpack.c.bf16 %v1400, %v1396
        %v1473 = vpack.c.bf16 %v1405, %v1401
        %v1474 = vpack.c.bf16 %v1406, %v1402
        %v1475 = vpack.c.bf16 %v1407, %v1403
        %v1476 = vpack.c.bf16 %v1408, %v1404
        %v1477 = vpack.c.bf16 %v1413, %v1409
        %v1478 = vpack.c.bf16 %v1414, %v1410
        %v1479 = vpack.c.bf16 %v1415, %v1411
        %v1480 = vpack.c.bf16 %v1416, %v1412
        %v1481 = vld [vmem:[%s3] sm:$0xf]
        %v1482 = vld [vmem:[%s3 + $0x4] sm:$0xf]
        %v1483 = vld [vmem:[%s3 + $0x8] sm:$0xf]
        %v1484 = vld [vmem:[%s3 + $0xc] sm:$0xf]
        %v1485 = vld [vmem:[%s3 + $0x10] sm:$0xf]
        %v1486 = vld [vmem:[%s3 + $0x14] sm:$0xf]
        %v1487 = vld [vmem:[%s3 + $0x18] sm:$0xf]
        %v1488 = vld [vmem:[%s3 + $0x1c] sm:$0xf]
        %v1489 = vld [vmem:[%s3 + $0x20] sm:$0xf]
        %v1490 = vld [vmem:[%s3 + $0x24] sm:$0xf]
        %v1491 = vld [vmem:[%s3 + $0x28] sm:$0xf]
        %v1492 = vld [vmem:[%s3 + $0x2c] sm:$0xf]
        %v1493 = vld [vmem:[%s3 + $0x30] sm:$0xf]
        %v1494 = vld [vmem:[%s3 + $0x34] sm:$0xf]
        %v1495 = vld [vmem:[%s3 + $0x38] sm:$0xf]
        %v1496 = vld [vmem:[%s3 + $0x3c] sm:$0xf]
        %v1497 = vld [vmem:[%s3 + $0x40] sm:$0xf]
        %v1498 = vld [vmem:[%s3 + $0x44] sm:$0xf]
        %v1499 = vld [vmem:[%s3 + $0x48] sm:$0xf]
        %v1500 = vld [vmem:[%s3 + $0x4c] sm:$0xf]
        %v1501 = vld [vmem:[%s3 + $0x50] sm:$0xf]
        %v1502 = vld [vmem:[%s3 + $0x54] sm:$0xf]
        %v1503 = vld [vmem:[%s3 + $0x58] sm:$0xf]
        %v1504 = vld [vmem:[%s3 + $0x5c] sm:$0xf]
        %v1505 = vld [vmem:[%s3 + $0x60] sm:$0xf]
        %v1506 = vld [vmem:[%s3 + $0x64] sm:$0xf]
        %v1507 = vld [vmem:[%s3 + $0x68] sm:$0xf]
        %v1508 = vld [vmem:[%s3 + $0x6c] sm:$0xf]
        %v1509 = vld [vmem:[%s3 + $0x70] sm:$0xf]
        %v1510 = vld [vmem:[%s3 + $0x74] sm:$0xf]
        %v1511 = vld [vmem:[%s3 + $0x78] sm:$0xf]
        %v1512 = vld [vmem:[%s3 + $0x7c] sm:$0xf]
        %v1513 = vld [vmem:[%s3 + $0x80] sm:$0xf]
        %v1514 = vld [vmem:[%s3 + $0x84] sm:$0xf]
        %v1515 = vld [vmem:[%s3 + $0x88] sm:$0xf]
        %v1516 = vld [vmem:[%s3 + $0x8c] sm:$0xf]
        %v1517 = vld [vmem:[%s3 + $0x90] sm:$0xf]
        %v1518 = vld [vmem:[%s3 + $0x94] sm:$0xf]
        %v1519 = vld [vmem:[%s3 + $0x98] sm:$0xf]
        %v1520 = vld [vmem:[%s3 + $0x9c] sm:$0xf]
        %v1521 = vld [vmem:[%s3 + $0xa0] sm:$0xf]
        %v1522 = vld [vmem:[%s3 + $0xa4] sm:$0xf]
        %v1523 = vld [vmem:[%s3 + $0xa8] sm:$0xf]
        %v1524 = vld [vmem:[%s3 + $0xac] sm:$0xf]
        %v1525 = vld [vmem:[%s3 + $0xb0] sm:$0xf]
        %v1526 = vld [vmem:[%s3 + $0xb4] sm:$0xf]
        %v1527 = vld [vmem:[%s3 + $0xb8] sm:$0xf]
        %v1528 = vld [vmem:[%s3 + $0xbc] sm:$0xf]
        %v1529 = vld [vmem:[%s3 + $0xc0] sm:$0xf]
        %v1530 = vld [vmem:[%s3 + $0xc4] sm:$0xf]
        %v1531 = vld [vmem:[%s3 + $0xc8] sm:$0xf]
        %v1532 = vld [vmem:[%s3 + $0xcc] sm:$0xf]
        %v1533 = vld [vmem:[%s3 + $0xd0] sm:$0xf]
        %v1534 = vld [vmem:[%s3 + $0xd4] sm:$0xf]
        %v1535 = vld [vmem:[%s3 + $0xd8] sm:$0xf]
        %v1536 = vld [vmem:[%s3 + $0xdc] sm:$0xf]
        %v1537 = vld [vmem:[%s3 + $0xe0] sm:$0xf]
        %v1538 = vld [vmem:[%s3 + $0xe4] sm:$0xf]
        %v1539 = vld [vmem:[%s3 + $0xe8] sm:$0xf]
        %v1540 = vld [vmem:[%s3 + $0xec] sm:$0xf]
        %v1541 = vld [vmem:[%s3 + $0xf0] sm:$0xf]
        %v1542 = vld [vmem:[%s3 + $0xf4] sm:$0xf]
        %v1543 = vld [vmem:[%s3 + $0xf8] sm:$0xf]
        %v1544 = vld [vmem:[%s3 + $0xfc] sm:$0xf]
        %v1545 = vld [vmem:[#allocation3] sm:$0x1]
        %v1547 = vperm.slane %v1545, 0
        %v1613 = vunpack.c.l.b16 %v1481
        %v1614 = vunpack.c.l.b16 %v1482
        %v1615 = vunpack.c.l.b16 %v1483
        %v1616 = vunpack.c.l.b16 %v1484
        %v1617 = vunpack.c.l.b16 %v1485
        %v1618 = vunpack.c.l.b16 %v1486
        %v1619 = vunpack.c.l.b16 %v1487
        %v1620 = vunpack.c.l.b16 %v1488
        %v1621 = vunpack.c.l.b16 %v1489
        %v1622 = vunpack.c.l.b16 %v1490
        %v1623 = vunpack.c.l.b16 %v1491
        %v1624 = vunpack.c.l.b16 %v1492
        %v1625 = vunpack.c.l.b16 %v1493
        %v1626 = vunpack.c.l.b16 %v1494
        %v1627 = vunpack.c.l.b16 %v1495
        %v1628 = vunpack.c.l.b16 %v1496
        %v1629 = vunpack.c.l.b16 %v1497
        %v1630 = vunpack.c.l.b16 %v1498
        %v1631 = vunpack.c.l.b16 %v1499
        %v1632 = vunpack.c.l.b16 %v1500
        %v1633 = vunpack.c.l.b16 %v1501
        %v1634 = vunpack.c.l.b16 %v1502
        %v1635 = vunpack.c.l.b16 %v1503
        %v1636 = vunpack.c.l.b16 %v1504
        %v1637 = vunpack.c.l.b16 %v1505
        %v1638 = vunpack.c.l.b16 %v1506
        %v1639 = vunpack.c.l.b16 %v1507
        %v1640 = vunpack.c.l.b16 %v1508
        %v1641 = vunpack.c.l.b16 %v1509
        %v1642 = vunpack.c.l.b16 %v1510
        %v1643 = vunpack.c.l.b16 %v1511
        %v1644 = vunpack.c.l.b16 %v1512
        %v1645 = vunpack.c.l.b16 %v1513
        %v1646 = vunpack.c.l.b16 %v1514
        %v1647 = vunpack.c.l.b16 %v1515
        %v1648 = vunpack.c.l.b16 %v1516
        %v1649 = vunpack.c.l.b16 %v1517
        %v1650 = vunpack.c.l.b16 %v1518
        %v1651 = vunpack.c.l.b16 %v1519
        %v1652 = vunpack.c.l.b16 %v1520
        %v1653 = vunpack.c.l.b16 %v1521
        %v1654 = vunpack.c.l.b16 %v1522
        %v1655 = vunpack.c.l.b16 %v1523
        %v1656 = vunpack.c.l.b16 %v1524
        %v1657 = vunpack.c.l.b16 %v1525
        %v1658 = vunpack.c.l.b16 %v1526
        %v1659 = vunpack.c.l.b16 %v1527
        %v1660 = vunpack.c.l.b16 %v1528
        %v1661 = vunpack.c.l.b16 %v1529
        %v1662 = vunpack.c.l.b16 %v1530
        %v1663 = vunpack.c.l.b16 %v1531
        %v1664 = vunpack.c.l.b16 %v1532
        %v1665 = vunpack.c.l.b16 %v1533
        %v1666 = vunpack.c.l.b16 %v1534
        %v1667 = vunpack.c.l.b16 %v1535
        %v1668 = vunpack.c.l.b16 %v1536
        %v1669 = vunpack.c.l.b16 %v1537
        %v1670 = vunpack.c.l.b16 %v1538
        %v1671 = vunpack.c.l.b16 %v1539
        %v1672 = vunpack.c.l.b16 %v1540
        %v1673 = vunpack.c.l.b16 %v1541
        %v1674 = vunpack.c.l.b16 %v1542
        %v1675 = vunpack.c.l.b16 %v1543
        %v1676 = vunpack.c.l.b16 %v1544
        %v1677 = vpack.c.b16 %v1614, %v1613
        %v1678 = vpack.c.b16 %v1616, %v1615
        %v1679 = vpack.c.b16 %v1618, %v1617
        %v1680 = vpack.c.b16 %v1620, %v1619
        %v1681 = vpack.c.b16 %v1622, %v1621
        %v1682 = vpack.c.b16 %v1624, %v1623
        %v1683 = vpack.c.b16 %v1626, %v1625
        %v1684 = vpack.c.b16 %v1628, %v1627
        %v1685 = vpack.c.b16 %v1630, %v1629
        %v1686 = vpack.c.b16 %v1632, %v1631
        %v1687 = vpack.c.b16 %v1634, %v1633
        %v1688 = vpack.c.b16 %v1636, %v1635
        %v1689 = vpack.c.b16 %v1638, %v1637
        %v1690 = vpack.c.b16 %v1640, %v1639
        %v1691 = vpack.c.b16 %v1642, %v1641
        %v1692 = vpack.c.b16 %v1644, %v1643
        %v1693 = vpack.c.b16 %v1646, %v1645
        %v1694 = vpack.c.b16 %v1648, %v1647
        %v1695 = vpack.c.b16 %v1650, %v1649
        %v1696 = vpack.c.b16 %v1652, %v1651
        %v1697 = vpack.c.b16 %v1654, %v1653
        %v1698 = vpack.c.b16 %v1656, %v1655
        %v1699 = vpack.c.b16 %v1658, %v1657
        %v1700 = vpack.c.b16 %v1660, %v1659
        %v1701 = vpack.c.b16 %v1662, %v1661
        %v1702 = vpack.c.b16 %v1664, %v1663
        %v1703 = vpack.c.b16 %v1666, %v1665
        %v1704 = vpack.c.b16 %v1668, %v1667
        %v1705 = vpack.c.b16 %v1670, %v1669
        %v1706 = vpack.c.b16 %v1672, %v1671
        %v1707 = vpack.c.b16 %v1674, %v1673
        %v1708 = vpack.c.b16 %v1676, %v1675
        %1741 = vmatpush.bf16.msra.mxu0 %v1684
        %1742 = vmatpush.bf16.msra.mxu0 %v1683
        %1743 = vmatpush.bf16.msra.mxu0 %v1682
        %1744 = vmatpush.bf16.msra.mxu0 %v1681
        %1745 = vmatpush.bf16.msra.mxu0 %v1680
        %1746 = vmatpush.bf16.msra.mxu0 %v1679
        %1747 = vmatpush.bf16.msra.mxu0 %v1678
        %1748 = vmatpush.bf16.msra.mxu0 %v1677
        %1749 = vmatmul.bf16.gmra.mxu0 %v1417
        %v1750 = vpop.f32.mrf.mxu0
        %v1751 = vadd.f32 %v1547, %v1750
        %v1752 = vpop.f32.mrf.mxu0
        %v1753 = vadd.f32 %v1547, %v1752
        %1754 = vmatmul.bf16.gmra.mxu0 %v1421
        %v1755 = vpop.f32.mrf.mxu0
        %v1756 = vadd.f32 %v1547, %v1755
        %v1757 = vpop.f32.mrf.mxu0
        %v1758 = vadd.f32 %v1547, %v1757
        %1759 = vmatmul.bf16.gmra.mxu0 %v1425
        %v1760 = vpop.f32.mrf.mxu0
        %v1761 = vadd.f32 %v1547, %v1760
        %v1762 = vpop.f32.mrf.mxu0
        %v1763 = vadd.f32 %v1547, %v1762
        %1764 = vmatmul.bf16.gmra.mxu0 %v1429
        %v1765 = vpop.f32.mrf.mxu0
        %v1766 = vadd.f32 %v1547, %v1765
        %v1767 = vpop.f32.mrf.mxu0
        %v1768 = vadd.f32 %v1547, %v1767
        %1769 = vmatmul.bf16.gmra.mxu0 %v1433
        %v1770 = vpop.f32.mrf.mxu0
        %v1771 = vadd.f32 %v1547, %v1770
        %v1772 = vpop.f32.mrf.mxu0
        %v1773 = vadd.f32 %v1547, %v1772
        %1774 = vmatmul.bf16.gmra.mxu0 %v1437
        %v1775 = vpop.f32.mrf.mxu0
        %v1776 = vadd.f32 %v1547, %v1775
        %v1777 = vpop.f32.mrf.mxu0
        %v1778 = vadd.f32 %v1547, %v1777
        %1779 = vmatmul.bf16.gmra.mxu0 %v1441
        %v1780 = vpop.f32.mrf.mxu0
        %v1781 = vadd.f32 %v1547, %v1780
        %v1782 = vpop.f32.mrf.mxu0
        %v1783 = vadd.f32 %v1547, %v1782
        %1784 = vmatmul.bf16.gmra.mxu0 %v1445
        %v1785 = vpop.f32.mrf.mxu0
        %v1786 = vadd.f32 %v1547, %v1785
        %v1787 = vpop.f32.mrf.mxu0
        %v1788 = vadd.f32 %v1547, %v1787
        %1789 = vmatmul.bf16.gmra.mxu0 %v1449
        %v1790 = vpop.f32.mrf.mxu0
        %v1791 = vadd.f32 %v1547, %v1790
        %v1792 = vpop.f32.mrf.mxu0
        %v1793 = vadd.f32 %v1547, %v1792
        %1794 = vmatmul.bf16.gmra.mxu0 %v1453
        %v1795 = vpop.f32.mrf.mxu0
        %v1796 = vadd.f32 %v1547, %v1795
        %v1797 = vpop.f32.mrf.mxu0
        %v1798 = vadd.f32 %v1547, %v1797
        %1799 = vmatmul.bf16.gmra.mxu0 %v1457
        %v1800 = vpop.f32.mrf.mxu0
        %v1801 = vadd.f32 %v1547, %v1800
        %v1802 = vpop.f32.mrf.mxu0
        %v1803 = vadd.f32 %v1547, %v1802
        %1804 = vmatmul.bf16.gmra.mxu0 %v1461
        %v1805 = vpop.f32.mrf.mxu0
        %v1806 = vadd.f32 %v1547, %v1805
        %v1807 = vpop.f32.mrf.mxu0
        %v1808 = vadd.f32 %v1547, %v1807
        %1809 = vmatmul.bf16.gmra.mxu0 %v1465
        %v1810 = vpop.f32.mrf.mxu0
        %v1811 = vadd.f32 %v1547, %v1810
        %v1812 = vpop.f32.mrf.mxu0
        %v1813 = vadd.f32 %v1547, %v1812
        %1814 = vmatmul.bf16.gmra.mxu0 %v1469
        %v1815 = vpop.f32.mrf.mxu0
        %v1816 = vadd.f32 %v1547, %v1815
        %v1817 = vpop.f32.mrf.mxu0
        %v1818 = vadd.f32 %v1547, %v1817
        %1819 = vmatmul.bf16.gmra.mxu0 %v1473
        %v1820 = vpop.f32.mrf.mxu0
        %v1821 = vadd.f32 %v1547, %v1820
        %v1822 = vpop.f32.mrf.mxu0
        %v1823 = vadd.f32 %v1547, %v1822
        %1824 = vmatmul.bf16.gmra.mxu0 %v1477
        %v1825 = vpop.f32.mrf.mxu0
        %v1826 = vadd.f32 %v1547, %v1825
        %v1827 = vpop.f32.mrf.mxu0
        %v1828 = vadd.f32 %v1547, %v1827
        %1829 = vdwg.mxu0
        %1830 = vmatpush.bf16.msra.mxu0 %v1692
        %1831 = vmatpush.bf16.msra.mxu0 %v1691
        %1832 = vmatpush.bf16.msra.mxu0 %v1690
        %1833 = vmatpush.bf16.msra.mxu0 %v1689
        %1834 = vmatpush.bf16.msra.mxu0 %v1688
        %1835 = vmatpush.bf16.msra.mxu0 %v1687
        %1836 = vmatpush.bf16.msra.mxu0 %v1686
        %1837 = vmatpush.bf16.msra.mxu0 %v1685
        %1838 = vmatmul.bf16.gmra.mxu0 %v1418
        %v1839 = vpop.f32.mrf.mxu0
        %v1840 = vadd.f32 %v1751, %v1839
        %v1841 = vpop.f32.mrf.mxu0
        %v1842 = vadd.f32 %v1753, %v1841
        %1843 = vmatmul.bf16.gmra.mxu0 %v1422
        %v1844 = vpop.f32.mrf.mxu0
        %v1845 = vadd.f32 %v1756, %v1844
        %v1846 = vpop.f32.mrf.mxu0
        %v1847 = vadd.f32 %v1758, %v1846
        %1848 = vmatmul.bf16.gmra.mxu0 %v1426
        %v1849 = vpop.f32.mrf.mxu0
        %v1850 = vadd.f32 %v1761, %v1849
        %v1851 = vpop.f32.mrf.mxu0
        %v1852 = vadd.f32 %v1763, %v1851
        %1853 = vmatmul.bf16.gmra.mxu0 %v1430
        %v1854 = vpop.f32.mrf.mxu0
        %v1855 = vadd.f32 %v1766, %v1854
        %v1856 = vpop.f32.mrf.mxu0
        %v1857 = vadd.f32 %v1768, %v1856
        %1858 = vmatmul.bf16.gmra.mxu0 %v1434
        %v1859 = vpop.f32.mrf.mxu0
        %v1860 = vadd.f32 %v1771, %v1859
        %v1861 = vpop.f32.mrf.mxu0
        %v1862 = vadd.f32 %v1773, %v1861
        %1863 = vmatmul.bf16.gmra.mxu0 %v1438
        %v1864 = vpop.f32.mrf.mxu0
        %v1865 = vadd.f32 %v1776, %v1864
        %v1866 = vpop.f32.mrf.mxu0
        %v1867 = vadd.f32 %v1778, %v1866
        %1868 = vmatmul.bf16.gmra.mxu0 %v1442
        %v1869 = vpop.f32.mrf.mxu0
        %v1870 = vadd.f32 %v1781, %v1869
        %v1871 = vpop.f32.mrf.mxu0
        %v1872 = vadd.f32 %v1783, %v1871
        %1873 = vmatmul.bf16.gmra.mxu0 %v1446
        %v1874 = vpop.f32.mrf.mxu0
        %v1875 = vadd.f32 %v1786, %v1874
        %v1876 = vpop.f32.mrf.mxu0
        %v1877 = vadd.f32 %v1788, %v1876
        %1878 = vmatmul.bf16.gmra.mxu0 %v1450
        %v1879 = vpop.f32.mrf.mxu0
        %v1880 = vadd.f32 %v1791, %v1879
        %v1881 = vpop.f32.mrf.mxu0
        %v1882 = vadd.f32 %v1793, %v1881
        %1883 = vmatmul.bf16.gmra.mxu0 %v1454
        %v1884 = vpop.f32.mrf.mxu0
        %v1885 = vadd.f32 %v1796, %v1884
        %v1886 = vpop.f32.mrf.mxu0
        %v1887 = vadd.f32 %v1798, %v1886
        %1888 = vmatmul.bf16.gmra.mxu0 %v1458
        %v1889 = vpop.f32.mrf.mxu0
        %v1890 = vadd.f32 %v1801, %v1889
        %v1891 = vpop.f32.mrf.mxu0
        %v1892 = vadd.f32 %v1803, %v1891
        %1893 = vmatmul.bf16.gmra.mxu0 %v1462
        %v1894 = vpop.f32.mrf.mxu0
        %v1895 = vadd.f32 %v1806, %v1894
        %v1896 = vpop.f32.mrf.mxu0
        %v1897 = vadd.f32 %v1808, %v1896
        %1898 = vmatmul.bf16.gmra.mxu0 %v1466
        %v1899 = vpop.f32.mrf.mxu0
        %v1900 = vadd.f32 %v1811, %v1899
        %v1901 = vpop.f32.mrf.mxu0
        %v1902 = vadd.f32 %v1813, %v1901
        %1903 = vmatmul.bf16.gmra.mxu0 %v1470
        %v1904 = vpop.f32.mrf.mxu0
        %v1905 = vadd.f32 %v1816, %v1904
        %v1906 = vpop.f32.mrf.mxu0
        %v1907 = vadd.f32 %v1818, %v1906
        %1908 = vmatmul.bf16.gmra.mxu0 %v1474
        %v1909 = vpop.f32.mrf.mxu0
        %v1910 = vadd.f32 %v1821, %v1909
        %v1911 = vpop.f32.mrf.mxu0
        %v1912 = vadd.f32 %v1823, %v1911
        %1913 = vmatmul.bf16.gmra.mxu0 %v1478
        %v1914 = vpop.f32.mrf.mxu0
        %v1915 = vadd.f32 %v1826, %v1914
        %v1916 = vpop.f32.mrf.mxu0
        %v1917 = vadd.f32 %v1828, %v1916
        %1918 = vdwg.mxu0
        %1919 = vmatpush.bf16.msra.mxu0 %v1700
        %1920 = vmatpush.bf16.msra.mxu0 %v1699
        %1921 = vmatpush.bf16.msra.mxu0 %v1698
        %1922 = vmatpush.bf16.msra.mxu0 %v1697
        %1923 = vmatpush.bf16.msra.mxu0 %v1696
        %1924 = vmatpush.bf16.msra.mxu0 %v1695
        %1925 = vmatpush.bf16.msra.mxu0 %v1694
        %1926 = vmatpush.bf16.msra.mxu0 %v1693
        %1927 = vmatmul.bf16.gmra.mxu0 %v1419
        %v1928 = vpop.f32.mrf.mxu0
        %v1929 = vadd.f32 %v1840, %v1928
        %v1930 = vpop.f32.mrf.mxu0
        %v1931 = vadd.f32 %v1842, %v1930
        %1932 = vmatmul.bf16.gmra.mxu0 %v1423
        %v1933 = vpop.f32.mrf.mxu0
        %v1934 = vadd.f32 %v1845, %v1933
        %v1935 = vpop.f32.mrf.mxu0
        %v1936 = vadd.f32 %v1847, %v1935
        %1937 = vmatmul.bf16.gmra.mxu0 %v1427
        %v1938 = vpop.f32.mrf.mxu0
        %v1939 = vadd.f32 %v1850, %v1938
        %v1940 = vpop.f32.mrf.mxu0
        %v1941 = vadd.f32 %v1852, %v1940
        %1942 = vmatmul.bf16.gmra.mxu0 %v1431
        %v1943 = vpop.f32.mrf.mxu0
        %v1944 = vadd.f32 %v1855, %v1943
        %v1945 = vpop.f32.mrf.mxu0
        %v1946 = vadd.f32 %v1857, %v1945
        %1947 = vmatmul.bf16.gmra.mxu0 %v1435
        %v1948 = vpop.f32.mrf.mxu0
        %v1949 = vadd.f32 %v1860, %v1948
        %v1950 = vpop.f32.mrf.mxu0
        %v1951 = vadd.f32 %v1862, %v1950
        %1952 = vmatmul.bf16.gmra.mxu0 %v1439
        %v1953 = vpop.f32.mrf.mxu0
        %v1954 = vadd.f32 %v1865, %v1953
        %v1955 = vpop.f32.mrf.mxu0
        %v1956 = vadd.f32 %v1867, %v1955
        %1957 = vmatmul.bf16.gmra.mxu0 %v1443
        %v1958 = vpop.f32.mrf.mxu0
        %v1959 = vadd.f32 %v1870, %v1958
        %v1960 = vpop.f32.mrf.mxu0
        %v1961 = vadd.f32 %v1872, %v1960
        %1962 = vmatmul.bf16.gmra.mxu0 %v1447
        %v1963 = vpop.f32.mrf.mxu0
        %v1964 = vadd.f32 %v1875, %v1963
        %v1965 = vpop.f32.mrf.mxu0
        %v1966 = vadd.f32 %v1877, %v1965
        %1967 = vmatmul.bf16.gmra.mxu0 %v1451
        %v1968 = vpop.f32.mrf.mxu0
        %v1969 = vadd.f32 %v1880, %v1968
        %v1970 = vpop.f32.mrf.mxu0
        %v1971 = vadd.f32 %v1882, %v1970
        %1972 = vmatmul.bf16.gmra.mxu0 %v1455
        %v1973 = vpop.f32.mrf.mxu0
        %v1974 = vadd.f32 %v1885, %v1973
        %v1975 = vpop.f32.mrf.mxu0
        %v1976 = vadd.f32 %v1887, %v1975
        %1977 = vmatmul.bf16.gmra.mxu0 %v1459
        %v1978 = vpop.f32.mrf.mxu0
        %v1979 = vadd.f32 %v1890, %v1978
        %v1980 = vpop.f32.mrf.mxu0
        %v1981 = vadd.f32 %v1892, %v1980
        %1982 = vmatmul.bf16.gmra.mxu0 %v1463
        %v1983 = vpop.f32.mrf.mxu0
        %v1984 = vadd.f32 %v1895, %v1983
        %v1985 = vpop.f32.mrf.mxu0
        %v1986 = vadd.f32 %v1897, %v1985
        %1987 = vmatmul.bf16.gmra.mxu0 %v1467
        %v1988 = vpop.f32.mrf.mxu0
        %v1989 = vadd.f32 %v1900, %v1988
        %v1990 = vpop.f32.mrf.mxu0
        %v1991 = vadd.f32 %v1902, %v1990
        %1992 = vmatmul.bf16.gmra.mxu0 %v1471
        %v1993 = vpop.f32.mrf.mxu0
        %v1994 = vadd.f32 %v1905, %v1993
        %v1995 = vpop.f32.mrf.mxu0
        %v1996 = vadd.f32 %v1907, %v1995
        %1997 = vmatmul.bf16.gmra.mxu0 %v1475
        %v1998 = vpop.f32.mrf.mxu0
        %v1999 = vadd.f32 %v1910, %v1998
        %v2000 = vpop.f32.mrf.mxu0
        %v2001 = vadd.f32 %v1912, %v2000
        %2002 = vmatmul.bf16.gmra.mxu0 %v1479
        %v2003 = vpop.f32.mrf.mxu0
        %v2004 = vadd.f32 %v1915, %v2003
        %v2005 = vpop.f32.mrf.mxu0
        %v2006 = vadd.f32 %v1917, %v2005
        %2007 = vdwg.mxu0
        %2008 = vmatpush.bf16.msra.mxu0 %v1708
        %2009 = vmatpush.bf16.msra.mxu0 %v1707
        %2010 = vmatpush.bf16.msra.mxu0 %v1706
        %2011 = vmatpush.bf16.msra.mxu0 %v1705
        %2012 = vmatpush.bf16.msra.mxu0 %v1704
        %2013 = vmatpush.bf16.msra.mxu0 %v1703
        %2014 = vmatpush.bf16.msra.mxu0 %v1702
        %2015 = vmatpush.bf16.msra.mxu0 %v1701
        %2016 = vmatmul.bf16.gmra.mxu0 %v1420
        %v2017 = vpop.f32.mrf.mxu0
        %v2018 = vadd.f32 %v1929, %v2017
        %v2019 = vpop.f32.mrf.mxu0
        %v2020 = vadd.f32 %v1931, %v2019
        %2021 = vmatmul.bf16.gmra.mxu0 %v1424
        %v2022 = vpop.f32.mrf.mxu0
        %v2023 = vadd.f32 %v1934, %v2022
        %v2024 = vpop.f32.mrf.mxu0
        %v2025 = vadd.f32 %v1936, %v2024
        %2026 = vmatmul.bf16.gmra.mxu0 %v1428
        %v2027 = vpop.f32.mrf.mxu0
        %v2028 = vadd.f32 %v1939, %v2027
        %v2029 = vpop.f32.mrf.mxu0
        %v2030 = vadd.f32 %v1941, %v2029
        %2031 = vmatmul.bf16.gmra.mxu0 %v1432
        %v2032 = vpop.f32.mrf.mxu0
        %v2033 = vadd.f32 %v1944, %v2032
        %v2034 = vpop.f32.mrf.mxu0
        %v2035 = vadd.f32 %v1946, %v2034
        %2036 = vmatmul.bf16.gmra.mxu0 %v1436
        %v2037 = vpop.f32.mrf.mxu0
        %v2038 = vadd.f32 %v1949, %v2037
        %v2039 = vpop.f32.mrf.mxu0
        %v2040 = vadd.f32 %v1951, %v2039
        %2041 = vmatmul.bf16.gmra.mxu0 %v1440
        %v2042 = vpop.f32.mrf.mxu0
        %v2043 = vadd.f32 %v1954, %v2042
        %v2044 = vpop.f32.mrf.mxu0
        %v2045 = vadd.f32 %v1956, %v2044
        %2046 = vmatmul.bf16.gmra.mxu0 %v1444
        %v2047 = vpop.f32.mrf.mxu0
        %v2048 = vadd.f32 %v1959, %v2047
        %v2049 = vpop.f32.mrf.mxu0
        %v2050 = vadd.f32 %v1961, %v2049
        %2051 = vmatmul.bf16.gmra.mxu0 %v1448
        %v2052 = vpop.f32.mrf.mxu0
        %v2053 = vadd.f32 %v1964, %v2052
        %v2054 = vpop.f32.mrf.mxu0
        %v2055 = vadd.f32 %v1966, %v2054
        %2056 = vmatmul.bf16.gmra.mxu0 %v1452
        %v2057 = vpop.f32.mrf.mxu0
        %v2058 = vadd.f32 %v1969, %v2057
        %v2059 = vpop.f32.mrf.mxu0
        %v2060 = vadd.f32 %v1971, %v2059
        %2061 = vmatmul.bf16.gmra.mxu0 %v1456
        %v2062 = vpop.f32.mrf.mxu0
        %v2063 = vadd.f32 %v1974, %v2062
        %v2064 = vpop.f32.mrf.mxu0
        %v2065 = vadd.f32 %v1976, %v2064
        %2066 = vmatmul.bf16.gmra.mxu0 %v1460
        %v2067 = vpop.f32.mrf.mxu0
        %v2068 = vadd.f32 %v1979, %v2067
        %v2069 = vpop.f32.mrf.mxu0
        %v2070 = vadd.f32 %v1981, %v2069
        %2071 = vmatmul.bf16.gmra.mxu0 %v1464
        %v2072 = vpop.f32.mrf.mxu0
        %v2073 = vadd.f32 %v1984, %v2072
        %v2074 = vpop.f32.mrf.mxu0
        %v2075 = vadd.f32 %v1986, %v2074
        %2076 = vmatmul.bf16.gmra.mxu0 %v1468
        %v2077 = vpop.f32.mrf.mxu0
        %v2078 = vadd.f32 %v1989, %v2077
        %v2079 = vpop.f32.mrf.mxu0
        %v2080 = vadd.f32 %v1991, %v2079
        %2081 = vmatmul.bf16.gmra.mxu0 %v1472
        %v2082 = vpop.f32.mrf.mxu0
        %v2083 = vadd.f32 %v1994, %v2082
        %v2084 = vpop.f32.mrf.mxu0
        %v2085 = vadd.f32 %v1996, %v2084
        %2086 = vmatmul.bf16.gmra.mxu0 %v1476
        %v2087 = vpop.f32.mrf.mxu0
        %v2088 = vadd.f32 %v1999, %v2087
        %v2089 = vpop.f32.mrf.mxu0
        %v2090 = vadd.f32 %v2001, %v2089
        %2091 = vmatmul.bf16.gmra.mxu0 %v1480
        %v2092 = vpop.f32.mrf.mxu0
        %v2093 = vadd.f32 %v2004, %v2092
        %v2094 = vpop.f32.mrf.mxu0
        %v2095 = vadd.f32 %v2006, %v2094
        %2096 = vdwg.mxu0
        %v2097 = vmax.f32 %v2018, 0.0
        %v2098 = vmax.f32 %v2020, 0.0
        %v2099 = vmax.f32 %v2023, 0.0
        %v2100 = vmax.f32 %v2025, 0.0
        %v2101 = vmax.f32 %v2028, 0.0
        %v2102 = vmax.f32 %v2030, 0.0
        %v2103 = vmax.f32 %v2033, 0.0
        %v2104 = vmax.f32 %v2035, 0.0
        %v2105 = vmax.f32 %v2038, 0.0
        %v2106 = vmax.f32 %v2040, 0.0
        %v2107 = vmax.f32 %v2043, 0.0
        %v2108 = vmax.f32 %v2045, 0.0
        %v2109 = vmax.f32 %v2048, 0.0
        %v2110 = vmax.f32 %v2050, 0.0
        %v2111 = vmax.f32 %v2053, 0.0
        %v2112 = vmax.f32 %v2055, 0.0
        %v2113 = vmax.f32 %v2058, 0.0
        %v2114 = vmax.f32 %v2060, 0.0
        %v2115 = vmax.f32 %v2063, 0.0
        %v2116 = vmax.f32 %v2065, 0.0
        %v2117 = vmax.f32 %v2068, 0.0
        %v2118 = vmax.f32 %v2070, 0.0
        %v2119 = vmax.f32 %v2073, 0.0
        %v2120 = vmax.f32 %v2075, 0.0
        %v2121 = vmax.f32 %v2078, 0.0
        %v2122 = vmax.f32 %v2080, 0.0
        %v2123 = vmax.f32 %v2083, 0.0
        %v2124 = vmax.f32 %v2085, 0.0
        %v2125 = vmax.f32 %v2088, 0.0
        %v2126 = vmax.f32 %v2090, 0.0
        %v2127 = vmax.f32 %v2093, 0.0
        %v2128 = vmax.f32 %v2095, 0.0
        %v2129 = vpack.c.bf16 %v2098, %v2097
        %v2130 = vpack.c.bf16 %v2100, %v2099
        %v2131 = vpack.c.bf16 %v2102, %v2101
        %v2132 = vpack.c.bf16 %v2104, %v2103
        %v2133 = vpack.c.bf16 %v2106, %v2105
        %v2134 = vpack.c.bf16 %v2108, %v2107
        %v2135 = vpack.c.bf16 %v2110, %v2109
        %v2136 = vpack.c.bf16 %v2112, %v2111
        %v2137 = vpack.c.bf16 %v2114, %v2113
        %v2138 = vpack.c.bf16 %v2116, %v2115
        %v2139 = vpack.c.bf16 %v2118, %v2117
        %v2140 = vpack.c.bf16 %v2120, %v2119
        %v2141 = vpack.c.bf16 %v2122, %v2121
        %v2142 = vpack.c.bf16 %v2124, %v2123
        %v2143 = vpack.c.bf16 %v2126, %v2125
        %v2144 = vpack.c.bf16 %v2128, %v2127
        %v2145 = vld [vmem:[%s5] sm:$0xf]
        %v2146 = vld [vmem:[%s5 + $0x4] sm:$0xf]
        %v2147 = vld [vmem:[%s5 + $0x8] sm:$0xf]
        %v2148 = vld [vmem:[%s5 + $0xc] sm:$0xf]
        %v2149 = vld [vmem:[%s5 + $0x10] sm:$0xf]
        %v2150 = vld [vmem:[%s5 + $0x14] sm:$0xf]
        %v2151 = vld [vmem:[%s5 + $0x18] sm:$0xf]
        %v2152 = vld [vmem:[%s5 + $0x1c] sm:$0xf]
        %v2153 = vld [vmem:[%s5 + $0x20] sm:$0xf]
        %v2154 = vld [vmem:[%s5 + $0x24] sm:$0xf]
        %v2155 = vld [vmem:[%s5 + $0x28] sm:$0xf]
        %v2156 = vld [vmem:[%s5 + $0x2c] sm:$0xf]
        %v2157 = vld [vmem:[%s5 + $0x30] sm:$0xf]
        %v2158 = vld [vmem:[%s5 + $0x34] sm:$0xf]
        %v2159 = vld [vmem:[%s5 + $0x38] sm:$0xf]
        %v2160 = vld [vmem:[%s5 + $0x3c] sm:$0xf]
        %v2161 = vld [vmem:[#allocation5] sm:$0x1]
        %v2163 = vperm.slane %v2161, 0
        %v2181 = vunpack.c.l.b16 %v2145
        %v2182 = vunpack.c.l.b16 %v2146
        %v2183 = vunpack.c.l.b16 %v2147
        %v2184 = vunpack.c.l.b16 %v2148
        %v2185 = vunpack.c.l.b16 %v2149
        %v2186 = vunpack.c.l.b16 %v2150
        %v2187 = vunpack.c.l.b16 %v2151
        %v2188 = vunpack.c.l.b16 %v2152
        %v2189 = vunpack.c.l.b16 %v2153
        %v2190 = vunpack.c.l.b16 %v2154
        %v2191 = vunpack.c.l.b16 %v2155
        %v2192 = vunpack.c.l.b16 %v2156
        %v2193 = vunpack.c.l.b16 %v2157
        %v2194 = vunpack.c.l.b16 %v2158
        %v2195 = vunpack.c.l.b16 %v2159
        %v2196 = vunpack.c.l.b16 %v2160
        %v2197 = vpack.c.b16 %v2182, %v2181
        %v2198 = vpack.c.b16 %v2184, %v2183
        %v2199 = vpack.c.b16 %v2186, %v2185
        %v2200 = vpack.c.b16 %v2188, %v2187
        %v2201 = vpack.c.b16 %v2190, %v2189
        %v2202 = vpack.c.b16 %v2192, %v2191
        %v2203 = vpack.c.b16 %v2194, %v2193
        %v2204 = vpack.c.b16 %v2196, %v2195
        %2213 = vmatpush.bf16.msra.mxu0 %v2204
        %2214 = vmatpush.bf16.msra.mxu0 %v2203
        %2215 = vmatpush.bf16.msra.mxu0 %v2202
        %2216 = vmatpush.bf16.msra.mxu0 %v2201
        %2217 = vmatpush.bf16.msra.mxu0 %v2200
        %2218 = vmatpush.bf16.msra.mxu0 %v2199
        %2219 = vmatpush.bf16.msra.mxu0 %v2198
        %2220 = vmatpush.bf16.msra.mxu0 %v2197
        %2221 = vmatmul.bf16.gmra.mxu0 %v2129
        %v2222 = vpop.f32.mrf.mxu0
        %v2223 = vadd.f32 %v2163, %v2222
        %v2224 = vpop.f32.mrf.mxu0
        %v2225 = vadd.f32 %v2163, %v2224
        %2226 = vmatmul.bf16.gmra.mxu0 %v2130
        %v2227 = vpop.f32.mrf.mxu0
        %v2228 = vadd.f32 %v2163, %v2227
        %v2229 = vpop.f32.mrf.mxu0
        %v2230 = vadd.f32 %v2163, %v2229
        %2231 = vmatmul.bf16.gmra.mxu0 %v2131
        %v2232 = vpop.f32.mrf.mxu0
        %v2233 = vadd.f32 %v2163, %v2232
        %v2234 = vpop.f32.mrf.mxu0
        %v2235 = vadd.f32 %v2163, %v2234
        %2236 = vmatmul.bf16.gmra.mxu0 %v2132
        %v2237 = vpop.f32.mrf.mxu0
        %v2238 = vadd.f32 %v2163, %v2237
        %v2239 = vpop.f32.mrf.mxu0
        %v2240 = vadd.f32 %v2163, %v2239
        %2241 = vmatmul.bf16.gmra.mxu0 %v2133
        %v2242 = vpop.f32.mrf.mxu0
        %v2243 = vadd.f32 %v2163, %v2242
        %v2244 = vpop.f32.mrf.mxu0
        %v2245 = vadd.f32 %v2163, %v2244
        %2246 = vmatmul.bf16.gmra.mxu0 %v2134
        %v2247 = vpop.f32.mrf.mxu0
        %v2248 = vadd.f32 %v2163, %v2247
        %v2249 = vpop.f32.mrf.mxu0
        %v2250 = vadd.f32 %v2163, %v2249
        %2251 = vmatmul.bf16.gmra.mxu0 %v2135
        %v2252 = vpop.f32.mrf.mxu0
        %v2253 = vadd.f32 %v2163, %v2252
        %v2254 = vpop.f32.mrf.mxu0
        %v2255 = vadd.f32 %v2163, %v2254
        %2256 = vmatmul.bf16.gmra.mxu0 %v2136
        %v2257 = vpop.f32.mrf.mxu0
        %v2258 = vadd.f32 %v2163, %v2257
        %v2259 = vpop.f32.mrf.mxu0
        %v2260 = vadd.f32 %v2163, %v2259
        %2261 = vmatmul.bf16.gmra.mxu0 %v2137
        %v2262 = vpop.f32.mrf.mxu0
        %v2263 = vadd.f32 %v2163, %v2262
        %v2264 = vpop.f32.mrf.mxu0
        %v2265 = vadd.f32 %v2163, %v2264
        %2266 = vmatmul.bf16.gmra.mxu0 %v2138
        %v2267 = vpop.f32.mrf.mxu0
        %v2268 = vadd.f32 %v2163, %v2267
        %v2269 = vpop.f32.mrf.mxu0
        %v2270 = vadd.f32 %v2163, %v2269
        %2271 = vmatmul.bf16.gmra.mxu0 %v2139
        %v2272 = vpop.f32.mrf.mxu0
        %v2273 = vadd.f32 %v2163, %v2272
        %v2274 = vpop.f32.mrf.mxu0
        %v2275 = vadd.f32 %v2163, %v2274
        %2276 = vmatmul.bf16.gmra.mxu0 %v2140
        %v2277 = vpop.f32.mrf.mxu0
        %v2278 = vadd.f32 %v2163, %v2277
        %v2279 = vpop.f32.mrf.mxu0
        %v2280 = vadd.f32 %v2163, %v2279
        %2281 = vmatmul.bf16.gmra.mxu0 %v2141
        %v2282 = vpop.f32.mrf.mxu0
        %v2283 = vadd.f32 %v2163, %v2282
        %v2284 = vpop.f32.mrf.mxu0
        %v2285 = vadd.f32 %v2163, %v2284
        %2286 = vmatmul.bf16.gmra.mxu0 %v2142
        %v2287 = vpop.f32.mrf.mxu0
        %v2288 = vadd.f32 %v2163, %v2287
        %v2289 = vpop.f32.mrf.mxu0
        %v2290 = vadd.f32 %v2163, %v2289
        %2291 = vmatmul.bf16.gmra.mxu0 %v2143
        %v2292 = vpop.f32.mrf.mxu0
        %v2293 = vadd.f32 %v2163, %v2292
        %v2294 = vpop.f32.mrf.mxu0
        %v2295 = vadd.f32 %v2163, %v2294
        %2296 = vmatmul.bf16.gmra.mxu0 %v2144
        %v2297 = vpop.f32.mrf.mxu0
        %v2298 = vadd.f32 %v2163, %v2297
        %v2299 = vpop.f32.mrf.mxu0
        %v2300 = vadd.f32 %v2163, %v2299
        %2301 = vdwg.mxu0
        %v2302 = vmax.f32 %v2223, 0.0
        %v2303 = vmax.f32 %v2225, 0.0
        %v2304 = vmax.f32 %v2228, 0.0
        %v2305 = vmax.f32 %v2230, 0.0
        %v2306 = vmax.f32 %v2233, 0.0
        %v2307 = vmax.f32 %v2235, 0.0
        %v2308 = vmax.f32 %v2238, 0.0
        %v2309 = vmax.f32 %v2240, 0.0
        %v2310 = vmax.f32 %v2243, 0.0
        %v2311 = vmax.f32 %v2245, 0.0
        %v2312 = vmax.f32 %v2248, 0.0
        %v2313 = vmax.f32 %v2250, 0.0
        %v2314 = vmax.f32 %v2253, 0.0
        %v2315 = vmax.f32 %v2255, 0.0
        %v2316 = vmax.f32 %v2258, 0.0
        %v2317 = vmax.f32 %v2260, 0.0
        %v2318 = vmax.f32 %v2263, 0.0
        %v2319 = vmax.f32 %v2265, 0.0
        %v2320 = vmax.f32 %v2268, 0.0
        %v2321 = vmax.f32 %v2270, 0.0
        %v2322 = vmax.f32 %v2273, 0.0
        %v2323 = vmax.f32 %v2275, 0.0
        %v2324 = vmax.f32 %v2278, 0.0
        %v2325 = vmax.f32 %v2280, 0.0
        %v2326 = vmax.f32 %v2283, 0.0
        %v2327 = vmax.f32 %v2285, 0.0
        %v2328 = vmax.f32 %v2288, 0.0
        %v2329 = vmax.f32 %v2290, 0.0
        %v2330 = vmax.f32 %v2293, 0.0
        %v2331 = vmax.f32 %v2295, 0.0
        %v2332 = vmax.f32 %v2298, 0.0
        %v2333 = vmax.f32 %v2300, 0.0
        %v2334 = vpack.c.bf16 %v2303, %v2302
        %v2335 = vpack.c.bf16 %v2305, %v2304
        %v2336 = vpack.c.bf16 %v2307, %v2306
        %v2337 = vpack.c.bf16 %v2309, %v2308
        %v2338 = vpack.c.bf16 %v2311, %v2310
        %v2339 = vpack.c.bf16 %v2313, %v2312
        %v2340 = vpack.c.bf16 %v2315, %v2314
        %v2341 = vpack.c.bf16 %v2317, %v2316
        %v2342 = vpack.c.bf16 %v2319, %v2318
        %v2343 = vpack.c.bf16 %v2321, %v2320
        %v2344 = vpack.c.bf16 %v2323, %v2322
        %v2345 = vpack.c.bf16 %v2325, %v2324
        %v2346 = vpack.c.bf16 %v2327, %v2326
        %v2347 = vpack.c.bf16 %v2329, %v2328
        %v2348 = vpack.c.bf16 %v2331, %v2330
        %v2349 = vpack.c.bf16 %v2333, %v2332
        %v2350 = vld [vmem:[%s7] sm:$0xf]
        %v2351 = vld [vmem:[%s7 + $0x4] sm:$0xf]
        %v2352 = vld [vmem:[%s7 + $0x8] sm:$0xf]
        %v2353 = vld [vmem:[%s7 + $0xc] sm:$0xf]
        %v2354 = vld [vmem:[%s7 + $0x10] sm:$0xf]
        %v2355 = vld [vmem:[%s7 + $0x14] sm:$0xf]
        %v2356 = vld [vmem:[%s7 + $0x18] sm:$0xf]
        %v2357 = vld [vmem:[%s7 + $0x1c] sm:$0xf]
        %v2358 = vld [vmem:[%s7 + $0x20] sm:$0xf]
        %v2359 = vld [vmem:[%s7 + $0x24] sm:$0xf]
        %v2360 = vld [vmem:[%s7 + $0x28] sm:$0xf]
        %v2361 = vld [vmem:[%s7 + $0x2c] sm:$0xf]
        %v2362 = vld [vmem:[%s7 + $0x30] sm:$0xf]
        %v2363 = vld [vmem:[%s7 + $0x34] sm:$0xf]
        %v2364 = vld [vmem:[%s7 + $0x38] sm:$0xf]
        %v2365 = vld [vmem:[%s7 + $0x3c] sm:$0xf]
        %v2366 = vld [vmem:[%s8] sm:$0x1]
        %v2368 = vperm.slane %v2366, 0
        %v2386 = vunpack.c.l.b16 %v2350
        %v2387 = vunpack.c.l.b16 %v2351
        %v2388 = vunpack.c.l.b16 %v2352
        %v2389 = vunpack.c.l.b16 %v2353
        %v2390 = vunpack.c.l.b16 %v2354
        %v2391 = vunpack.c.l.b16 %v2355
        %v2392 = vunpack.c.l.b16 %v2356
        %v2393 = vunpack.c.l.b16 %v2357
        %v2394 = vunpack.c.l.b16 %v2358
        %v2395 = vunpack.c.l.b16 %v2359
        %v2396 = vunpack.c.l.b16 %v2360
        %v2397 = vunpack.c.l.b16 %v2361
        %v2398 = vunpack.c.l.b16 %v2362
        %v2399 = vunpack.c.l.b16 %v2363
        %v2400 = vunpack.c.l.b16 %v2364
        %v2401 = vunpack.c.l.b16 %v2365
        %v2402 = vpack.c.b16 %v2387, %v2386
        %v2403 = vpack.c.b16 %v2389, %v2388
        %v2404 = vpack.c.b16 %v2391, %v2390
        %v2405 = vpack.c.b16 %v2393, %v2392
        %v2406 = vpack.c.b16 %v2395, %v2394
        %v2407 = vpack.c.b16 %v2397, %v2396
        %v2408 = vpack.c.b16 %v2399, %v2398
        %v2409 = vpack.c.b16 %v2401, %v2400
        %2418 = vmatpush.bf16.msra.mxu0 %v2409
        %2419 = vmatpush.bf16.msra.mxu0 %v2408
        %2420 = vmatpush.bf16.msra.mxu0 %v2407
        %2421 = vmatpush.bf16.msra.mxu0 %v2406
        %2422 = vmatpush.bf16.msra.mxu0 %v2405
        %2423 = vmatpush.bf16.msra.mxu0 %v2404
        %2424 = vmatpush.bf16.msra.mxu0 %v2403
        %2425 = vmatpush.bf16.msra.mxu0 %v2402
        %2426 = vmatmul.bf16.gmra.mxu0 %v2334
        %v2427 = vpop.f32.mrf.mxu0
        %v2428 = vadd.f32 %v2368, %v2427
        %v2429 = vpop.f32.mrf.mxu0
        %v2430 = vadd.f32 %v2368, %v2429
        %2431 = vmatmul.bf16.gmra.mxu0 %v2335
        %v2432 = vpop.f32.mrf.mxu0
        %v2433 = vadd.f32 %v2368, %v2432
        %v2434 = vpop.f32.mrf.mxu0
        %v2435 = vadd.f32 %v2368, %v2434
        %2436 = vmatmul.bf16.gmra.mxu0 %v2336
        %v2437 = vpop.f32.mrf.mxu0
        %v2438 = vadd.f32 %v2368, %v2437
        %v2439 = vpop.f32.mrf.mxu0
        %v2440 = vadd.f32 %v2368, %v2439
        %2441 = vmatmul.bf16.gmra.mxu0 %v2337
        %v2442 = vpop.f32.mrf.mxu0
        %v2443 = vadd.f32 %v2368, %v2442
        %v2444 = vpop.f32.mrf.mxu0
        %v2445 = vadd.f32 %v2368, %v2444
        %2446 = vmatmul.bf16.gmra.mxu0 %v2338
        %v2447 = vpop.f32.mrf.mxu0
        %v2448 = vadd.f32 %v2368, %v2447
        %v2449 = vpop.f32.mrf.mxu0
        %v2450 = vadd.f32 %v2368, %v2449
        %2451 = vmatmul.bf16.gmra.mxu0 %v2339
        %v2452 = vpop.f32.mrf.mxu0
        %v2453 = vadd.f32 %v2368, %v2452
        %v2454 = vpop.f32.mrf.mxu0
        %v2455 = vadd.f32 %v2368, %v2454
        %2456 = vmatmul.bf16.gmra.mxu0 %v2340
        %v2457 = vpop.f32.mrf.mxu0
        %v2458 = vadd.f32 %v2368, %v2457
        %v2459 = vpop.f32.mrf.mxu0
        %v2460 = vadd.f32 %v2368, %v2459
        %2461 = vmatmul.bf16.gmra.mxu0 %v2341
        %v2462 = vpop.f32.mrf.mxu0
        %v2463 = vadd.f32 %v2368, %v2462
        %v2464 = vpop.f32.mrf.mxu0
        %v2465 = vadd.f32 %v2368, %v2464
        %2466 = vmatmul.bf16.gmra.mxu0 %v2342
        %v2467 = vpop.f32.mrf.mxu0
        %v2468 = vadd.f32 %v2368, %v2467
        %v2469 = vpop.f32.mrf.mxu0
        %v2470 = vadd.f32 %v2368, %v2469
        %2471 = vmatmul.bf16.gmra.mxu0 %v2343
        %v2472 = vpop.f32.mrf.mxu0
        %v2473 = vadd.f32 %v2368, %v2472
        %v2474 = vpop.f32.mrf.mxu0
        %v2475 = vadd.f32 %v2368, %v2474
        %2476 = vmatmul.bf16.gmra.mxu0 %v2344
        %v2477 = vpop.f32.mrf.mxu0
        %v2478 = vadd.f32 %v2368, %v2477
        %v2479 = vpop.f32.mrf.mxu0
        %v2480 = vadd.f32 %v2368, %v2479
        %2481 = vmatmul.bf16.gmra.mxu0 %v2345
        %v2482 = vpop.f32.mrf.mxu0
        %v2483 = vadd.f32 %v2368, %v2482
        %v2484 = vpop.f32.mrf.mxu0
        %v2485 = vadd.f32 %v2368, %v2484
        %2486 = vmatmul.bf16.gmra.mxu0 %v2346
        %v2487 = vpop.f32.mrf.mxu0
        %v2488 = vadd.f32 %v2368, %v2487
        %v2489 = vpop.f32.mrf.mxu0
        %v2490 = vadd.f32 %v2368, %v2489
        %2491 = vmatmul.bf16.gmra.mxu0 %v2347
        %v2492 = vpop.f32.mrf.mxu0
        %v2493 = vadd.f32 %v2368, %v2492
        %v2494 = vpop.f32.mrf.mxu0
        %v2495 = vadd.f32 %v2368, %v2494
        %2496 = vmatmul.bf16.gmra.mxu0 %v2348
        %v2497 = vpop.f32.mrf.mxu0
        %v2498 = vadd.f32 %v2368, %v2497
        %v2499 = vpop.f32.mrf.mxu0
        %v2500 = vadd.f32 %v2368, %v2499
        %2501 = vmatmul.bf16.gmra.mxu0 %v2349
        %v2502 = vpop.f32.mrf.mxu0
        %v2503 = vadd.f32 %v2368, %v2502
        %v2504 = vpop.f32.mrf.mxu0
        %v2505 = vadd.f32 %v2368, %v2504
        %2506 = vdwg.mxu0
        %vm2507 = vcmask 261120
        %v2508 = vsel %vm2507, %v2428, -inf
        %v2509 = vsel %vm2507, %v2468, -inf
        %v2510 = vmax.f32 %v2508, %v2509
        %v2511 = vsel %vm2507, %v2430, -inf
        %v2512 = vsel %vm2507, %v2470, -inf
        %v2513 = vmax.f32 %v2511, %v2512
        %v2514 = vsel %vm2507, %v2433, -inf
        %v2515 = vsel %vm2507, %v2473, -inf
        %v2516 = vmax.f32 %v2514, %v2515
        %v2517 = vsel %vm2507, %v2435, -inf
        %v2518 = vsel %vm2507, %v2475, -inf
        %v2519 = vmax.f32 %v2517, %v2518
        %v2520 = vsel %vm2507, %v2438, -inf
        %v2521 = vsel %vm2507, %v2478, -inf
        %v2522 = vmax.f32 %v2520, %v2521
        %v2523 = vsel %vm2507, %v2440, -inf
        %v2524 = vsel %vm2507, %v2480, -inf
        %v2525 = vmax.f32 %v2523, %v2524
        %v2526 = vsel %vm2507, %v2443, -inf
        %v2527 = vsel %vm2507, %v2483, -inf
        %v2528 = vmax.f32 %v2526, %v2527
        %v2529 = vsel %vm2507, %v2445, -inf
        %v2530 = vsel %vm2507, %v2485, -inf
        %v2531 = vmax.f32 %v2529, %v2530
        %v2532 = vsel %vm2507, %v2448, -inf
        %v2533 = vsel %vm2507, %v2488, -inf
        %v2534 = vmax.f32 %v2532, %v2533
        %v2535 = vsel %vm2507, %v2450, -inf
        %v2536 = vsel %vm2507, %v2490, -inf
        %v2537 = vmax.f32 %v2535, %v2536
        %v2538 = vsel %vm2507, %v2453, -inf
        %v2539 = vsel %vm2507, %v2493, -inf
        %v2540 = vmax.f32 %v2538, %v2539
        %v2541 = vsel %vm2507, %v2455, -inf
        %v2542 = vsel %vm2507, %v2495, -inf
        %v2543 = vmax.f32 %v2541, %v2542
        %v2544 = vsel %vm2507, %v2458, -inf
        %v2545 = vsel %vm2507, %v2498, -inf
        %v2546 = vmax.f32 %v2544, %v2545
        %v2547 = vsel %vm2507, %v2460, -inf
        %v2548 = vsel %vm2507, %v2500, -inf
        %v2549 = vmax.f32 %v2547, %v2548
        %v2550 = vsel %vm2507, %v2463, -inf
        %v2551 = vsel %vm2507, %v2503, -inf
        %v2552 = vmax.f32 %v2550, %v2551
        %v2553 = vsel %vm2507, %v2465, -inf
        %v2554 = vsel %vm2507, %v2505, -inf
        %v2555 = vmax.f32 %v2553, %v2554
        %v2556 = vsub.f32 %v2428, %v2510
        %v2557 = vsub.f32 %v2430, %v2513
        %v2558 = vsub.f32 %v2433, %v2516
        %v2559 = vsub.f32 %v2435, %v2519
        %v2560 = vsub.f32 %v2438, %v2522
        %v2561 = vsub.f32 %v2440, %v2525
        %v2562 = vsub.f32 %v2443, %v2528
        %v2563 = vsub.f32 %v2445, %v2531
        %v2564 = vsub.f32 %v2448, %v2534
        %v2565 = vsub.f32 %v2450, %v2537
        %v2566 = vsub.f32 %v2453, %v2540
        %v2567 = vsub.f32 %v2455, %v2543
        %v2568 = vsub.f32 %v2458, %v2546
        %v2569 = vsub.f32 %v2460, %v2549
        %v2570 = vsub.f32 %v2463, %v2552
        %v2571 = vsub.f32 %v2465, %v2555
        %v2572 = vsub.f32 %v2468, %v2510
        %v2573 = vsub.f32 %v2470, %v2513
        %v2574 = vsub.f32 %v2473, %v2516
        %v2575 = vsub.f32 %v2475, %v2519
        %v2576 = vsub.f32 %v2478, %v2522
        %v2577 = vsub.f32 %v2480, %v2525
        %v2578 = vsub.f32 %v2483, %v2528
        %v2579 = vsub.f32 %v2485, %v2531
        %v2580 = vsub.f32 %v2488, %v2534
        %v2581 = vsub.f32 %v2490, %v2537
        %v2582 = vsub.f32 %v2493, %v2540
        %v2583 = vsub.f32 %v2495, %v2543
        %v2584 = vsub.f32 %v2498, %v2546
        %v2585 = vsub.f32 %v2500, %v2549
        %v2586 = vsub.f32 %v2503, %v2552
        %v2587 = vsub.f32 %v2505, %v2555
        %v2588 = vmul.f32 %v2556, 1.442695
        %v2589 = vpow.pop %v2588
        %v2590 = vmul.f32 %v2557, 1.442695
        %v2591 = vpow.pop %v2590
        %v2592 = vmul.f32 %v2558, 1.442695
        %v2593 = vpow.pop %v2592
        %v2594 = vmul.f32 %v2559, 1.442695
        %v2595 = vpow.pop %v2594
        %v2596 = vmul.f32 %v2560, 1.442695
        %v2597 = vpow.pop %v2596
        %v2598 = vmul.f32 %v2561, 1.442695
        %v2599 = vpow.pop %v2598
        %v2600 = vmul.f32 %v2562, 1.442695
        %v2601 = vpow.pop %v2600
        %v2602 = vmul.f32 %v2563, 1.442695
        %v2603 = vpow.pop %v2602
        %v2604 = vmul.f32 %v2564, 1.442695
        %v2605 = vpow.pop %v2604
        %v2606 = vmul.f32 %v2565, 1.442695
        %v2607 = vpow.pop %v2606
        %v2608 = vmul.f32 %v2566, 1.442695
        %v2609 = vpow.pop %v2608
        %v2610 = vmul.f32 %v2567, 1.442695
        %v2611 = vpow.pop %v2610
        %v2612 = vmul.f32 %v2568, 1.442695
        %v2613 = vpow.pop %v2612
        %v2614 = vmul.f32 %v2569, 1.442695
        %v2615 = vpow.pop %v2614
        %v2616 = vmul.f32 %v2570, 1.442695
        %v2617 = vpow.pop %v2616
        %v2618 = vmul.f32 %v2571, 1.442695
        %v2619 = vpow.pop %v2618
        %v2620 = vmul.f32 %v2572, 1.442695
        %v2621 = vpow.pop %v2620
        %v2622 = vmul.f32 %v2573, 1.442695
        %v2623 = vpow.pop %v2622
        %v2624 = vmul.f32 %v2574, 1.442695
        %v2625 = vpow.pop %v2624
        %v2626 = vmul.f32 %v2575, 1.442695
        %v2627 = vpow.pop %v2626
        %v2628 = vmul.f32 %v2576, 1.442695
        %v2629 = vpow.pop %v2628
        %v2630 = vmul.f32 %v2577, 1.442695
        %v2631 = vpow.pop %v2630
        %v2632 = vmul.f32 %v2578, 1.442695
        %v2633 = vpow.pop %v2632
        %v2634 = vmul.f32 %v2579, 1.442695
        %v2635 = vpow.pop %v2634
        %v2636 = vmul.f32 %v2580, 1.442695
        %v2637 = vpow.pop %v2636
        %v2638 = vmul.f32 %v2581, 1.442695
        %v2639 = vpow.pop %v2638
        %v2640 = vmul.f32 %v2582, 1.442695
        %v2641 = vpow.pop %v2640
        %v2642 = vmul.f32 %v2583, 1.442695
        %v2643 = vpow.pop %v2642
        %v2644 = vmul.f32 %v2584, 1.442695
        %v2645 = vpow.pop %v2644
        %v2646 = vmul.f32 %v2585, 1.442695
        %v2647 = vpow.pop %v2646
        %v2648 = vmul.f32 %v2586, 1.442695
        %v2649 = vpow.pop %v2648
        %v2650 = vmul.f32 %v2587, 1.442695
        %v2651 = vpow.pop %v2650
        %v2652 = vsel %vm2507, %v2589, 0.0
        %v2653 = vsel %vm2507, %v2621, 0.0
        %v2654 = vadd.f32 %v2652, %v2653
        %v2655 = vsel %vm2507, %v2591, 0.0
        %v2656 = vsel %vm2507, %v2623, 0.0
        %v2657 = vadd.f32 %v2655, %v2656
        %v2658 = vsel %vm2507, %v2593, 0.0
        %v2659 = vsel %vm2507, %v2625, 0.0
        %v2660 = vadd.f32 %v2658, %v2659
        %v2661 = vsel %vm2507, %v2595, 0.0
        %v2662 = vsel %vm2507, %v2627, 0.0
        %v2663 = vadd.f32 %v2661, %v2662
        %v2664 = vsel %vm2507, %v2597, 0.0
        %v2665 = vsel %vm2507, %v2629, 0.0
        %v2666 = vadd.f32 %v2664, %v2665
        %v2667 = vsel %vm2507, %v2599, 0.0
        %v2668 = vsel %vm2507, %v2631, 0.0
        %v2669 = vadd.f32 %v2667, %v2668
        %v2670 = vsel %vm2507, %v2601, 0.0
        %v2671 = vsel %vm2507, %v2633, 0.0
        %v2672 = vadd.f32 %v2670, %v2671
        %v2673 = vsel %vm2507, %v2603, 0.0
        %v2674 = vsel %vm2507, %v2635, 0.0
        %v2675 = vadd.f32 %v2673, %v2674
        %v2676 = vsel %vm2507, %v2605, 0.0
        %v2677 = vsel %vm2507, %v2637, 0.0
        %v2678 = vadd.f32 %v2676, %v2677
        %v2679 = vsel %vm2507, %v2607, 0.0
        %v2680 = vsel %vm2507, %v2639, 0.0
        %v2681 = vadd.f32 %v2679, %v2680
        %v2682 = vsel %vm2507, %v2609, 0.0
        %v2683 = vsel %vm2507, %v2641, 0.0
        %v2684 = vadd.f32 %v2682, %v2683
        %v2685 = vsel %vm2507, %v2611, 0.0
        %v2686 = vsel %vm2507, %v2643, 0.0
        %v2687 = vadd.f32 %v2685, %v2686
        %v2688 = vsel %vm2507, %v2613, 0.0
        %v2689 = vsel %vm2507, %v2645, 0.0
        %v2690 = vadd.f32 %v2688, %v2689
        %v2691 = vsel %vm2507, %v2615, 0.0
        %v2692 = vsel %vm2507, %v2647, 0.0
        %v2693 = vadd.f32 %v2691, %v2692
        %v2694 = vsel %vm2507, %v2617, 0.0
        %v2695 = vsel %vm2507, %v2649, 0.0
        %v2696 = vadd.f32 %v2694, %v2695
        %v2697 = vsel %vm2507, %v2619, 0.0
        %v2698 = vsel %vm2507, %v2651, 0.0
        %v2699 = vadd.f32 %v2697, %v2698
        %v2700 = vrcp.pop %v2654
        %v2701 = vrcp.pop %v2657
        %v2702 = vrcp.pop %v2660
        %v2703 = vrcp.pop %v2663
        %v2704 = vrcp.pop %v2666
        %v2705 = vrcp.pop %v2669
        %v2706 = vrcp.pop %v2672
        %v2707 = vrcp.pop %v2675
        %v2708 = vrcp.pop %v2678
        %v2709 = vrcp.pop %v2681
        %v2710 = vrcp.pop %v2684
        %v2711 = vrcp.pop %v2687
        %v2712 = vrcp.pop %v2690
        %v2713 = vrcp.pop %v2693
        %v2714 = vrcp.pop %v2696
        %v2715 = vrcp.pop %v2699
        %v2716 = vmul.f32 %v2654, %v2700
        %v2717 = vmul.f32 %v2657, %v2701
        %v2718 = vmul.f32 %v2660, %v2702
        %v2719 = vmul.f32 %v2663, %v2703
        %v2720 = vmul.f32 %v2666, %v2704
        %v2721 = vmul.f32 %v2669, %v2705
        %v2722 = vmul.f32 %v2672, %v2706
        %v2723 = vmul.f32 %v2675, %v2707
        %v2724 = vmul.f32 %v2678, %v2708
        %v2725 = vmul.f32 %v2681, %v2709
        %v2726 = vmul.f32 %v2684, %v2710
        %v2727 = vmul.f32 %v2687, %v2711
        %v2728 = vmul.f32 %v2690, %v2712
        %v2729 = vmul.f32 %v2693, %v2713
        %v2730 = vmul.f32 %v2696, %v2714
        %v2731 = vmul.f32 %v2699, %v2715
        %v2732 = vsub.f32 2.0, %v2716
        %v2733 = vsub.f32 2.0, %v2717
        %v2734 = vsub.f32 2.0, %v2718
        %v2735 = vsub.f32 2.0, %v2719
        %v2736 = vsub.f32 2.0, %v2720
        %v2737 = vsub.f32 2.0, %v2721
        %v2738 = vsub.f32 2.0, %v2722
        %v2739 = vsub.f32 2.0, %v2723
        %v2740 = vsub.f32 2.0, %v2724
        %v2741 = vsub.f32 2.0, %v2725
        %v2742 = vsub.f32 2.0, %v2726
        %v2743 = vsub.f32 2.0, %v2727
        %v2744 = vsub.f32 2.0, %v2728
        %v2745 = vsub.f32 2.0, %v2729
        %v2746 = vsub.f32 2.0, %v2730
        %v2747 = vsub.f32 2.0, %v2731
        %v2748 = vmul.f32 %v2700, %v2732
        %v2749 = vmul.f32 %v2701, %v2733
        %v2750 = vmul.f32 %v2702, %v2734
        %v2751 = vmul.f32 %v2703, %v2735
        %v2752 = vmul.f32 %v2704, %v2736
        %v2753 = vmul.f32 %v2705, %v2737
        %v2754 = vmul.f32 %v2706, %v2738
        %v2755 = vmul.f32 %v2707, %v2739
        %v2756 = vmul.f32 %v2708, %v2740
        %v2757 = vmul.f32 %v2709, %v2741
        %v2758 = vmul.f32 %v2710, %v2742
        %v2759 = vmul.f32 %v2711, %v2743
        %v2760 = vmul.f32 %v2712, %v2744
        %v2761 = vmul.f32 %v2713, %v2745
        %v2762 = vmul.f32 %v2714, %v2746
        %v2763 = vmul.f32 %v2715, %v2747
        %v2764 = vmul.f32 %v2589, %v2748
        %v2765 = vmul.f32 %v2591, %v2749
        %v2766 = vmul.f32 %v2593, %v2750
        %v2767 = vmul.f32 %v2595, %v2751
        %v2768 = vmul.f32 %v2597, %v2752
        %v2769 = vmul.f32 %v2599, %v2753
        %v2770 = vmul.f32 %v2601, %v2754
        %v2771 = vmul.f32 %v2603, %v2755
        %v2772 = vmul.f32 %v2605, %v2756
        %v2773 = vmul.f32 %v2607, %v2757
        %v2774 = vmul.f32 %v2609, %v2758
        %v2775 = vmul.f32 %v2611, %v2759
        %v2776 = vmul.f32 %v2613, %v2760
        %v2777 = vmul.f32 %v2615, %v2761
        %v2778 = vmul.f32 %v2617, %v2762
        %v2779 = vmul.f32 %v2619, %v2763
        %v2780 = vmul.f32 %v2621, %v2748
        %v2781 = vmul.f32 %v2623, %v2749
        %v2782 = vmul.f32 %v2625, %v2750
        %v2783 = vmul.f32 %v2627, %v2751
        %v2784 = vmul.f32 %v2629, %v2752
        %v2785 = vmul.f32 %v2631, %v2753
        %v2786 = vmul.f32 %v2633, %v2754
        %v2787 = vmul.f32 %v2635, %v2755
        %v2788 = vmul.f32 %v2637, %v2756
        %v2789 = vmul.f32 %v2639, %v2757
        %v2790 = vmul.f32 %v2641, %v2758
        %v2791 = vmul.f32 %v2643, %v2759
        %v2792 = vmul.f32 %v2645, %v2760
        %v2793 = vmul.f32 %v2647, %v2761
        %v2794 = vmul.f32 %v2649, %v2762
        %v2795 = vmul.f32 %v2651, %v2763
        %v2796 = vlaneseq
        %v2797 = vand.u32 %v2796, 127
        %vm2798 = vcmp.eq.s32.totalorder %v2797, 24
        %v2799 = vsel %vm2798, %v2764, %v2428
        %v2800 = vsel %vm2798, %v2765, %v2430
        %v2801 = vsel %vm2798, %v2766, %v2433
        %v2802 = vsel %vm2798, %v2767, %v2435
        %v2803 = vsel %vm2798, %v2768, %v2438
        %v2804 = vsel %vm2798, %v2769, %v2440
        %v2805 = vsel %vm2798, %v2770, %v2443
        %v2806 = vsel %vm2798, %v2771, %v2445
        %v2807 = vsel %vm2798, %v2772, %v2448
        %v2808 = vsel %vm2798, %v2773, %v2450
        %v2809 = vsel %vm2798, %v2774, %v2453
        %v2810 = vsel %vm2798, %v2775, %v2455
        %v2811 = vsel %vm2798, %v2776, %v2458
        %v2812 = vsel %vm2798, %v2777, %v2460
        %v2813 = vsel %vm2798, %v2778, %v2463
        %v2814 = vsel %vm2798, %v2779, %v2465
        %v2815 = vsel %vm2798, %v2780, %v2468
        %v2816 = vsel %vm2798, %v2781, %v2470
        %v2817 = vsel %vm2798, %v2782, %v2473
        %v2818 = vsel %vm2798, %v2783, %v2475
        %v2819 = vsel %vm2798, %v2784, %v2478
        %v2820 = vsel %vm2798, %v2785, %v2480
        %v2821 = vsel %vm2798, %v2786, %v2483
        %v2822 = vsel %vm2798, %v2787, %v2485
        %v2823 = vsel %vm2798, %v2788, %v2488
        %v2824 = vsel %vm2798, %v2789, %v2490
        %v2825 = vsel %vm2798, %v2790, %v2493
        %v2826 = vsel %vm2798, %v2791, %v2495
        %v2827 = vsel %vm2798, %v2792, %v2498
        %v2828 = vsel %vm2798, %v2793, %v2500
        %v2829 = vsel %vm2798, %v2794, %v2503
        %v2830 = vsel %vm2798, %v2795, %v2505
        %2831 = vst.msk [vmem:[%s524] sm:$0xff] %vm2507, %v2799
        %2832 = vst.msk [vmem:[%s524 + $0x8] sm:$0xff] %vm2507, %v2800
        %2833 = vst.msk [vmem:[%s524 + $0x10] sm:$0xff] %vm2507, %v2801
        %2834 = vst.msk [vmem:[%s524 + $0x18] sm:$0xff] %vm2507, %v2802
        %2835 = vst.msk [vmem:[%s524 + $0x20] sm:$0xff] %vm2507, %v2803
        %2836 = vst.msk [vmem:[%s524 + $0x28] sm:$0xff] %vm2507, %v2804
        %2837 = vst.msk [vmem:[%s524 + $0x30] sm:$0xff] %vm2507, %v2805
        %2838 = vst.msk [vmem:[%s524 + $0x38] sm:$0xff] %vm2507, %v2806
        %2839 = vst.msk [vmem:[%s524 + $0x40] sm:$0xff] %vm2507, %v2807
        %2840 = vst.msk [vmem:[%s524 + $0x48] sm:$0xff] %vm2507, %v2808
        %2841 = vst.msk [vmem:[%s524 + $0x50] sm:$0xff] %vm2507, %v2809
        %2842 = vst.msk [vmem:[%s524 + $0x58] sm:$0xff] %vm2507, %v2810
        %2843 = vst.msk [vmem:[%s524 + $0x60] sm:$0xff] %vm2507, %v2811
        %2844 = vst.msk [vmem:[%s524 + $0x68] sm:$0xff] %vm2507, %v2812
        %2845 = vst.msk [vmem:[%s524 + $0x70] sm:$0xff] %vm2507, %v2813
        %2846 = vst.msk [vmem:[%s524 + $0x78] sm:$0xff] %vm2507, %v2814
        %2847 = vst.msk [vmem:[%s524 + $0x80] sm:$0xff] %vm2507, %v2815
        %2848 = vst.msk [vmem:[%s524 + $0x88] sm:$0xff] %vm2507, %v2816
        %2849 = vst.msk [vmem:[%s524 + $0x90] sm:$0xff] %vm2507, %v2817
        %2850 = vst.msk [vmem:[%s524 + $0x98] sm:$0xff] %vm2507, %v2818
        %2851 = vst.msk [vmem:[%s524 + $0xa0] sm:$0xff] %vm2507, %v2819
        %2852 = vst.msk [vmem:[%s524 + $0xa8] sm:$0xff] %vm2507, %v2820
        %2853 = vst.msk [vmem:[%s524 + $0xb0] sm:$0xff] %vm2507, %v2821
        %2854 = vst.msk [vmem:[%s524 + $0xb8] sm:$0xff] %vm2507, %v2822
        %2855 = vst.msk [vmem:[%s524 + $0xc0] sm:$0xff] %vm2507, %v2823
        %2856 = vst.msk [vmem:[%s524 + $0xc8] sm:$0xff] %vm2507, %v2824
        %2857 = vst.msk [vmem:[%s524 + $0xd0] sm:$0xff] %vm2507, %v2825
        %2858 = vst.msk [vmem:[%s524 + $0xd8] sm:$0xff] %vm2507, %v2826
        %2859 = vst.msk [vmem:[%s524 + $0xe0] sm:$0xff] %vm2507, %v2827
        %2860 = vst.msk [vmem:[%s524 + $0xe8] sm:$0xff] %vm2507, %v2828
        %2861 = vst.msk [vmem:[%s524 + $0xf0] sm:$0xff] %vm2507, %v2829
        %2862 = vst.msk [vmem:[%s524 + $0xf8] sm:$0xff] %vm2507, %v2830
        %s2863 = sand.u32 %s224, 1
        %s2864 = sand.u32 %s224, 1
        %s2865 = smul.addr %s2864, 256
        %s2866 = scalar_lea.vmem [#allocation7], %s2865
        // Predicated region
        $region106: #{_device_forward.1} parent=92 // pred_check
          %p2867 = pneg %p234
        $region107: #{_device_forward.1} parent=92 // pred_check_branch
          %2869 = sbr.rel (%p2867) target = $region109
        $region108: #{_device_forward.1} parent=92 // pred_region
          %s2870 = smul.u32 16, %s22
          %s2871 = smul.addr %s2870, 8
          %s2872 = scalar_lea.vmem %s9, %s2871
          // Predicated region
          $region110: #{_device_forward.1} parent=108 // pred_check
            _
          $region111: #{_device_forward.1} parent=108 // pred_check_branch
            %2874 = sbr.rel (0) target = $region113
          $region112: #{_device_forward.1} parent=108 // pred_region
            // Predicated region
            $region114: #{_device_forward.1} parent=112 // pred_check
              _
            $region115: #{_device_forward.1} parent=112 // pred_check_branch
              %2876 = sbr.rel (0) target = $region117
            $region116: #{_device_forward.1} parent=112 // pred_region
              // Predicated region
              $region129: #{_device_forward.1} parent=116 // pred_check
                _
              $region130: #{_device_forward.1} parent=116 // pred_check_branch
                %2954 = sbr.rel (0) target = $region132
              $region131: #{_device_forward.1} parent=116 // pred_region
                loop: start=0, step=1, limit=1
                $region133: #{_device_forward.1} parent=131 // loop_pre_header
                  _
                $region134: #{_device_forward.1} parent=131 // loop_header
                  %s2956 = sphi 0, %s2960
                  %p2957 = scmp.ge.s32.totalorder %s2956, 1
                  %s2961 = sphi %s2866, %s2866
                  %s2962 = sphi %s2872, %s2872
                $region135: #{_device_forward.1} parent=131 // loop_header_branch
                  %2959 = sbr.rel (%p2957) target = $region139
                $region136: #{_device_forward.1} parent=131 // loop_body
                  %v2963 = vld [vmem:[%s2961] sm:$0xff]
                  %2964 = vst [vmem:[%s2962] sm:$0xff] %v2963
                  %v2965 = vld [vmem:[%s2961 + $0x8] sm:$0xff]
                  %2966 = vst [vmem:[%s2962 + $0x8] sm:$0xff] %v2965
                  %v2967 = vld [vmem:[%s2961 + $0x10] sm:$0xff]
                  %2968 = vst [vmem:[%s2962 + $0x10] sm:$0xff] %v2967
                  %v2969 = vld [vmem:[%s2961 + $0x18] sm:$0xff]
                  %2970 = vst [vmem:[%s2962 + $0x18] sm:$0xff] %v2969
                  %v2971 = vld [vmem:[%s2961 + $0x20] sm:$0xff]
                  %2972 = vst [vmem:[%s2962 + $0x20] sm:$0xff] %v2971
                  %v2973 = vld [vmem:[%s2961 + $0x28] sm:$0xff]
                  %2974 = vst [vmem:[%s2962 + $0x28] sm:$0xff] %v2973
                  %v2975 = vld [vmem:[%s2961 + $0x30] sm:$0xff]
                  %2976 = vst [vmem:[%s2962 + $0x30] sm:$0xff] %v2975
                  %v2977 = vld [vmem:[%s2961 + $0x38] sm:$0xff]
                  %2978 = vst [vmem:[%s2962 + $0x38] sm:$0xff] %v2977
                  %v2979 = vld [vmem:[%s2961 + $0x40] sm:$0xff]
                  %2980 = vst [vmem:[%s2962 + $0x40] sm:$0xff] %v2979
                  %v2981 = vld [vmem:[%s2961 + $0x48] sm:$0xff]
                  %2982 = vst [vmem:[%s2962 + $0x48] sm:$0xff] %v2981
                  %v2983 = vld [vmem:[%s2961 + $0x50] sm:$0xff]
                  %2984 = vst [vmem:[%s2962 + $0x50] sm:$0xff] %v2983
                  %v2985 = vld [vmem:[%s2961 + $0x58] sm:$0xff]
                  %2986 = vst [vmem:[%s2962 + $0x58] sm:$0xff] %v2985
                  %v2987 = vld [vmem:[%s2961 + $0x60] sm:$0xff]
                  %2988 = vst [vmem:[%s2962 + $0x60] sm:$0xff] %v2987
                  %v2989 = vld [vmem:[%s2961 + $0x68] sm:$0xff]
                  %2990 = vst [vmem:[%s2962 + $0x68] sm:$0xff] %v2989
                  %v2991 = vld [vmem:[%s2961 + $0x70] sm:$0xff]
                  %2992 = vst [vmem:[%s2962 + $0x70] sm:$0xff] %v2991
                  %v2993 = vld [vmem:[%s2961 + $0x78] sm:$0xff]
                  %2994 = vst [vmem:[%s2962 + $0x78] sm:$0xff] %v2993
                  %v2995 = vld [vmem:[%s2961 + $0x80] sm:$0xff]
                  %2996 = vst [vmem:[%s2962 + $0x100] sm:$0xff] %v2995
                  %v2997 = vld [vmem:[%s2961 + $0x88] sm:$0xff]
                  %2998 = vst [vmem:[%s2962 + $0x108] sm:$0xff] %v2997
                  %v2999 = vld [vmem:[%s2961 + $0x90] sm:$0xff]
                  %3000 = vst [vmem:[%s2962 + $0x110] sm:$0xff] %v2999
                  %v3001 = vld [vmem:[%s2961 + $0x98] sm:$0xff]
                  %3002 = vst [vmem:[%s2962 + $0x118] sm:$0xff] %v3001
                  %v3003 = vld [vmem:[%s2961 + $0xa0] sm:$0xff]
                  %3004 = vst [vmem:[%s2962 + $0x120] sm:$0xff] %v3003
                  %v3005 = vld [vmem:[%s2961 + $0xa8] sm:$0xff]
                  %3006 = vst [vmem:[%s2962 + $0x128] sm:$0xff] %v3005
                  %v3007 = vld [vmem:[%s2961 + $0xb0] sm:$0xff]
                  %3008 = vst [vmem:[%s2962 + $0x130] sm:$0xff] %v3007
                  %v3009 = vld [vmem:[%s2961 + $0xb8] sm:$0xff]
                  %3010 = vst [vmem:[%s2962 + $0x138] sm:$0xff] %v3009
                  %v3011 = vld [vmem:[%s2961 + $0xc0] sm:$0xff]
                  %3012 = vst [vmem:[%s2962 + $0x140] sm:$0xff] %v3011
                  %v3013 = vld [vmem:[%s2961 + $0xc8] sm:$0xff]
                  %3014 = vst [vmem:[%s2962 + $0x148] sm:$0xff] %v3013
                  %v3015 = vld [vmem:[%s2961 + $0xd0] sm:$0xff]
                  %3016 = vst [vmem:[%s2962 + $0x150] sm:$0xff] %v3015
                  %v3017 = vld [vmem:[%s2961 + $0xd8] sm:$0xff]
                  %3018 = vst [vmem:[%s2962 + $0x158] sm:$0xff] %v3017
                  %v3019 = vld [vmem:[%s2961 + $0xe0] sm:$0xff]
                  %3020 = vst [vmem:[%s2962 + $0x160] sm:$0xff] %v3019
                  %v3021 = vld [vmem:[%s2961 + $0xe8] sm:$0xff]
                  %3022 = vst [vmem:[%s2962 + $0x168] sm:$0xff] %v3021
                  %v3023 = vld [vmem:[%s2961 + $0xf0] sm:$0xff]
                  %3024 = vst [vmem:[%s2962 + $0x170] sm:$0xff] %v3023
                  %v3025 = vld [vmem:[%s2961 + $0xf8] sm:$0xff]
                  %3026 = vst [vmem:[%s2962 + $0x178] sm:$0xff] %v3025
                $region137: #{_device_forward.1} parent=131 // loop_footer
                  %s2960 = sadd.s32 1, %s2956
                $region138: #{_device_forward.1} parent=131 // loop_footer_branch
                  %2955 = sbr.rel target = $region134
                $region139: #{_device_forward.1} parent=131 // loop_exit
                  _
              $region132: #{_device_forward.1} parent=116 // pred_fallthru
                _
              // Predicated region
              $region140: #{_device_forward.1} parent=116 // pred_check
                _
              $region141: #{_device_forward.1} parent=116 // pred_check_branch
                %3028 = sbr.rel target = $region143
              $region142: #{_device_forward.1} parent=116 // pred_region
                _
              $region143: #{_device_forward.1} parent=116 // pred_fallthru
                _
            $region117: #{_device_forward.1} parent=112 // pred_fallthru
              _
            // Predicated region
            $region118: #{_device_forward.1} parent=112 // pred_check
              _
            $region119: #{_device_forward.1} parent=112 // pred_check_branch
              %2878 = sbr.rel target = $region121
            $region120: #{_device_forward.1} parent=112 // pred_region
              %s2880 = ssub.s32 256, 1
              loop: start=0, step=1, limit=1
              $region122: #{_device_forward.1} parent=120 // loop_pre_header
                _
              $region123: #{_device_forward.1} parent=120 // loop_header
                %s2882 = sphi 0, %s2886
                %p2883 = scmp.ge.s32.totalorder %s2882, 1
                %s2887 = sphi %s2866, %s2866
                %s2888 = sphi %s2872, %s2872
              $region124: #{_device_forward.1} parent=120 // loop_header_branch
                %2885 = sbr.rel (%p2883) target = $region128
              $region125: #{_device_forward.1} parent=120 // loop_body
                %v2889 = vld [vmem:[%s2887] sm:%s2880]
                %2890 = vst [vmem:[%s2888] sm:%s2880] %v2889
                %v2891 = vld [vmem:[%s2887 + $0x8] sm:%s2880]
                %2892 = vst [vmem:[%s2888 + $0x8] sm:%s2880] %v2891
                %v2893 = vld [vmem:[%s2887 + $0x10] sm:%s2880]
                %2894 = vst [vmem:[%s2888 + $0x10] sm:%s2880] %v2893
                %v2895 = vld [vmem:[%s2887 + $0x18] sm:%s2880]
                %2896 = vst [vmem:[%s2888 + $0x18] sm:%s2880] %v2895
                %v2897 = vld [vmem:[%s2887 + $0x20] sm:%s2880]
                %2898 = vst [vmem:[%s2888 + $0x20] sm:%s2880] %v2897
                %v2899 = vld [vmem:[%s2887 + $0x28] sm:%s2880]
                %2900 = vst [vmem:[%s2888 + $0x28] sm:%s2880] %v2899
                %v2901 = vld [vmem:[%s2887 + $0x30] sm:%s2880]
                %2902 = vst [vmem:[%s2888 + $0x30] sm:%s2880] %v2901
                %v2903 = vld [vmem:[%s2887 + $0x38] sm:%s2880]
                %2904 = vst [vmem:[%s2888 + $0x38] sm:%s2880] %v2903
                %v2905 = vld [vmem:[%s2887 + $0x40] sm:%s2880]
                %2906 = vst [vmem:[%s2888 + $0x40] sm:%s2880] %v2905
                %v2907 = vld [vmem:[%s2887 + $0x48] sm:%s2880]
                %2908 = vst [vmem:[%s2888 + $0x48] sm:%s2880] %v2907
                %v2909 = vld [vmem:[%s2887 + $0x50] sm:%s2880]
                %2910 = vst [vmem:[%s2888 + $0x50] sm:%s2880] %v2909
                %v2911 = vld [vmem:[%s2887 + $0x58] sm:%s2880]
                %2912 = vst [vmem:[%s2888 + $0x58] sm:%s2880] %v2911
                %v2913 = vld [vmem:[%s2887 + $0x60] sm:%s2880]
                %2914 = vst [vmem:[%s2888 + $0x60] sm:%s2880] %v2913
                %v2915 = vld [vmem:[%s2887 + $0x68] sm:%s2880]
                %2916 = vst [vmem:[%s2888 + $0x68] sm:%s2880] %v2915
                %v2917 = vld [vmem:[%s2887 + $0x70] sm:%s2880]
                %2918 = vst [vmem:[%s2888 + $0x70] sm:%s2880] %v2917
                %v2919 = vld [vmem:[%s2887 + $0x78] sm:%s2880]
                %2920 = vst [vmem:[%s2888 + $0x78] sm:%s2880] %v2919
                %v2921 = vld [vmem:[%s2887 + $0x80] sm:%s2880]
                %2922 = vst [vmem:[%s2888 + $0x100] sm:%s2880] %v2921
                %v2923 = vld [vmem:[%s2887 + $0x88] sm:%s2880]
                %2924 = vst [vmem:[%s2888 + $0x108] sm:%s2880] %v2923
                %v2925 = vld [vmem:[%s2887 + $0x90] sm:%s2880]
                %2926 = vst [vmem:[%s2888 + $0x110] sm:%s2880] %v2925
                %v2927 = vld [vmem:[%s2887 + $0x98] sm:%s2880]
                %2928 = vst [vmem:[%s2888 + $0x118] sm:%s2880] %v2927
                %v2929 = vld [vmem:[%s2887 + $0xa0] sm:%s2880]
                %2930 = vst [vmem:[%s2888 + $0x120] sm:%s2880] %v2929
                %v2931 = vld [vmem:[%s2887 + $0xa8] sm:%s2880]
                %2932 = vst [vmem:[%s2888 + $0x128] sm:%s2880] %v2931
                %v2933 = vld [vmem:[%s2887 + $0xb0] sm:%s2880]
                %2934 = vst [vmem:[%s2888 + $0x130] sm:%s2880] %v2933
                %v2935 = vld [vmem:[%s2887 + $0xb8] sm:%s2880]
                %2936 = vst [vmem:[%s2888 + $0x138] sm:%s2880] %v2935
                %v2937 = vld [vmem:[%s2887 + $0xc0] sm:%s2880]
                %2938 = vst [vmem:[%s2888 + $0x140] sm:%s2880] %v2937
                %v2939 = vld [vmem:[%s2887 + $0xc8] sm:%s2880]
                %2940 = vst [vmem:[%s2888 + $0x148] sm:%s2880] %v2939
                %v2941 = vld [vmem:[%s2887 + $0xd0] sm:%s2880]
                %2942 = vst [vmem:[%s2888 + $0x150] sm:%s2880] %v2941
                %v2943 = vld [vmem:[%s2887 + $0xd8] sm:%s2880]
                %2944 = vst [vmem:[%s2888 + $0x158] sm:%s2880] %v2943
                %v2945 = vld [vmem:[%s2887 + $0xe0] sm:%s2880]
                %2946 = vst [vmem:[%s2888 + $0x160] sm:%s2880] %v2945
                %v2947 = vld [vmem:[%s2887 + $0xe8] sm:%s2880]
                %2948 = vst [vmem:[%s2888 + $0x168] sm:%s2880] %v2947
                %v2949 = vld [vmem:[%s2887 + $0xf0] sm:%s2880]
                %2950 = vst [vmem:[%s2888 + $0x170] sm:%s2880] %v2949
                %v2951 = vld [vmem:[%s2887 + $0xf8] sm:%s2880]
                %2952 = vst [vmem:[%s2888 + $0x178] sm:%s2880] %v2951
              $region126: #{_device_forward.1} parent=120 // loop_footer
                %s2886 = sadd.s32 1, %s2882
              $region127: #{_device_forward.1} parent=120 // loop_footer_branch
                %2881 = sbr.rel target = $region123
              $region128: #{_device_forward.1} parent=120 // loop_exit
                _
            $region121: #{_device_forward.1} parent=112 // pred_fallthru
              _
          $region113: #{_device_forward.1} parent=108 // pred_fallthru
            _
          %3029 = vnop
        $region109: #{_device_forward.1} parent=92 // pred_fallthru
          _
      $region93: #{_device_forward.1} parent=5 // pred_fallthru
        _
      %p3030 = scmp.le.s32.totalorder 2, %s17
      // Predicated region
      $region144: #{_device_forward.1} parent=5 // pred_check
        %p3031 = pneg %p3030
      $region145: #{_device_forward.1} parent=5 // pred_check_branch
        %3033 = sbr.rel (%p3031) target = $region147
      $region146: #{_device_forward.1} parent=5 // pred_region
        %s3034 = ssub.s32 %s17, 2
        // Predicated region
        $region148: #{_device_forward.1} parent=146 // pred_check
          %p3035 = pneg %p240
        $region149: #{_device_forward.1} parent=146 // pred_check_branch
          %3037 = sbr.rel (%p3035) target = $region151
        $region150: #{_device_forward.1} parent=146 // pred_region
          %s3038 = sand.u32 %s225, 1
          %s3039 = sand.u32 %s225, 1
          %s3040 = smul.addr %s3039, 256
          %s3041 = scalar_lea.vmem [#allocation7], %s3040
        $region151: #{_device_forward.1} parent=146 // pred_fallthru
          _
      $region147: #{_device_forward.1} parent=5 // pred_fallthru
        _
    $region6: #{_device_forward.1} parent=1 // loop_footer
      %s21 = sadd.s32 1, %s17
    $region7: #{_device_forward.1} parent=1 // loop_footer_branch
      %16 = sbr.rel target = $region3
    $region8: #{_device_forward.1} parent=1 // loop_exit
      _
    %3042 = vsyncpa [#allocation4], 1
    %s3043 = scalar_lea.sflag [#allocation4], 1
    %3044 = vsyncpa %s3043, 1
    %3045 = vsyncpa [#allocation6], 1

</llo_original>
